<compile_context>
chip_gen: v6e
topology: v6e:2x2x1
jax: 0.10.0
libtpu: 0.0.40
codegen_flags: <defaults>
</compile_context>

<pallas_src>
import math

import jax
import jax.numpy as jnp
from jax.experimental import pallas as pl
from jax.experimental.pallas import tpu as pltpu  # noqa: F401  (kept for parity / future tiling)

# ---------------------------------------------------------------------------
# Small, TPU-friendly synthetic config (hidden = 128 = one lane width).
# B*S = 128 rows -> full MXU row dimension on v5e.
# ---------------------------------------------------------------------------
B, S, H = 16, 8, 128
M = B * S                          # batch folded into matmul rows (= 128)
NUM_HEADS, HEAD_DIM = 2, 64
QKV_SPLIT = NUM_HEADS * HEAD_DIM   # 128: width of the Q (and K, and V) column group
INTERMEDIATE = 256
NUM_LAYERS = 2
VOCAB = 64
MAX_POS = 32
NUM_LABELS = 3
LANE = 128                         # padded classifier output width (lane-dense store)
LN_EPS = 1e-12
PAD_ID = 1                         # forward(): attention_mask = (input_ids != 1)


# ---------------------------------------------------------------------------
# In-kernel helpers (all f32 elementwise math; v5e-safe)
# ---------------------------------------------------------------------------
def _layer_norm(x, gamma, beta):
    mu = jnp.mean(x, axis=-1, keepdims=True)
    var = jnp.mean(jnp.square(x - mu), axis=-1, keepdims=True)
    return (x - mu) * jax.lax.rsqrt(var + LN_EPS) * gamma + beta


def _gelu(x):
    # TODO(synk): HF BERT default is erf-based GELU; tanh approximation used for robust Mosaic lowering.
    c = math.sqrt(2.0 / math.pi)
    return 0.5 * x * (1.0 + jnp.tanh(c * (x + 0.044715 * x * x * x)))


def _mm(a_bf16, w_bf16):
    """bf16 MXU matmul with f32 accumulation (LHS already cast to bf16)."""
    return jnp.dot(a_bf16, w_bf16, preferred_element_type=jnp.float32)


# ---------------------------------------------------------------------------
# Single fused kernel — one invocation, layers statically unrolled.
# ---------------------------------------------------------------------------
def _fused_bert_kernel(
        emb_ref, mask_ref, eg_ref, eb_ref,                       # embeddings + emb-LN + mask
        wqkv_ref, bqkv_ref, wo_ref, bo_ref, g1_ref, be1_ref,     # fused attention proj + LN1
        wi_ref, bi_ref, wo2_ref, bo2_ref, g2_ref, be2_ref,       # FFN + LN2
        cw1_ref, cb1_ref, cw2_ref, cb2_ref,                      # classifier (padded)
        out_ref):                                                # (M, LANE) f32
    # Embedding sum was computed in JAX (gather); apply embedding LayerNorm here.
    hs = _layer_norm(emb_ref[...], eg_ref[...], eb_ref[...])     # (M, H) f32
    add_mask = mask_ref[...]                                     # (M, M) additive mask

    for l in range(NUM_LAYERS):                                  # static unroll (tiny L)
        x = hs
        x_bf = x.astype(jnp.bfloat16)

        # --- multi-head self-attention: one fused QKV matmul (128x384) ---
        qkv = _mm(x_bf, wqkv_ref[l]) + bqkv_ref[l]               # (M, 3*NH*Dh) f32
        q_all = qkv[:, 0:QKV_SPLIT]                              # 1/sqrt(Dh) folded in
        k_all = qkv[:, QKV_SPLIT:2 * QKV_SPLIT]
        v_all = qkv[:, 2 * QKV_SPLIT:3 * QKV_SPLIT]

        ctx_heads = []
        for hd in range(NUM_HEADS):                              # static, NUM_HEADS = 2
            sl = slice(hd * HEAD_DIM, (hd + 1) * HEAD_DIM)
            q = q_all[:, sl].astype(jnp.bfloat16)                # (M, Dh)
            k = k_all[:, sl].astype(jnp.bfloat16)
            v = v_all[:, sl].astype(jnp.bfloat16)
            scores = jax.lax.dot_general(
                q, k, (((1,), (1,)), ((), ())),
                preferred_element_type=jnp.float32)              # (M, M)
            scores = scores + add_mask
            scores = scores - jnp.max(scores, axis=-1, keepdims=True)
            p = jnp.exp(scores)
            p = p * pl.reciprocal(jnp.sum(p, axis=-1, keepdims=True), approx=True)
            ctx_heads.append(_mm(p.astype(jnp.bfloat16), v))     # (M, Dh)

        ctx = jnp.concatenate(ctx_heads, axis=-1)                # (M, NH*Dh) = (M, H)
        attn = _mm(ctx.astype(jnp.bfloat16), wo_ref[l]) + bo_ref[l]
        h1 = _layer_norm(x + attn, g1_ref[l], be1_ref[l])

        # --- feed-forward ---
        ff = _gelu(_mm(h1.astype(jnp.bfloat16), wi_ref[l]) + bi_ref[l])
        ff = _mm(ff.astype(jnp.bfloat16), wo2_ref[l]) + bo2_ref[l]
        hs = _layer_norm(h1 + ff, g2_ref[l], be2_ref[l])

    # --- classifier on the final hidden state (all rows; CLS rows picked outside:
    #     avoids an in-kernel strided sublane gather, and the extra matmul work is
    #     negligible at this size) ---
    hid = jnp.maximum(_mm(hs.astype(jnp.bfloat16), cw1_ref[...]) + cb1_ref[...], 0.0)
    out_ref[...] = _mm(hid.astype(jnp.bfloat16), cw2_ref[...]) + cb2_ref[...]


# ---------------------------------------------------------------------------
# pallas_call wrapper — single invocation, whole arrays resident in VMEM (~1 MiB).
# ---------------------------------------------------------------------------
def bert_forward_fused(emb, mask_bias, params):
    lw = params["layers"]
    in_arrays = [
        emb, mask_bias, params["emb_ln_g"], params["emb_ln_b"],
        lw["wqkv"], lw["bqkv"], lw["wo"], lw["bo"], lw["ln1_g"], lw["ln1_b"],
        lw["wi"], lw["bi"], lw["wo2"], lw["bo2"], lw["ln2_g"], lw["ln2_b"],
        params["cls_w1"], params["cls_b1"], params["cls_w2p"], params["cls_b2p"],
    ]
    return pl.pallas_call(
        _fused_bert_kernel,
        out_shape=jax.ShapeDtypeStruct((M, LANE), jnp.float32),
    )(*in_arrays)


# ---------------------------------------------------------------------------
# Model glue (embedding gather, mask construction, CLS selection) in plain JAX
# ---------------------------------------------------------------------------
def customed_bert_forward(input_ids, params, start_indexs=None, end_indexs=None,
                          span_masks=None):
    # start/end indexs and span_masks are accepted but unused, matching the reference.
    key_ok = (input_ids != PAD_ID).reshape(-1)                    # (M,) valid keys
    batch_id = jnp.repeat(jnp.arange(B), S)                       # (M,)
    valid = (batch_id[:, None] == batch_id[None, :]) & key_ok[None, :]
    mask_bias = jnp.where(valid, 0.0, -1e9).astype(jnp.float32)   # (M, M) additive mask

    pos_ids = jnp.arange(S)
    emb = (params["word_emb"][input_ids]
           + params["pos_emb"][pos_ids][None, :, :]
           + params["type_emb"][0][None, None, :])                # token_type_ids = 0
    emb = emb.reshape(M, H).astype(jnp.float32)

    logits_full = bert_forward_fused(emb, mask_bias, params)      # (M, LANE)
    logits = logits_full[::S, :NUM_LABELS]                        # CLS rows, real labels
    return [logits]


def init_params(key):
    def normal(k, shape, scale=0.02):
        return scale * jax.random.normal(k, shape, dtype=jnp.float32)

    keys = jax.random.split(key, 8)
    inv_scale = 1.0 / math.sqrt(HEAD_DIM)

    params = {
        "word_emb": normal(keys[0], (VOCAB, H)),
        "pos_emb": normal(keys[1], (MAX_POS, H)),
        "type_emb": normal(keys[2], (2, H)),
        "emb_ln_g": jnp.ones((1, H), jnp.float32),
        "emb_ln_b": jnp.zeros((1, H), jnp.float32),
        "cls_w1": normal(keys[3], (H, H)).astype(jnp.bfloat16),
        "cls_b1": jnp.zeros((1, H), jnp.float32),
    }
    # Classifier output padded to LANE=128 lanes (zero columns sliced away outside).
    w2 = normal(keys[4], (H, NUM_LABELS))
    params["cls_w2p"] = (jnp.zeros((H, LANE), jnp.float32)
                         .at[:, :NUM_LABELS].set(w2).astype(jnp.bfloat16))
    params["cls_b2p"] = jnp.zeros((1, LANE), jnp.float32)

    lk = jax.random.split(keys[5], 4)
    L = NUM_LAYERS
    # Fused QKV weight: columns ordered [Q_h0|Q_h1 | K_h0|K_h1 | V_h0|V_h1].
    # 1/sqrt(head_dim) folded into the Q columns (Q bias is zero, so nothing to fold there).
    wqkv = normal(lk[0], (L, H, 3 * QKV_SPLIT))
    wqkv = wqkv.at[:, :, :QKV_SPLIT].multiply(inv_scale)
    params["layers"] = {
        "wqkv": wqkv.astype(jnp.bfloat16),
        "bqkv": jnp.zeros((L, 1, 3 * QKV_SPLIT), jnp.float32),
        "wo": normal(lk[1], (L, QKV_SPLIT, H)).astype(jnp.bfloat16),   # fused head proj
        "bo": jnp.zeros((L, 1, H), jnp.float32),
        "ln1_g": jnp.ones((L, 1, H), jnp.float32),
        "ln1_b": jnp.zeros((L, 1, H), jnp.float32),
        "wi": normal(lk[2], (L, H, INTERMEDIATE)).astype(jnp.bfloat16),
        "bi": jnp.zeros((L, 1, INTERMEDIATE), jnp.float32),
        "wo2": normal(lk[3], (L, INTERMEDIATE, H)).astype(jnp.bfloat16),
        "bo2": jnp.zeros((L, 1, H), jnp.float32),
        "ln2_g": jnp.ones((L, 1, H), jnp.float32),
        "ln2_b": jnp.zeros((L, 1, H), jnp.float32),
    }
    return params


if __name__ == "__main__":
    key = jax.random.PRNGKey(0)
    params = init_params(key)

    ids_key = jax.random.fold_in(key, 123)
    input_ids = jax.random.randint(ids_key, (B, S), 0, VOCAB, dtype=jnp.int32)
    # Force some padding tokens (id == 1) so the attention mask is exercised.
    input_ids = input_ids.at[:, S - 2:].set(PAD_ID)

    fwd = jax.jit(lambda ids, p: customed_bert_forward(ids, p))
    out = fwd(input_ids, params)
    logits = jax.block_until_ready(out[0])
    assert logits.shape == (B, NUM_LABELS)
    assert bool(jnp.all(jnp.isfinite(logits)))
    print("KERNEL_OK")
</pallas_src>

<mosaic_0001>
module attributes {stable_mosaic.version = 11 : i64} {
  func.func @_fused_bert_kernel(%arg0: memref<128x128xf32, #tpu.memory_space<vmem>>, %arg1: memref<128x128xf32, #tpu.memory_space<vmem>>, %arg2: memref<1x128xf32, #tpu.memory_space<vmem>>, %arg3: memref<1x128xf32, #tpu.memory_space<vmem>>, %arg4: memref<2x128x384xbf16, #tpu.memory_space<vmem>>, %arg5: memref<2x1x384xf32, #tpu.memory_space<vmem>>, %arg6: memref<2x128x128xbf16, #tpu.memory_space<vmem>>, %arg7: memref<2x1x128xf32, #tpu.memory_space<vmem>>, %arg8: memref<2x1x128xf32, #tpu.memory_space<vmem>>, %arg9: memref<2x1x128xf32, #tpu.memory_space<vmem>>, %arg10: memref<2x128x256xbf16, #tpu.memory_space<vmem>>, %arg11: memref<2x1x256xf32, #tpu.memory_space<vmem>>, %arg12: memref<2x256x128xbf16, #tpu.memory_space<vmem>>, %arg13: memref<2x1x128xf32, #tpu.memory_space<vmem>>, %arg14: memref<2x1x128xf32, #tpu.memory_space<vmem>>, %arg15: memref<2x1x128xf32, #tpu.memory_space<vmem>>, %arg16: memref<128x128xbf16, #tpu.memory_space<vmem>>, %arg17: memref<1x128xf32, #tpu.memory_space<vmem>>, %arg18: memref<128x128xbf16, #tpu.memory_space<vmem>>, %arg19: memref<1x128xf32, #tpu.memory_space<vmem>>, %arg20: memref<128x128xf32, #tpu.memory_space<vmem>>) attributes {dimension_semantics = [], scalar_prefetch = 0 : i64, scratch_operands = 0 : i64, tpu.core_type = #tpu.core_type<tc>} {
    %c0 = arith.constant 0 : index
    %c0_0 = arith.constant 0 : index
    %0 = vector.load %arg0[%c0, %c0_0] : memref<128x128xf32, #tpu.memory_space<vmem>>, vector<128x128xf32>
    %c0_1 = arith.constant 0 : index
    %c0_2 = arith.constant 0 : index
    %1 = vector.load %arg2[%c0_1, %c0_2] : memref<1x128xf32, #tpu.memory_space<vmem>>, vector<1x128xf32>
    %c0_3 = arith.constant 0 : index
    %c0_4 = arith.constant 0 : index
    %2 = vector.load %arg3[%c0_3, %c0_4] : memref<1x128xf32, #tpu.memory_space<vmem>>, vector<1x128xf32>
    %cst = arith.constant dense<0.000000e+00> : vector<128xf32>
    %3 = vector.multi_reduction <add>, %0, %cst [1] : vector<128x128xf32> to vector<128xf32>
    %4 = vector.shape_cast %3 : vector<128xf32> to vector<128x1xf32>
    %cst_5 = arith.constant 1.280000e+02 : f32
    %5 = vector.broadcast %cst_5 : f32 to vector<128x1xf32>
    %6 = arith.divf %4, %5 : vector<128x1xf32>
    %7 = vector.broadcast %6 : vector<128x1xf32> to vector<128x128xf32>
    %8 = arith.subf %0, %7 : vector<128x128xf32>
    %9 = arith.mulf %8, %8 : vector<128x128xf32>
    %cst_6 = arith.constant dense<0.000000e+00> : vector<128xf32>
    %10 = vector.multi_reduction <add>, %9, %cst_6 [1] : vector<128x128xf32> to vector<128xf32>
    %11 = vector.shape_cast %10 : vector<128xf32> to vector<128x1xf32>
    %cst_7 = arith.constant 1.280000e+02 : f32
    %12 = vector.broadcast %cst_7 : f32 to vector<128x1xf32>
    %13 = arith.divf %11, %12 : vector<128x1xf32>
    %14 = vector.broadcast %6 : vector<128x1xf32> to vector<128x128xf32>
    %15 = arith.subf %0, %14 : vector<128x128xf32>
    %cst_8 = arith.constant 9.99999996E-13 : f32
    %16 = vector.broadcast %cst_8 : f32 to vector<128x1xf32>
    %17 = arith.addf %13, %16 : vector<128x1xf32>
    %18 = math.rsqrt %17 : vector<128x1xf32>
    %19 = vector.broadcast %18 : vector<128x1xf32> to vector<128x128xf32>
    %20 = arith.mulf %15, %19 : vector<128x128xf32>
    %21 = vector.broadcast %1 : vector<1x128xf32> to vector<128x128xf32>
    %22 = arith.mulf %20, %21 : vector<128x128xf32>
    %23 = vector.broadcast %2 : vector<1x128xf32> to vector<128x128xf32>
    %24 = arith.addf %22, %23 : vector<128x128xf32>
    %c0_9 = arith.constant 0 : index
    %c0_10 = arith.constant 0 : index
    %25 = vector.load %arg1[%c0_9, %c0_10] : memref<128x128xf32, #tpu.memory_space<vmem>>, vector<128x128xf32>
    %26 = arith.truncf %24 : vector<128x128xf32> to vector<128x128xbf16>
    %c0_11 = arith.constant 0 : index
    %c0_12 = arith.constant 0 : index
    %c0_13 = arith.constant 0 : index
    %27 = vector.load %arg4[%c0_11, %c0_12, %c0_13] : memref<2x128x384xbf16, #tpu.memory_space<vmem>>, vector<1x128x384xbf16>
    %28 = vector.shape_cast %27 : vector<1x128x384xbf16> to vector<128x384xbf16>
    %cst_14 = arith.constant dense<0.000000e+00> : vector<128x384xf32>
    %29 = tpu.matmul %26, %28, %cst_14 {dimension_numbers = #tpu.dot_dimension_numbers<[1], [0], [0], [1], [0, 0, 1, 1], [], []>} : vector<128x128xbf16>, vector<128x384xbf16>, vector<128x384xf32> -> vector<128x384xf32>
    %c0_15 = arith.constant 0 : index
    %c0_16 = arith.constant 0 : index
    %c0_17 = arith.constant 0 : index
    %30 = vector.load %arg5[%c0_15, %c0_16, %c0_17] : memref<2x1x384xf32, #tpu.memory_space<vmem>>, vector<1x1x384xf32>
    %31 = vector.shape_cast %30 : vector<1x1x384xf32> to vector<1x384xf32>
    %32 = vector.broadcast %31 : vector<1x384xf32> to vector<128x384xf32>
    %33 = arith.addf %29, %32 : vector<128x384xf32>
    %34 = vector.extract_strided_slice %33 {offsets = [0, 0], sizes = [128, 128], strides = [1, 1]} : vector<128x384xf32> to vector<128x128xf32>
    %35 = vector.extract_strided_slice %33 {offsets = [0, 128], sizes = [128, 128], strides = [1, 1]} : vector<128x384xf32> to vector<128x128xf32>
    %36 = vector.extract_strided_slice %33 {offsets = [0, 256], sizes = [128, 128], strides = [1, 1]} : vector<128x384xf32> to vector<128x128xf32>
    %37 = vector.extract_strided_slice %34 {offsets = [0, 0], sizes = [128, 64], strides = [1, 1]} : vector<128x128xf32> to vector<128x64xf32>
    %38 = arith.truncf %37 : vector<128x64xf32> to vector<128x64xbf16>
    %39 = vector.extract_strided_slice %35 {offsets = [0, 0], sizes = [128, 64], strides = [1, 1]} : vector<128x128xf32> to vector<128x64xf32>
    %40 = arith.truncf %39 : vector<128x64xf32> to vector<128x64xbf16>
    %41 = vector.extract_strided_slice %36 {offsets = [0, 0], sizes = [128, 64], strides = [1, 1]} : vector<128x128xf32> to vector<128x64xf32>
    %42 = arith.truncf %41 : vector<128x64xf32> to vector<128x64xbf16>
    %cst_18 = arith.constant dense<0.000000e+00> : vector<128x128xf32>
    %43 = tpu.matmul %38, %40, %cst_18 {dimension_numbers = #tpu.dot_dimension_numbers<[1], [1], [0], [0], [0, 0, 1, 0], [], []>} : vector<128x64xbf16>, vector<128x64xbf16>, vector<128x128xf32> -> vector<128x128xf32>
    %44 = arith.addf %43, %25 : vector<128x128xf32>
    %cst_19 = arith.constant dense<0xFF800000> : vector<128xf32>
    %45 = vector.multi_reduction <maximumf>, %44, %cst_19 [1] : vector<128x128xf32> to vector<128xf32>
    %46 = vector.shape_cast %45 : vector<128xf32> to vector<128x1xf32>
    %47 = vector.broadcast %46 : vector<128x1xf32> to vector<128x128xf32>
    %48 = arith.subf %44, %47 : vector<128x128xf32>
    %49 = math.exp %48 : vector<128x128xf32>
    %cst_20 = arith.constant dense<0.000000e+00> : vector<128xf32>
    %50 = vector.multi_reduction <add>, %49, %cst_20 [1] : vector<128x128xf32> to vector<128xf32>
    %51 = vector.shape_cast %50 : vector<128xf32> to vector<128x1xf32>
    %52 = tpu.reciprocal %51 {approx = true} : vector<128x1xf32> -> vector<128x1xf32>
    %53 = vector.broadcast %52 : vector<128x1xf32> to vector<128x128xf32>
    %54 = arith.mulf %49, %53 : vector<128x128xf32>
    %55 = arith.truncf %54 : vector<128x128xf32> to vector<128x128xbf16>
    %cst_21 = arith.constant dense<0.000000e+00> : vector<128x64xf32>
    %56 = tpu.matmul %55, %42, %cst_21 {dimension_numbers = #tpu.dot_dimension_numbers<[1], [0], [0], [1], [0, 0, 1, 1], [], []>} : vector<128x128xbf16>, vector<128x64xbf16>, vector<128x64xf32> -> vector<128x64xf32>
    %57 = vector.extract_strided_slice %34 {offsets = [0, 64], sizes = [128, 64], strides = [1, 1]} : vector<128x128xf32> to vector<128x64xf32>
    %58 = arith.truncf %57 : vector<128x64xf32> to vector<128x64xbf16>
    %59 = vector.extract_strided_slice %35 {offsets = [0, 64], sizes = [128, 64], strides = [1, 1]} : vector<128x128xf32> to vector<128x64xf32>
    %60 = arith.truncf %59 : vector<128x64xf32> to vector<128x64xbf16>
    %61 = vector.extract_strided_slice %36 {offsets = [0, 64], sizes = [128, 64], strides = [1, 1]} : vector<128x128xf32> to vector<128x64xf32>
    %62 = arith.truncf %61 : vector<128x64xf32> to vector<128x64xbf16>
    %cst_22 = arith.constant dense<0.000000e+00> : vector<128x128xf32>
    %63 = tpu.matmul %58, %60, %cst_22 {dimension_numbers = #tpu.dot_dimension_numbers<[1], [1], [0], [0], [0, 0, 1, 0], [], []>} : vector<128x64xbf16>, vector<128x64xbf16>, vector<128x128xf32> -> vector<128x128xf32>
    %64 = arith.addf %63, %25 : vector<128x128xf32>
    %cst_23 = arith.constant dense<0xFF800000> : vector<128xf32>
    %65 = vector.multi_reduction <maximumf>, %64, %cst_23 [1] : vector<128x128xf32> to vector<128xf32>
    %66 = vector.shape_cast %65 : vector<128xf32> to vector<128x1xf32>
    %67 = vector.broadcast %66 : vector<128x1xf32> to vector<128x128xf32>
    %68 = arith.subf %64, %67 : vector<128x128xf32>
    %69 = math.exp %68 : vector<128x128xf32>
    %cst_24 = arith.constant dense<0.000000e+00> : vector<128xf32>
    %70 = vector.multi_reduction <add>, %69, %cst_24 [1] : vector<128x128xf32> to vector<128xf32>
    %71 = vector.shape_cast %70 : vector<128xf32> to vector<128x1xf32>
    %72 = tpu.reciprocal %71 {approx = true} : vector<128x1xf32> -> vector<128x1xf32>
    %73 = vector.broadcast %72 : vector<128x1xf32> to vector<128x128xf32>
    %74 = arith.mulf %69, %73 : vector<128x128xf32>
    %75 = arith.truncf %74 : vector<128x128xf32> to vector<128x128xbf16>
    %cst_25 = arith.constant dense<0.000000e+00> : vector<128x64xf32>
    %76 = tpu.matmul %75, %62, %cst_25 {dimension_numbers = #tpu.dot_dimension_numbers<[1], [0], [0], [1], [0, 0, 1, 1], [], []>} : vector<128x128xbf16>, vector<128x64xbf16>, vector<128x64xf32> -> vector<128x64xf32>
    %77 = tpu.concatenate %56, %76 in 1 : vector<128x64xf32>, vector<128x64xf32> -> vector<128x128xf32>
    %78 = arith.truncf %77 : vector<128x128xf32> to vector<128x128xbf16>
    %c0_26 = arith.constant 0 : index
    %c0_27 = arith.constant 0 : index
    %c0_28 = arith.constant 0 : index
    %79 = vector.load %arg6[%c0_26, %c0_27, %c0_28] : memref<2x128x128xbf16, #tpu.memory_space<vmem>>, vector<1x128x128xbf16>
    %80 = vector.shape_cast %79 : vector<1x128x128xbf16> to vector<128x128xbf16>
    %cst_29 = arith.constant dense<0.000000e+00> : vector<128x128xf32>
    %81 = tpu.matmul %78, %80, %cst_29 {dimension_numbers = #tpu.dot_dimension_numbers<[1], [0], [0], [1], [0, 0, 1, 1], [], []>} : vector<128x128xbf16>, vector<128x128xbf16>, vector<128x128xf32> -> vector<128x128xf32>
    %c0_30 = arith.constant 0 : index
    %c0_31 = arith.constant 0 : index
    %c0_32 = arith.constant 0 : index
    %82 = vector.load %arg7[%c0_30, %c0_31, %c0_32] : memref<2x1x128xf32, #tpu.memory_space<vmem>>, vector<1x1x128xf32>
    %83 = vector.shape_cast %82 : vector<1x1x128xf32> to vector<1x128xf32>
    %84 = vector.broadcast %83 : vector<1x128xf32> to vector<128x128xf32>
    %85 = arith.addf %81, %84 : vector<128x128xf32>
    %86 = arith.addf %24, %85 : vector<128x128xf32>
    %c0_33 = arith.constant 0 : index
    %c0_34 = arith.constant 0 : index
    %c0_35 = arith.constant 0 : index
    %87 = vector.load %arg8[%c0_33, %c0_34, %c0_35] : memref<2x1x128xf32, #tpu.memory_space<vmem>>, vector<1x1x128xf32>
    %88 = vector.shape_cast %87 : vector<1x1x128xf32> to vector<1x128xf32>
    %c0_36 = arith.constant 0 : index
    %c0_37 = arith.constant 0 : index
    %c0_38 = arith.constant 0 : index
    %89 = vector.load %arg9[%c0_36, %c0_37, %c0_38] : memref<2x1x128xf32, #tpu.memory_space<vmem>>, vector<1x1x128xf32>
    %90 = vector.shape_cast %89 : vector<1x1x128xf32> to vector<1x128xf32>
    %cst_39 = arith.constant dense<0.000000e+00> : vector<128xf32>
    %91 = vector.multi_reduction <add>, %86, %cst_39 [1] : vector<128x128xf32> to vector<128xf32>
    %92 = vector.shape_cast %91 : vector<128xf32> to vector<128x1xf32>
    %cst_40 = arith.constant 1.280000e+02 : f32
    %93 = vector.broadcast %cst_40 : f32 to vector<128x1xf32>
    %94 = arith.divf %92, %93 : vector<128x1xf32>
    %95 = vector.broadcast %94 : vector<128x1xf32> to vector<128x128xf32>
    %96 = arith.subf %86, %95 : vector<128x128xf32>
    %97 = arith.mulf %96, %96 : vector<128x128xf32>
    %cst_41 = arith.constant dense<0.000000e+00> : vector<128xf32>
    %98 = vector.multi_reduction <add>, %97, %cst_41 [1] : vector<128x128xf32> to vector<128xf32>
    %99 = vector.shape_cast %98 : vector<128xf32> to vector<128x1xf32>
    %cst_42 = arith.constant 1.280000e+02 : f32
    %100 = vector.broadcast %cst_42 : f32 to vector<128x1xf32>
    %101 = arith.divf %99, %100 : vector<128x1xf32>
    %102 = vector.broadcast %94 : vector<128x1xf32> to vector<128x128xf32>
    %103 = arith.subf %86, %102 : vector<128x128xf32>
    %cst_43 = arith.constant 9.99999996E-13 : f32
    %104 = vector.broadcast %cst_43 : f32 to vector<128x1xf32>
    %105 = arith.addf %101, %104 : vector<128x1xf32>
    %106 = math.rsqrt %105 : vector<128x1xf32>
    %107 = vector.broadcast %106 : vector<128x1xf32> to vector<128x128xf32>
    %108 = arith.mulf %103, %107 : vector<128x128xf32>
    %109 = vector.broadcast %88 : vector<1x128xf32> to vector<128x128xf32>
    %110 = arith.mulf %108, %109 : vector<128x128xf32>
    %111 = vector.broadcast %90 : vector<1x128xf32> to vector<128x128xf32>
    %112 = arith.addf %110, %111 : vector<128x128xf32>
    %113 = arith.truncf %112 : vector<128x128xf32> to vector<128x128xbf16>
    %c0_44 = arith.constant 0 : index
    %c0_45 = arith.constant 0 : index
    %c0_46 = arith.constant 0 : index
    %114 = vector.load %arg10[%c0_44, %c0_45, %c0_46] : memref<2x128x256xbf16, #tpu.memory_space<vmem>>, vector<1x128x256xbf16>
    %115 = vector.shape_cast %114 : vector<1x128x256xbf16> to vector<128x256xbf16>
    %cst_47 = arith.constant dense<0.000000e+00> : vector<128x256xf32>
    %116 = tpu.matmul %113, %115, %cst_47 {dimension_numbers = #tpu.dot_dimension_numbers<[1], [0], [0], [1], [0, 0, 1, 1], [], []>} : vector<128x128xbf16>, vector<128x256xbf16>, vector<128x256xf32> -> vector<128x256xf32>
    %c0_48 = arith.constant 0 : index
    %c0_49 = arith.constant 0 : index
    %c0_50 = arith.constant 0 : index
    %117 = vector.load %arg11[%c0_48, %c0_49, %c0_50] : memref<2x1x256xf32, #tpu.memory_space<vmem>>, vector<1x1x256xf32>
    %118 = vector.shape_cast %117 : vector<1x1x256xf32> to vector<1x256xf32>
    %119 = vector.broadcast %118 : vector<1x256xf32> to vector<128x256xf32>
    %120 = arith.addf %116, %119 : vector<128x256xf32>
    %cst_51 = arith.constant 5.000000e-01 : f32
    %121 = vector.broadcast %cst_51 : f32 to vector<128x256xf32>
    %122 = arith.mulf %121, %120 : vector<128x256xf32>
    %cst_52 = arith.constant 4.471500e-02 : f32
    %123 = vector.broadcast %cst_52 : f32 to vector<128x256xf32>
    %124 = arith.mulf %123, %120 : vector<128x256xf32>
    %125 = arith.mulf %124, %120 : vector<128x256xf32>
    %126 = arith.mulf %125, %120 : vector<128x256xf32>
    %127 = arith.addf %120, %126 : vector<128x256xf32>
    %cst_53 = arith.constant 0.797884583 : f32
    %128 = vector.broadcast %cst_53 : f32 to vector<128x256xf32>
    %129 = arith.mulf %128, %127 : vector<128x256xf32>
    %130 = math.tanh %129 : vector<128x256xf32>
    %cst_54 = arith.constant 1.000000e+00 : f32
    %131 = vector.broadcast %cst_54 : f32 to vector<128x256xf32>
    %132 = arith.addf %131, %130 : vector<128x256xf32>
    %133 = arith.mulf %122, %132 : vector<128x256xf32>
    %134 = arith.truncf %133 : vector<128x256xf32> to vector<128x256xbf16>
    %c0_55 = arith.constant 0 : index
    %c0_56 = arith.constant 0 : index
    %c0_57 = arith.constant 0 : index
    %135 = vector.load %arg12[%c0_55, %c0_56, %c0_57] : memref<2x256x128xbf16, #tpu.memory_space<vmem>>, vector<1x256x128xbf16>
    %136 = vector.shape_cast %135 : vector<1x256x128xbf16> to vector<256x128xbf16>
    %cst_58 = arith.constant dense<0.000000e+00> : vector<128x128xf32>
    %137 = tpu.matmul %134, %136, %cst_58 {dimension_numbers = #tpu.dot_dimension_numbers<[1], [0], [0], [1], [0, 0, 1, 1], [], []>} : vector<128x256xbf16>, vector<256x128xbf16>, vector<128x128xf32> -> vector<128x128xf32>
    %c0_59 = arith.constant 0 : index
    %c0_60 = arith.constant 0 : index
    %c0_61 = arith.constant 0 : index
    %138 = vector.load %arg13[%c0_59, %c0_60, %c0_61] : memref<2x1x128xf32, #tpu.memory_space<vmem>>, vector<1x1x128xf32>
    %139 = vector.shape_cast %138 : vector<1x1x128xf32> to vector<1x128xf32>
    %140 = vector.broadcast %139 : vector<1x128xf32> to vector<128x128xf32>
    %141 = arith.addf %137, %140 : vector<128x128xf32>
    %142 = arith.addf %112, %141 : vector<128x128xf32>
    %c0_62 = arith.constant 0 : index
    %c0_63 = arith.constant 0 : index
    %c0_64 = arith.constant 0 : index
    %143 = vector.load %arg14[%c0_62, %c0_63, %c0_64] : memref<2x1x128xf32, #tpu.memory_space<vmem>>, vector<1x1x128xf32>
    %144 = vector.shape_cast %143 : vector<1x1x128xf32> to vector<1x128xf32>
    %c0_65 = arith.constant 0 : index
    %c0_66 = arith.constant 0 : index
    %c0_67 = arith.constant 0 : index
    %145 = vector.load %arg15[%c0_65, %c0_66, %c0_67] : memref<2x1x128xf32, #tpu.memory_space<vmem>>, vector<1x1x128xf32>
    %146 = vector.shape_cast %145 : vector<1x1x128xf32> to vector<1x128xf32>
    %cst_68 = arith.constant dense<0.000000e+00> : vector<128xf32>
    %147 = vector.multi_reduction <add>, %142, %cst_68 [1] : vector<128x128xf32> to vector<128xf32>
    %148 = vector.shape_cast %147 : vector<128xf32> to vector<128x1xf32>
    %cst_69 = arith.constant 1.280000e+02 : f32
    %149 = vector.broadcast %cst_69 : f32 to vector<128x1xf32>
    %150 = arith.divf %148, %149 : vector<128x1xf32>
    %151 = vector.broadcast %150 : vector<128x1xf32> to vector<128x128xf32>
    %152 = arith.subf %142, %151 : vector<128x128xf32>
    %153 = arith.mulf %152, %152 : vector<128x128xf32>
    %cst_70 = arith.constant dense<0.000000e+00> : vector<128xf32>
    %154 = vector.multi_reduction <add>, %153, %cst_70 [1] : vector<128x128xf32> to vector<128xf32>
    %155 = vector.shape_cast %154 : vector<128xf32> to vector<128x1xf32>
    %cst_71 = arith.constant 1.280000e+02 : f32
    %156 = vector.broadcast %cst_71 : f32 to vector<128x1xf32>
    %157 = arith.divf %155, %156 : vector<128x1xf32>
    %158 = vector.broadcast %150 : vector<128x1xf32> to vector<128x128xf32>
    %159 = arith.subf %142, %158 : vector<128x128xf32>
    %cst_72 = arith.constant 9.99999996E-13 : f32
    %160 = vector.broadcast %cst_72 : f32 to vector<128x1xf32>
    %161 = arith.addf %157, %160 : vector<128x1xf32>
    %162 = math.rsqrt %161 : vector<128x1xf32>
    %163 = vector.broadcast %162 : vector<128x1xf32> to vector<128x128xf32>
    %164 = arith.mulf %159, %163 : vector<128x128xf32>
    %165 = vector.broadcast %144 : vector<1x128xf32> to vector<128x128xf32>
    %166 = arith.mulf %164, %165 : vector<128x128xf32>
    %167 = vector.broadcast %146 : vector<1x128xf32> to vector<128x128xf32>
    %168 = arith.addf %166, %167 : vector<128x128xf32>
    %169 = arith.truncf %168 : vector<128x128xf32> to vector<128x128xbf16>
    %c1 = arith.constant 1 : index
    %c0_73 = arith.constant 0 : index
    %c0_74 = arith.constant 0 : index
    %170 = vector.load %arg4[%c1, %c0_73, %c0_74] : memref<2x128x384xbf16, #tpu.memory_space<vmem>>, vector<1x128x384xbf16>
    %171 = vector.shape_cast %170 : vector<1x128x384xbf16> to vector<128x384xbf16>
    %cst_75 = arith.constant dense<0.000000e+00> : vector<128x384xf32>
    %172 = tpu.matmul %169, %171, %cst_75 {dimension_numbers = #tpu.dot_dimension_numbers<[1], [0], [0], [1], [0, 0, 1, 1], [], []>} : vector<128x128xbf16>, vector<128x384xbf16>, vector<128x384xf32> -> vector<128x384xf32>
    %c1_76 = arith.constant 1 : index
    %c0_77 = arith.constant 0 : index
    %c0_78 = arith.constant 0 : index
    %173 = vector.load %arg5[%c1_76, %c0_77, %c0_78] : memref<2x1x384xf32, #tpu.memory_space<vmem>>, vector<1x1x384xf32>
    %174 = vector.shape_cast %173 : vector<1x1x384xf32> to vector<1x384xf32>
    %175 = vector.broadcast %174 : vector<1x384xf32> to vector<128x384xf32>
    %176 = arith.addf %172, %175 : vector<128x384xf32>
    %177 = vector.extract_strided_slice %176 {offsets = [0, 0], sizes = [128, 128], strides = [1, 1]} : vector<128x384xf32> to vector<128x128xf32>
    %178 = vector.extract_strided_slice %176 {offsets = [0, 128], sizes = [128, 128], strides = [1, 1]} : vector<128x384xf32> to vector<128x128xf32>
    %179 = vector.extract_strided_slice %176 {offsets = [0, 256], sizes = [128, 128], strides = [1, 1]} : vector<128x384xf32> to vector<128x128xf32>
    %180 = vector.extract_strided_slice %177 {offsets = [0, 0], sizes = [128, 64], strides = [1, 1]} : vector<128x128xf32> to vector<128x64xf32>
    %181 = arith.truncf %180 : vector<128x64xf32> to vector<128x64xbf16>
    %182 = vector.extract_strided_slice %178 {offsets = [0, 0], sizes = [128, 64], strides = [1, 1]} : vector<128x128xf32> to vector<128x64xf32>
    %183 = arith.truncf %182 : vector<128x64xf32> to vector<128x64xbf16>
    %184 = vector.extract_strided_slice %179 {offsets = [0, 0], sizes = [128, 64], strides = [1, 1]} : vector<128x128xf32> to vector<128x64xf32>
    %185 = arith.truncf %184 : vector<128x64xf32> to vector<128x64xbf16>
    %cst_79 = arith.constant dense<0.000000e+00> : vector<128x128xf32>
    %186 = tpu.matmul %181, %183, %cst_79 {dimension_numbers = #tpu.dot_dimension_numbers<[1], [1], [0], [0], [0, 0, 1, 0], [], []>} : vector<128x64xbf16>, vector<128x64xbf16>, vector<128x128xf32> -> vector<128x128xf32>
    %187 = arith.addf %186, %25 : vector<128x128xf32>
    %cst_80 = arith.constant dense<0xFF800000> : vector<128xf32>
    %188 = vector.multi_reduction <maximumf>, %187, %cst_80 [1] : vector<128x128xf32> to vector<128xf32>
    %189 = vector.shape_cast %188 : vector<128xf32> to vector<128x1xf32>
    %190 = vector.broadcast %189 : vector<128x1xf32> to vector<128x128xf32>
    %191 = arith.subf %187, %190 : vector<128x128xf32>
    %192 = math.exp %191 : vector<128x128xf32>
    %cst_81 = arith.constant dense<0.000000e+00> : vector<128xf32>
    %193 = vector.multi_reduction <add>, %192, %cst_81 [1] : vector<128x128xf32> to vector<128xf32>
    %194 = vector.shape_cast %193 : vector<128xf32> to vector<128x1xf32>
    %195 = tpu.reciprocal %194 {approx = true} : vector<128x1xf32> -> vector<128x1xf32>
    %196 = vector.broadcast %195 : vector<128x1xf32> to vector<128x128xf32>
    %197 = arith.mulf %192, %196 : vector<128x128xf32>
    %198 = arith.truncf %197 : vector<128x128xf32> to vector<128x128xbf16>
    %cst_82 = arith.constant dense<0.000000e+00> : vector<128x64xf32>
    %199 = tpu.matmul %198, %185, %cst_82 {dimension_numbers = #tpu.dot_dimension_numbers<[1], [0], [0], [1], [0, 0, 1, 1], [], []>} : vector<128x128xbf16>, vector<128x64xbf16>, vector<128x64xf32> -> vector<128x64xf32>
    %200 = vector.extract_strided_slice %177 {offsets = [0, 64], sizes = [128, 64], strides = [1, 1]} : vector<128x128xf32> to vector<128x64xf32>
    %201 = arith.truncf %200 : vector<128x64xf32> to vector<128x64xbf16>
    %202 = vector.extract_strided_slice %178 {offsets = [0, 64], sizes = [128, 64], strides = [1, 1]} : vector<128x128xf32> to vector<128x64xf32>
    %203 = arith.truncf %202 : vector<128x64xf32> to vector<128x64xbf16>
    %204 = vector.extract_strided_slice %179 {offsets = [0, 64], sizes = [128, 64], strides = [1, 1]} : vector<128x128xf32> to vector<128x64xf32>
    %205 = arith.truncf %204 : vector<128x64xf32> to vector<128x64xbf16>
    %cst_83 = arith.constant dense<0.000000e+00> : vector<128x128xf32>
    %206 = tpu.matmul %201, %203, %cst_83 {dimension_numbers = #tpu.dot_dimension_numbers<[1], [1], [0], [0], [0, 0, 1, 0], [], []>} : vector<128x64xbf16>, vector<128x64xbf16>, vector<128x128xf32> -> vector<128x128xf32>
    %207 = arith.addf %206, %25 : vector<128x128xf32>
    %cst_84 = arith.constant dense<0xFF800000> : vector<128xf32>
    %208 = vector.multi_reduction <maximumf>, %207, %cst_84 [1] : vector<128x128xf32> to vector<128xf32>
    %209 = vector.shape_cast %208 : vector<128xf32> to vector<128x1xf32>
    %210 = vector.broadcast %209 : vector<128x1xf32> to vector<128x128xf32>
    %211 = arith.subf %207, %210 : vector<128x128xf32>
    %212 = math.exp %211 : vector<128x128xf32>
    %cst_85 = arith.constant dense<0.000000e+00> : vector<128xf32>
    %213 = vector.multi_reduction <add>, %212, %cst_85 [1] : vector<128x128xf32> to vector<128xf32>
    %214 = vector.shape_cast %213 : vector<128xf32> to vector<128x1xf32>
    %215 = tpu.reciprocal %214 {approx = true} : vector<128x1xf32> -> vector<128x1xf32>
    %216 = vector.broadcast %215 : vector<128x1xf32> to vector<128x128xf32>
    %217 = arith.mulf %212, %216 : vector<128x128xf32>
    %218 = arith.truncf %217 : vector<128x128xf32> to vector<128x128xbf16>
    %cst_86 = arith.constant dense<0.000000e+00> : vector<128x64xf32>
    %219 = tpu.matmul %218, %205, %cst_86 {dimension_numbers = #tpu.dot_dimension_numbers<[1], [0], [0], [1], [0, 0, 1, 1], [], []>} : vector<128x128xbf16>, vector<128x64xbf16>, vector<128x64xf32> -> vector<128x64xf32>
    %220 = tpu.concatenate %199, %219 in 1 : vector<128x64xf32>, vector<128x64xf32> -> vector<128x128xf32>
    %221 = arith.truncf %220 : vector<128x128xf32> to vector<128x128xbf16>
    %c1_87 = arith.constant 1 : index
    %c0_88 = arith.constant 0 : index
    %c0_89 = arith.constant 0 : index
    %222 = vector.load %arg6[%c1_87, %c0_88, %c0_89] : memref<2x128x128xbf16, #tpu.memory_space<vmem>>, vector<1x128x128xbf16>
    %223 = vector.shape_cast %222 : vector<1x128x128xbf16> to vector<128x128xbf16>
    %cst_90 = arith.constant dense<0.000000e+00> : vector<128x128xf32>
    %224 = tpu.matmul %221, %223, %cst_90 {dimension_numbers = #tpu.dot_dimension_numbers<[1], [0], [0], [1], [0, 0, 1, 1], [], []>} : vector<128x128xbf16>, vector<128x128xbf16>, vector<128x128xf32> -> vector<128x128xf32>
    %c1_91 = arith.constant 1 : index
    %c0_92 = arith.constant 0 : index
    %c0_93 = arith.constant 0 : index
    %225 = vector.load %arg7[%c1_91, %c0_92, %c0_93] : memref<2x1x128xf32, #tpu.memory_space<vmem>>, vector<1x1x128xf32>
    %226 = vector.shape_cast %225 : vector<1x1x128xf32> to vector<1x128xf32>
    %227 = vector.broadcast %226 : vector<1x128xf32> to vector<128x128xf32>
    %228 = arith.addf %224, %227 : vector<128x128xf32>
    %229 = arith.addf %168, %228 : vector<128x128xf32>
    %c1_94 = arith.constant 1 : index
    %c0_95 = arith.constant 0 : index
    %c0_96 = arith.constant 0 : index
    %230 = vector.load %arg8[%c1_94, %c0_95, %c0_96] : memref<2x1x128xf32, #tpu.memory_space<vmem>>, vector<1x1x128xf32>
    %231 = vector.shape_cast %230 : vector<1x1x128xf32> to vector<1x128xf32>
    %c1_97 = arith.constant 1 : index
    %c0_98 = arith.constant 0 : index
    %c0_99 = arith.constant 0 : index
    %232 = vector.load %arg9[%c1_97, %c0_98, %c0_99] : memref<2x1x128xf32, #tpu.memory_space<vmem>>, vector<1x1x128xf32>
    %233 = vector.shape_cast %232 : vector<1x1x128xf32> to vector<1x128xf32>
    %cst_100 = arith.constant dense<0.000000e+00> : vector<128xf32>
    %234 = vector.multi_reduction <add>, %229, %cst_100 [1] : vector<128x128xf32> to vector<128xf32>
    %235 = vector.shape_cast %234 : vector<128xf32> to vector<128x1xf32>
    %cst_101 = arith.constant 1.280000e+02 : f32
    %236 = vector.broadcast %cst_101 : f32 to vector<128x1xf32>
    %237 = arith.divf %235, %236 : vector<128x1xf32>
    %238 = vector.broadcast %237 : vector<128x1xf32> to vector<128x128xf32>
    %239 = arith.subf %229, %238 : vector<128x128xf32>
    %240 = arith.mulf %239, %239 : vector<128x128xf32>
    %cst_102 = arith.constant dense<0.000000e+00> : vector<128xf32>
    %241 = vector.multi_reduction <add>, %240, %cst_102 [1] : vector<128x128xf32> to vector<128xf32>
    %242 = vector.shape_cast %241 : vector<128xf32> to vector<128x1xf32>
    %cst_103 = arith.constant 1.280000e+02 : f32
    %243 = vector.broadcast %cst_103 : f32 to vector<128x1xf32>
    %244 = arith.divf %242, %243 : vector<128x1xf32>
    %245 = vector.broadcast %237 : vector<128x1xf32> to vector<128x128xf32>
    %246 = arith.subf %229, %245 : vector<128x128xf32>
    %cst_104 = arith.constant 9.99999996E-13 : f32
    %247 = vector.broadcast %cst_104 : f32 to vector<128x1xf32>
    %248 = arith.addf %244, %247 : vector<128x1xf32>
    %249 = math.rsqrt %248 : vector<128x1xf32>
    %250 = vector.broadcast %249 : vector<128x1xf32> to vector<128x128xf32>
    %251 = arith.mulf %246, %250 : vector<128x128xf32>
    %252 = vector.broadcast %231 : vector<1x128xf32> to vector<128x128xf32>
    %253 = arith.mulf %251, %252 : vector<128x128xf32>
    %254 = vector.broadcast %233 : vector<1x128xf32> to vector<128x128xf32>
    %255 = arith.addf %253, %254 : vector<128x128xf32>
    %256 = arith.truncf %255 : vector<128x128xf32> to vector<128x128xbf16>
    %c1_105 = arith.constant 1 : index
    %c0_106 = arith.constant 0 : index
    %c0_107 = arith.constant 0 : index
    %257 = vector.load %arg10[%c1_105, %c0_106, %c0_107] : memref<2x128x256xbf16, #tpu.memory_space<vmem>>, vector<1x128x256xbf16>
    %258 = vector.shape_cast %257 : vector<1x128x256xbf16> to vector<128x256xbf16>
    %cst_108 = arith.constant dense<0.000000e+00> : vector<128x256xf32>
    %259 = tpu.matmul %256, %258, %cst_108 {dimension_numbers = #tpu.dot_dimension_numbers<[1], [0], [0], [1], [0, 0, 1, 1], [], []>} : vector<128x128xbf16>, vector<128x256xbf16>, vector<128x256xf32> -> vector<128x256xf32>
    %c1_109 = arith.constant 1 : index
    %c0_110 = arith.constant 0 : index
    %c0_111 = arith.constant 0 : index
    %260 = vector.load %arg11[%c1_109, %c0_110, %c0_111] : memref<2x1x256xf32, #tpu.memory_space<vmem>>, vector<1x1x256xf32>
    %261 = vector.shape_cast %260 : vector<1x1x256xf32> to vector<1x256xf32>
    %262 = vector.broadcast %261 : vector<1x256xf32> to vector<128x256xf32>
    %263 = arith.addf %259, %262 : vector<128x256xf32>
    %cst_112 = arith.constant 5.000000e-01 : f32
    %264 = vector.broadcast %cst_112 : f32 to vector<128x256xf32>
    %265 = arith.mulf %264, %263 : vector<128x256xf32>
    %cst_113 = arith.constant 4.471500e-02 : f32
    %266 = vector.broadcast %cst_113 : f32 to vector<128x256xf32>
    %267 = arith.mulf %266, %263 : vector<128x256xf32>
    %268 = arith.mulf %267, %263 : vector<128x256xf32>
    %269 = arith.mulf %268, %263 : vector<128x256xf32>
    %270 = arith.addf %263, %269 : vector<128x256xf32>
    %cst_114 = arith.constant 0.797884583 : f32
    %271 = vector.broadcast %cst_114 : f32 to vector<128x256xf32>
    %272 = arith.mulf %271, %270 : vector<128x256xf32>
    %273 = math.tanh %272 : vector<128x256xf32>
    %cst_115 = arith.constant 1.000000e+00 : f32
    %274 = vector.broadcast %cst_115 : f32 to vector<128x256xf32>
    %275 = arith.addf %274, %273 : vector<128x256xf32>
    %276 = arith.mulf %265, %275 : vector<128x256xf32>
    %277 = arith.truncf %276 : vector<128x256xf32> to vector<128x256xbf16>
    %c1_116 = arith.constant 1 : index
    %c0_117 = arith.constant 0 : index
    %c0_118 = arith.constant 0 : index
    %278 = vector.load %arg12[%c1_116, %c0_117, %c0_118] : memref<2x256x128xbf16, #tpu.memory_space<vmem>>, vector<1x256x128xbf16>
    %279 = vector.shape_cast %278 : vector<1x256x128xbf16> to vector<256x128xbf16>
    %cst_119 = arith.constant dense<0.000000e+00> : vector<128x128xf32>
    %280 = tpu.matmul %277, %279, %cst_119 {dimension_numbers = #tpu.dot_dimension_numbers<[1], [0], [0], [1], [0, 0, 1, 1], [], []>} : vector<128x256xbf16>, vector<256x128xbf16>, vector<128x128xf32> -> vector<128x128xf32>
    %c1_120 = arith.constant 1 : index
    %c0_121 = arith.constant 0 : index
    %c0_122 = arith.constant 0 : index
    %281 = vector.load %arg13[%c1_120, %c0_121, %c0_122] : memref<2x1x128xf32, #tpu.memory_space<vmem>>, vector<1x1x128xf32>
    %282 = vector.shape_cast %281 : vector<1x1x128xf32> to vector<1x128xf32>
    %283 = vector.broadcast %282 : vector<1x128xf32> to vector<128x128xf32>
    %284 = arith.addf %280, %283 : vector<128x128xf32>
    %285 = arith.addf %255, %284 : vector<128x128xf32>
    %c1_123 = arith.constant 1 : index
    %c0_124 = arith.constant 0 : index
    %c0_125 = arith.constant 0 : index
    %286 = vector.load %arg14[%c1_123, %c0_124, %c0_125] : memref<2x1x128xf32, #tpu.memory_space<vmem>>, vector<1x1x128xf32>
    %287 = vector.shape_cast %286 : vector<1x1x128xf32> to vector<1x128xf32>
    %c1_126 = arith.constant 1 : index
    %c0_127 = arith.constant 0 : index
    %c0_128 = arith.constant 0 : index
    %288 = vector.load %arg15[%c1_126, %c0_127, %c0_128] : memref<2x1x128xf32, #tpu.memory_space<vmem>>, vector<1x1x128xf32>
    %289 = vector.shape_cast %288 : vector<1x1x128xf32> to vector<1x128xf32>
    %cst_129 = arith.constant dense<0.000000e+00> : vector<128xf32>
    %290 = vector.multi_reduction <add>, %285, %cst_129 [1] : vector<128x128xf32> to vector<128xf32>
    %291 = vector.shape_cast %290 : vector<128xf32> to vector<128x1xf32>
    %cst_130 = arith.constant 1.280000e+02 : f32
    %292 = vector.broadcast %cst_130 : f32 to vector<128x1xf32>
    %293 = arith.divf %291, %292 : vector<128x1xf32>
    %294 = vector.broadcast %293 : vector<128x1xf32> to vector<128x128xf32>
    %295 = arith.subf %285, %294 : vector<128x128xf32>
    %296 = arith.mulf %295, %295 : vector<128x128xf32>
    %cst_131 = arith.constant dense<0.000000e+00> : vector<128xf32>
    %297 = vector.multi_reduction <add>, %296, %cst_131 [1] : vector<128x128xf32> to vector<128xf32>
    %298 = vector.shape_cast %297 : vector<128xf32> to vector<128x1xf32>
    %cst_132 = arith.constant 1.280000e+02 : f32
    %299 = vector.broadcast %cst_132 : f32 to vector<128x1xf32>
    %300 = arith.divf %298, %299 : vector<128x1xf32>
    %301 = vector.broadcast %293 : vector<128x1xf32> to vector<128x128xf32>
    %302 = arith.subf %285, %301 : vector<128x128xf32>
    %cst_133 = arith.constant 9.99999996E-13 : f32
    %303 = vector.broadcast %cst_133 : f32 to vector<128x1xf32>
    %304 = arith.addf %300, %303 : vector<128x1xf32>
    %305 = math.rsqrt %304 : vector<128x1xf32>
    %306 = vector.broadcast %305 : vector<128x1xf32> to vector<128x128xf32>
    %307 = arith.mulf %302, %306 : vector<128x128xf32>
    %308 = vector.broadcast %287 : vector<1x128xf32> to vector<128x128xf32>
    %309 = arith.mulf %307, %308 : vector<128x128xf32>
    %310 = vector.broadcast %289 : vector<1x128xf32> to vector<128x128xf32>
    %311 = arith.addf %309, %310 : vector<128x128xf32>
    %312 = arith.truncf %311 : vector<128x128xf32> to vector<128x128xbf16>
    %c0_134 = arith.constant 0 : index
    %c0_135 = arith.constant 0 : index
    %313 = vector.load %arg16[%c0_134, %c0_135] : memref<128x128xbf16, #tpu.memory_space<vmem>>, vector<128x128xbf16>
    %cst_136 = arith.constant dense<0.000000e+00> : vector<128x128xf32>
    %314 = tpu.matmul %312, %313, %cst_136 {dimension_numbers = #tpu.dot_dimension_numbers<[1], [0], [0], [1], [0, 0, 1, 1], [], []>} : vector<128x128xbf16>, vector<128x128xbf16>, vector<128x128xf32> -> vector<128x128xf32>
    %c0_137 = arith.constant 0 : index
    %c0_138 = arith.constant 0 : index
    %315 = vector.load %arg17[%c0_137, %c0_138] : memref<1x128xf32, #tpu.memory_space<vmem>>, vector<1x128xf32>
    %316 = vector.broadcast %315 : vector<1x128xf32> to vector<128x128xf32>
    %317 = arith.addf %314, %316 : vector<128x128xf32>
    %cst_139 = arith.constant 0.000000e+00 : f32
    %318 = vector.broadcast %cst_139 : f32 to vector<128x128xf32>
    %319 = arith.maximumf %317, %318 : vector<128x128xf32>
    %320 = arith.truncf %319 : vector<128x128xf32> to vector<128x128xbf16>
    %c0_140 = arith.constant 0 : index
    %c0_141 = arith.constant 0 : index
    %321 = vector.load %arg18[%c0_140, %c0_141] : memref<128x128xbf16, #tpu.memory_space<vmem>>, vector<128x128xbf16>
    %cst_142 = arith.constant dense<0.000000e+00> : vector<128x128xf32>
    %322 = tpu.matmul %320, %321, %cst_142 {dimension_numbers = #tpu.dot_dimension_numbers<[1], [0], [0], [1], [0, 0, 1, 1], [], []>} : vector<128x128xbf16>, vector<128x128xbf16>, vector<128x128xf32> -> vector<128x128xf32>
    %c0_143 = arith.constant 0 : index
    %c0_144 = arith.constant 0 : index
    %323 = vector.load %arg19[%c0_143, %c0_144] : memref<1x128xf32, #tpu.memory_space<vmem>>, vector<1x128xf32>
    %324 = vector.broadcast %323 : vector<1x128xf32> to vector<128x128xf32>
    %325 = arith.addf %322, %324 : vector<128x128xf32>
    %c0_145 = arith.constant 0 : index
    %c0_146 = arith.constant 0 : index
    %326 = vector.load %arg20[%c0_145, %c0_146] : memref<128x128xf32, #tpu.memory_space<vmem>>, vector<128x128xf32>
    tpu.vector_store %arg20[%c0_145, %c0_146], %325 {strides = array<i32>} : memref<128x128xf32, #tpu.memory_space<vmem>>, vector<128x128xf32>,
    return
  }
}

</mosaic_0001>

<llo_original>
// kernel: _lambda_.1
$region0: #{_lambda_.1}
  #allocation0 [shape = 'u32[]', space=smem, size = 0x4, offset = 0x4, fixed_abs, tag = 'smem constant byte address 0x4 - core index']
  #allocation1 [shape = 'u32[144,128]{1,0:T(1,128)}', space=vmem, size = 0x12000, scoped, tag = 'internal scratch']
  %s0 = inlined_call_operand.vmem [shape: f32[128,128], index: 0, kind: input, shape index: {}]
  %s1 = inlined_call_operand.vmem [shape: f32[128,128], index: 1, kind: input, shape index: {}]
  %s2 = inlined_call_operand.vmem [shape: f32[1,128], index: 2, kind: input, shape index: {}]
  %s3 = inlined_call_operand.vmem [shape: f32[1,128], index: 3, kind: input, shape index: {}]
  %s4 = inlined_call_operand.vmem [shape: bf16[2,128,384], index: 4, kind: input, shape index: {}]
  %s5 = inlined_call_operand.vmem [shape: f32[2,1,384], index: 5, kind: input, shape index: {}]
  %s6 = inlined_call_operand.vmem [shape: bf16[2,128,128], index: 6, kind: input, shape index: {}]
  %s7 = inlined_call_operand.vmem [shape: f32[2,1,128], index: 7, kind: input, shape index: {}]
  %s8 = inlined_call_operand.vmem [shape: f32[2,1,128], index: 8, kind: input, shape index: {}]
  %s9 = inlined_call_operand.vmem [shape: f32[2,1,128], index: 9, kind: input, shape index: {}]
  %s10 = inlined_call_operand.vmem [shape: bf16[2,128,256], index: 10, kind: input, shape index: {}]
  %s11 = inlined_call_operand.vmem [shape: f32[2,1,256], index: 11, kind: input, shape index: {}]
  %s12 = inlined_call_operand.vmem [shape: bf16[2,256,128], index: 12, kind: input, shape index: {}]
  %s13 = inlined_call_operand.vmem [shape: f32[2,1,128], index: 13, kind: input, shape index: {}]
  %s14 = inlined_call_operand.vmem [shape: f32[2,1,128], index: 14, kind: input, shape index: {}]
  %s15 = inlined_call_operand.vmem [shape: f32[2,1,128], index: 15, kind: input, shape index: {}]
  %s16 = inlined_call_operand.vmem [shape: bf16[128,128], index: 16, kind: input, shape index: {}]
  %s17 = inlined_call_operand.vmem [shape: f32[1,128], index: 17, kind: input, shape index: {}]
  %s18 = inlined_call_operand.vmem [shape: bf16[128,128], index: 18, kind: input, shape index: {}]
  %s19 = inlined_call_operand.vmem [shape: f32[1,128], index: 19, kind: input, shape index: {}]
  %s20 = inlined_call_operand.vmem [shape: f32[128,128], index: 20, kind: output, shape index: {}]
  %s21 = sld [smem:[#allocation0]]
  $region90: #{_lambda_.1} parent=0
    _
  %s23 = ssub.s32 1, %s21
  %s24 = scalar_select 0, %s23, %s21
  // Predicated region
  $region2: #{_lambda_.1} parent=0 // pred_check
    _
  $region3: #{_lambda_.1} parent=0 // pred_check_branch
    %26 = sbr.rel (0) target = $region5
  $region4: #{_lambda_.1} parent=0 // pred_region
    _
  $region5: #{_lambda_.1} parent=0 // pred_fallthru
    _
  // Predicated region
  $region6: #{_lambda_.1} parent=0 // pred_check
    _
  $region7: #{_lambda_.1} parent=0 // pred_check_branch
    %28 = sbr.rel (0) target = $region9
  $region8: #{_lambda_.1} parent=0 // pred_region
    _
  $region9: #{_lambda_.1} parent=0 // pred_fallthru
    _
  // Predicated region
  $region10: #{_lambda_.1} parent=0 // pred_check
    _
  $region11: #{_lambda_.1} parent=0 // pred_check_branch
    %30 = sbr.rel (0) target = $region13
  $region12: #{_lambda_.1} parent=0 // pred_region
    _
  $region13: #{_lambda_.1} parent=0 // pred_fallthru
    _
  // Predicated region
  $region14: #{_lambda_.1} parent=0 // pred_check
    _
  $region15: #{_lambda_.1} parent=0 // pred_check_branch
    %32 = sbr.rel (0) target = $region17
  $region16: #{_lambda_.1} parent=0 // pred_region
    _
  $region17: #{_lambda_.1} parent=0 // pred_fallthru
    _
  // Predicated region
  $region18: #{_lambda_.1} parent=0 // pred_check
    _
  $region19: #{_lambda_.1} parent=0 // pred_check_branch
    %34 = sbr.rel (0) target = $region21
  $region20: #{_lambda_.1} parent=0 // pred_region
    _
  $region21: #{_lambda_.1} parent=0 // pred_fallthru
    _
  // Predicated region
  $region22: #{_lambda_.1} parent=0 // pred_check
    _
  $region23: #{_lambda_.1} parent=0 // pred_check_branch
    %36 = sbr.rel (0) target = $region25
  $region24: #{_lambda_.1} parent=0 // pred_region
    _
  $region25: #{_lambda_.1} parent=0 // pred_fallthru
    _
  // Predicated region
  $region26: #{_lambda_.1} parent=0 // pred_check
    _
  $region27: #{_lambda_.1} parent=0 // pred_check_branch
    %38 = sbr.rel (0) target = $region29
  $region28: #{_lambda_.1} parent=0 // pred_region
    _
  $region29: #{_lambda_.1} parent=0 // pred_fallthru
    _
  // Predicated region
  $region30: #{_lambda_.1} parent=0 // pred_check
    _
  $region31: #{_lambda_.1} parent=0 // pred_check_branch
    %40 = sbr.rel (0) target = $region33
  $region32: #{_lambda_.1} parent=0 // pred_region
    _
  $region33: #{_lambda_.1} parent=0 // pred_fallthru
    _
  // Predicated region
  $region34: #{_lambda_.1} parent=0 // pred_check
    _
  $region35: #{_lambda_.1} parent=0 // pred_check_branch
    %42 = sbr.rel (0) target = $region37
  $region36: #{_lambda_.1} parent=0 // pred_region
    _
  $region37: #{_lambda_.1} parent=0 // pred_fallthru
    _
  // Predicated region
  $region38: #{_lambda_.1} parent=0 // pred_check
    _
  $region39: #{_lambda_.1} parent=0 // pred_check_branch
    %44 = sbr.rel (0) target = $region41
  $region40: #{_lambda_.1} parent=0 // pred_region
    _
  $region41: #{_lambda_.1} parent=0 // pred_fallthru
    _
  // Predicated region
  $region42: #{_lambda_.1} parent=0 // pred_check
    _
  $region43: #{_lambda_.1} parent=0 // pred_check_branch
    %46 = sbr.rel (0) target = $region45
  $region44: #{_lambda_.1} parent=0 // pred_region
    _
  $region45: #{_lambda_.1} parent=0 // pred_fallthru
    _
  // Predicated region
  $region46: #{_lambda_.1} parent=0 // pred_check
    _
  $region47: #{_lambda_.1} parent=0 // pred_check_branch
    %48 = sbr.rel (0) target = $region49
  $region48: #{_lambda_.1} parent=0 // pred_region
    _
  $region49: #{_lambda_.1} parent=0 // pred_fallthru
    _
  // Predicated region
  $region50: #{_lambda_.1} parent=0 // pred_check
    _
  $region51: #{_lambda_.1} parent=0 // pred_check_branch
    %50 = sbr.rel (0) target = $region53
  $region52: #{_lambda_.1} parent=0 // pred_region
    _
  $region53: #{_lambda_.1} parent=0 // pred_fallthru
    _
  // Predicated region
  $region54: #{_lambda_.1} parent=0 // pred_check
    _
  $region55: #{_lambda_.1} parent=0 // pred_check_branch
    %52 = sbr.rel (0) target = $region57
  $region56: #{_lambda_.1} parent=0 // pred_region
    _
  $region57: #{_lambda_.1} parent=0 // pred_fallthru
    _
  // Predicated region
  $region58: #{_lambda_.1} parent=0 // pred_check
    _
  $region59: #{_lambda_.1} parent=0 // pred_check_branch
    %54 = sbr.rel (0) target = $region61
  $region60: #{_lambda_.1} parent=0 // pred_region
    _
  $region61: #{_lambda_.1} parent=0 // pred_fallthru
    _
  // Predicated region
  $region62: #{_lambda_.1} parent=0 // pred_check
    _
  $region63: #{_lambda_.1} parent=0 // pred_check_branch
    %56 = sbr.rel (0) target = $region65
  $region64: #{_lambda_.1} parent=0 // pred_region
    _
  $region65: #{_lambda_.1} parent=0 // pred_fallthru
    _
  // Predicated region
  $region66: #{_lambda_.1} parent=0 // pred_check
    _
  $region67: #{_lambda_.1} parent=0 // pred_check_branch
    %58 = sbr.rel (0) target = $region69
  $region68: #{_lambda_.1} parent=0 // pred_region
    _
  $region69: #{_lambda_.1} parent=0 // pred_fallthru
    _
  // Predicated region
  $region70: #{_lambda_.1} parent=0 // pred_check
    _
  $region71: #{_lambda_.1} parent=0 // pred_check_branch
    %60 = sbr.rel (0) target = $region73
  $region72: #{_lambda_.1} parent=0 // pred_region
    _
  $region73: #{_lambda_.1} parent=0 // pred_fallthru
    _
  // Predicated region
  $region74: #{_lambda_.1} parent=0 // pred_check
    _
  $region75: #{_lambda_.1} parent=0 // pred_check_branch
    %62 = sbr.rel (0) target = $region77
  $region76: #{_lambda_.1} parent=0 // pred_region
    _
  $region77: #{_lambda_.1} parent=0 // pred_fallthru
    _
  // Predicated region
  $region78: #{_lambda_.1} parent=0 // pred_check
    _
  $region79: #{_lambda_.1} parent=0 // pred_check_branch
    %64 = sbr.rel (0) target = $region81
  $region80: #{_lambda_.1} parent=0 // pred_region
    _
  $region81: #{_lambda_.1} parent=0 // pred_fallthru
    _
  %v66 = vld [vmem:[%s0] sm:$0xff]
  %v67 = vld [vmem:[%s0 + $0x8] sm:$0xff]
  %v68 = vld [vmem:[%s0 + $0x10] sm:$0xff]
  %v69 = vld [vmem:[%s0 + $0x18] sm:$0xff]
  %v70 = vld [vmem:[%s0 + $0x20] sm:$0xff]
  %v71 = vld [vmem:[%s0 + $0x28] sm:$0xff]
  %v72 = vld [vmem:[%s0 + $0x30] sm:$0xff]
  %v73 = vld [vmem:[%s0 + $0x38] sm:$0xff]
  %v74 = vld [vmem:[%s0 + $0x40] sm:$0xff]
  %v75 = vld [vmem:[%s0 + $0x48] sm:$0xff]
  %v76 = vld [vmem:[%s0 + $0x50] sm:$0xff]
  %v77 = vld [vmem:[%s0 + $0x58] sm:$0xff]
  %v78 = vld [vmem:[%s0 + $0x60] sm:$0xff]
  %v79 = vld [vmem:[%s0 + $0x68] sm:$0xff]
  %v80 = vld [vmem:[%s0 + $0x70] sm:$0xff]
  %v81 = vld [vmem:[%s0 + $0x78] sm:$0xff]
  %v82 = vld [vmem:[%s2] sm:$0x1]
  %v83 = vld [vmem:[%s3] sm:$0x1]
  %84 = vadd.xlane.f32.xlu0 %v66
  %v85 = vpop.xlane.xlu0 %84
  %86 = vadd.xlane.f32.xlu0 %v67
  %v87 = vpop.xlane.xlu0 %86
  %88 = vadd.xlane.f32.xlu0 %v68
  %v89 = vpop.xlane.xlu0 %88
  %90 = vadd.xlane.f32.xlu0 %v69
  %v91 = vpop.xlane.xlu0 %90
  %92 = vadd.xlane.f32.xlu0 %v70
  %v93 = vpop.xlane.xlu0 %92
  %94 = vadd.xlane.f32.xlu0 %v71
  %v95 = vpop.xlane.xlu0 %94
  %96 = vadd.xlane.f32.xlu0 %v72
  %v97 = vpop.xlane.xlu0 %96
  %98 = vadd.xlane.f32.xlu0 %v73
  %v99 = vpop.xlane.xlu0 %98
  %100 = vadd.xlane.f32.xlu0 %v74
  %v101 = vpop.xlane.xlu0 %100
  %102 = vadd.xlane.f32.xlu0 %v75
  %v103 = vpop.xlane.xlu0 %102
  %104 = vadd.xlane.f32.xlu0 %v76
  %v105 = vpop.xlane.xlu0 %104
  %106 = vadd.xlane.f32.xlu0 %v77
  %v107 = vpop.xlane.xlu0 %106
  %108 = vadd.xlane.f32.xlu0 %v78
  %v109 = vpop.xlane.xlu0 %108
  %110 = vadd.xlane.f32.xlu0 %v79
  %v111 = vpop.xlane.xlu0 %110
  %112 = vadd.xlane.f32.xlu0 %v80
  %v113 = vpop.xlane.xlu0 %112
  %114 = vadd.xlane.f32.xlu0 %v81
  %v115 = vpop.xlane.xlu0 %114
  %v116 = vrcp.pop 128.0
  %v117 = vmul.f32 %v85, %v116
  %v118 = vmul.f32 %v87, %v116
  %v119 = vmul.f32 %v89, %v116
  %v120 = vmul.f32 %v91, %v116
  %v121 = vmul.f32 %v93, %v116
  %v122 = vmul.f32 %v95, %v116
  %v123 = vmul.f32 %v97, %v116
  %v124 = vmul.f32 %v99, %v116
  %v125 = vmul.f32 %v101, %v116
  %v126 = vmul.f32 %v103, %v116
  %v127 = vmul.f32 %v105, %v116
  %v128 = vmul.f32 %v107, %v116
  %v129 = vmul.f32 %v109, %v116
  %v130 = vmul.f32 %v111, %v116
  %v131 = vmul.f32 %v113, %v116
  %v132 = vmul.f32 %v115, %v116
  %v133 = vsub.f32 %v66, %v117
  %v134 = vsub.f32 %v67, %v118
  %v135 = vsub.f32 %v68, %v119
  %v136 = vsub.f32 %v69, %v120
  %v137 = vsub.f32 %v70, %v121
  %v138 = vsub.f32 %v71, %v122
  %v139 = vsub.f32 %v72, %v123
  %v140 = vsub.f32 %v73, %v124
  %v141 = vsub.f32 %v74, %v125
  %v142 = vsub.f32 %v75, %v126
  %v143 = vsub.f32 %v76, %v127
  %v144 = vsub.f32 %v77, %v128
  %v145 = vsub.f32 %v78, %v129
  %v146 = vsub.f32 %v79, %v130
  %v147 = vsub.f32 %v80, %v131
  %v148 = vsub.f32 %v81, %v132
  %v149 = vmul.f32 %v133, %v133
  %v150 = vmul.f32 %v134, %v134
  %v151 = vmul.f32 %v135, %v135
  %v152 = vmul.f32 %v136, %v136
  %v153 = vmul.f32 %v137, %v137
  %v154 = vmul.f32 %v138, %v138
  %v155 = vmul.f32 %v139, %v139
  %v156 = vmul.f32 %v140, %v140
  %v157 = vmul.f32 %v141, %v141
  %v158 = vmul.f32 %v142, %v142
  %v159 = vmul.f32 %v143, %v143
  %v160 = vmul.f32 %v144, %v144
  %v161 = vmul.f32 %v145, %v145
  %v162 = vmul.f32 %v146, %v146
  %v163 = vmul.f32 %v147, %v147
  %v164 = vmul.f32 %v148, %v148
  %165 = vadd.xlane.f32.xlu0 %v149
  %v166 = vpop.xlane.xlu0 %165
  %167 = vadd.xlane.f32.xlu0 %v150
  %v168 = vpop.xlane.xlu0 %167
  %169 = vadd.xlane.f32.xlu0 %v151
  %v170 = vpop.xlane.xlu0 %169
  %171 = vadd.xlane.f32.xlu0 %v152
  %v172 = vpop.xlane.xlu0 %171
  %173 = vadd.xlane.f32.xlu0 %v153
  %v174 = vpop.xlane.xlu0 %173
  %175 = vadd.xlane.f32.xlu0 %v154
  %v176 = vpop.xlane.xlu0 %175
  %177 = vadd.xlane.f32.xlu0 %v155
  %v178 = vpop.xlane.xlu0 %177
  %179 = vadd.xlane.f32.xlu0 %v156
  %v180 = vpop.xlane.xlu0 %179
  %181 = vadd.xlane.f32.xlu0 %v157
  %v182 = vpop.xlane.xlu0 %181
  %183 = vadd.xlane.f32.xlu0 %v158
  %v184 = vpop.xlane.xlu0 %183
  %185 = vadd.xlane.f32.xlu0 %v159
  %v186 = vpop.xlane.xlu0 %185
  %187 = vadd.xlane.f32.xlu0 %v160
  %v188 = vpop.xlane.xlu0 %187
  %189 = vadd.xlane.f32.xlu0 %v161
  %v190 = vpop.xlane.xlu0 %189
  %191 = vadd.xlane.f32.xlu0 %v162
  %v192 = vpop.xlane.xlu0 %191
  %193 = vadd.xlane.f32.xlu0 %v163
  %v194 = vpop.xlane.xlu0 %193
  %195 = vadd.xlane.f32.xlu0 %v164
  %v196 = vpop.xlane.xlu0 %195
  %v197 = vmul.f32 %v166, %v116
  %v198 = vmul.f32 %v168, %v116
  %v199 = vmul.f32 %v170, %v116
  %v200 = vmul.f32 %v172, %v116
  %v201 = vmul.f32 %v174, %v116
  %v202 = vmul.f32 %v176, %v116
  %v203 = vmul.f32 %v178, %v116
  %v204 = vmul.f32 %v180, %v116
  %v205 = vmul.f32 %v182, %v116
  %v206 = vmul.f32 %v184, %v116
  %v207 = vmul.f32 %v186, %v116
  %v208 = vmul.f32 %v188, %v116
  %v209 = vmul.f32 %v190, %v116
  %v210 = vmul.f32 %v192, %v116
  %v211 = vmul.f32 %v194, %v116
  %v212 = vmul.f32 %v196, %v116
  %v213 = vadd.f32 %v197, 1e-12
  %v214 = vadd.f32 %v198, 1e-12
  %v215 = vadd.f32 %v199, 1e-12
  %v216 = vadd.f32 %v200, 1e-12
  %v217 = vadd.f32 %v201, 1e-12
  %v218 = vadd.f32 %v202, 1e-12
  %v219 = vadd.f32 %v203, 1e-12
  %v220 = vadd.f32 %v204, 1e-12
  %v221 = vadd.f32 %v205, 1e-12
  %v222 = vadd.f32 %v206, 1e-12
  %v223 = vadd.f32 %v207, 1e-12
  %v224 = vadd.f32 %v208, 1e-12
  %v225 = vadd.f32 %v209, 1e-12
  %v226 = vadd.f32 %v210, 1e-12
  %v227 = vadd.f32 %v211, 1e-12
  %v228 = vadd.f32 %v212, 1e-12
  %v229 = vrsqrt.pop %v213
  %v230 = vrsqrt.pop %v214
  %v231 = vrsqrt.pop %v215
  %v232 = vrsqrt.pop %v216
  %v233 = vrsqrt.pop %v217
  %v234 = vrsqrt.pop %v218
  %v235 = vrsqrt.pop %v219
  %v236 = vrsqrt.pop %v220
  %v237 = vrsqrt.pop %v221
  %v238 = vrsqrt.pop %v222
  %v239 = vrsqrt.pop %v223
  %v240 = vrsqrt.pop %v224
  %v241 = vrsqrt.pop %v225
  %v242 = vrsqrt.pop %v226
  %v243 = vrsqrt.pop %v227
  %v244 = vrsqrt.pop %v228
  %v245 = vmul.f32 %v133, %v229
  %v246 = vmul.f32 %v134, %v230
  %v247 = vmul.f32 %v135, %v231
  %v248 = vmul.f32 %v136, %v232
  %v249 = vmul.f32 %v137, %v233
  %v250 = vmul.f32 %v138, %v234
  %v251 = vmul.f32 %v139, %v235
  %v252 = vmul.f32 %v140, %v236
  %v253 = vmul.f32 %v141, %v237
  %v254 = vmul.f32 %v142, %v238
  %v255 = vmul.f32 %v143, %v239
  %v256 = vmul.f32 %v144, %v240
  %v257 = vmul.f32 %v145, %v241
  %v258 = vmul.f32 %v146, %v242
  %v259 = vmul.f32 %v147, %v243
  %v260 = vmul.f32 %v148, %v244
  %v262 = vlaneseq
  %v263 = vshrl.u32 %v262, 7
  %v264 = vsub.s32 0, %v263
  %v265 = vrot.slane %v82, %v264
  %v267 = vmul.f32 %v245, %v265
  %v268 = vmul.f32 %v246, %v265
  %v269 = vmul.f32 %v247, %v265
  %v270 = vmul.f32 %v248, %v265
  %v271 = vmul.f32 %v249, %v265
  %v272 = vmul.f32 %v250, %v265
  %v273 = vmul.f32 %v251, %v265
  %v274 = vmul.f32 %v252, %v265
  %v275 = vmul.f32 %v253, %v265
  %v276 = vmul.f32 %v254, %v265
  %v277 = vmul.f32 %v255, %v265
  %v278 = vmul.f32 %v256, %v265
  %v279 = vmul.f32 %v257, %v265
  %v280 = vmul.f32 %v258, %v265
  %v281 = vmul.f32 %v259, %v265
  %v282 = vmul.f32 %v260, %v265
  %v284 = vlaneseq
  %v285 = vshrl.u32 %v284, 7
  %v286 = vsub.s32 0, %v285
  %v287 = vrot.slane %v83, %v286
  %v289 = vadd.f32 %v267, %v287
  %v290 = vadd.f32 %v268, %v287
  %v291 = vadd.f32 %v269, %v287
  %v292 = vadd.f32 %v270, %v287
  %v293 = vadd.f32 %v271, %v287
  %v294 = vadd.f32 %v272, %v287
  %v295 = vadd.f32 %v273, %v287
  %v296 = vadd.f32 %v274, %v287
  %v297 = vadd.f32 %v275, %v287
  %v298 = vadd.f32 %v276, %v287
  %v299 = vadd.f32 %v277, %v287
  %v300 = vadd.f32 %v278, %v287
  %v301 = vadd.f32 %v279, %v287
  %v302 = vadd.f32 %v280, %v287
  %v303 = vadd.f32 %v281, %v287
  %v304 = vadd.f32 %v282, %v287
  %v305 = vld [vmem:[%s1] sm:$0xff]
  %v306 = vld [vmem:[%s1 + $0x8] sm:$0xff]
  %v307 = vld [vmem:[%s1 + $0x10] sm:$0xff]
  %v308 = vld [vmem:[%s1 + $0x18] sm:$0xff]
  %v309 = vld [vmem:[%s1 + $0x20] sm:$0xff]
  %v310 = vld [vmem:[%s1 + $0x28] sm:$0xff]
  %v311 = vld [vmem:[%s1 + $0x30] sm:$0xff]
  %v312 = vld [vmem:[%s1 + $0x38] sm:$0xff]
  %v313 = vld [vmem:[%s1 + $0x40] sm:$0xff]
  %v314 = vld [vmem:[%s1 + $0x48] sm:$0xff]
  %v315 = vld [vmem:[%s1 + $0x50] sm:$0xff]
  %v316 = vld [vmem:[%s1 + $0x58] sm:$0xff]
  %v317 = vld [vmem:[%s1 + $0x60] sm:$0xff]
  %v318 = vld [vmem:[%s1 + $0x68] sm:$0xff]
  %v319 = vld [vmem:[%s1 + $0x70] sm:$0xff]
  %v320 = vld [vmem:[%s1 + $0x78] sm:$0xff]
  %v321 = vpack.c.bf16 %v290, %v289
  %v322 = vpack.c.bf16 %v292, %v291
  %v323 = vpack.c.bf16 %v294, %v293
  %v324 = vpack.c.bf16 %v296, %v295
  %v325 = vpack.c.bf16 %v298, %v297
  %v326 = vpack.c.bf16 %v300, %v299
  %v327 = vpack.c.bf16 %v302, %v301
  %v328 = vpack.c.bf16 %v304, %v303
  %v329 = vld [vmem:[%s4] sm:$0xff]
  %v330 = vld [vmem:[%s4 + $0x8] sm:$0xf]
  %v331 = vld [vmem:[%s4 + $0xc] sm:$0xff]
  %v332 = vld [vmem:[%s4 + $0x14] sm:$0xf]
  %v333 = vld [vmem:[%s4 + $0x18] sm:$0xff]
  %v334 = vld [vmem:[%s4 + $0x20] sm:$0xf]
  %v335 = vld [vmem:[%s4 + $0x24] sm:$0xff]
  %v336 = vld [vmem:[%s4 + $0x2c] sm:$0xf]
  %v337 = vld [vmem:[%s4 + $0x30] sm:$0xff]
  %v338 = vld [vmem:[%s4 + $0x38] sm:$0xf]
  %v339 = vld [vmem:[%s4 + $0x3c] sm:$0xff]
  %v340 = vld [vmem:[%s4 + $0x44] sm:$0xf]
  %v341 = vld [vmem:[%s4 + $0x48] sm:$0xff]
  %v342 = vld [vmem:[%s4 + $0x50] sm:$0xf]
  %v343 = vld [vmem:[%s4 + $0x54] sm:$0xff]
  %v344 = vld [vmem:[%s4 + $0x5c] sm:$0xf]
  %v345 = vld [vmem:[%s4 + $0x60] sm:$0xff]
  %v346 = vld [vmem:[%s4 + $0x68] sm:$0xf]
  %v347 = vld [vmem:[%s4 + $0x6c] sm:$0xff]
  %v348 = vld [vmem:[%s4 + $0x74] sm:$0xf]
  %v349 = vld [vmem:[%s4 + $0x78] sm:$0xff]
  %v350 = vld [vmem:[%s4 + $0x80] sm:$0xf]
  %v351 = vld [vmem:[%s4 + $0x84] sm:$0xff]
  %v352 = vld [vmem:[%s4 + $0x8c] sm:$0xf]
  %v353 = vld [vmem:[%s4 + $0x90] sm:$0xff]
  %v354 = vld [vmem:[%s4 + $0x98] sm:$0xf]
  %v355 = vld [vmem:[%s4 + $0x9c] sm:$0xff]
  %v356 = vld [vmem:[%s4 + $0xa4] sm:$0xf]
  %v357 = vld [vmem:[%s4 + $0xa8] sm:$0xff]
  %v358 = vld [vmem:[%s4 + $0xb0] sm:$0xf]
  %v359 = vld [vmem:[%s4 + $0xb4] sm:$0xff]
  %v360 = vld [vmem:[%s4 + $0xbc] sm:$0xf]
  %v361 = vld [vmem:[%s5] sm:$0x7]
  %v363 = vlaneseq
  %v364 = vshrl.u32 %v363, 7
  %v365 = vsub.s32 0, %v364
  %v366 = vrot.slane %v361, %v365
  %v367 = vlaneseq
  %v368 = vshrl.u32 %v367, 7
  %v369 = vsub.s32 1, %v368
  %v370 = vrot.slane %v361, %v369
  %v371 = vlaneseq
  %v372 = vshrl.u32 %v371, 7
  %v373 = vsub.s32 2, %v372
  %v374 = vrot.slane %v361, %v373
  %v410 = vunpack.c.l.b16 %v329
  %v411 = vunpack.c.h.b16 %v329
  %v412 = vunpack.c.l.b16 %v330
  %v413 = vunpack.c.l.b16 %v331
  %v414 = vunpack.c.h.b16 %v331
  %v415 = vunpack.c.l.b16 %v332
  %v416 = vunpack.c.l.b16 %v333
  %v417 = vunpack.c.h.b16 %v333
  %v418 = vunpack.c.l.b16 %v334
  %v419 = vunpack.c.l.b16 %v335
  %v420 = vunpack.c.h.b16 %v335
  %v421 = vunpack.c.l.b16 %v336
  %v422 = vunpack.c.l.b16 %v337
  %v423 = vunpack.c.h.b16 %v337
  %v424 = vunpack.c.l.b16 %v338
  %v425 = vunpack.c.l.b16 %v339
  %v426 = vunpack.c.h.b16 %v339
  %v427 = vunpack.c.l.b16 %v340
  %v428 = vunpack.c.l.b16 %v341
  %v429 = vunpack.c.h.b16 %v341
  %v430 = vunpack.c.l.b16 %v342
  %v431 = vunpack.c.l.b16 %v343
  %v432 = vunpack.c.h.b16 %v343
  %v433 = vunpack.c.l.b16 %v344
  %v434 = vunpack.c.l.b16 %v345
  %v435 = vunpack.c.h.b16 %v345
  %v436 = vunpack.c.l.b16 %v346
  %v437 = vunpack.c.l.b16 %v347
  %v438 = vunpack.c.h.b16 %v347
  %v439 = vunpack.c.l.b16 %v348
  %v440 = vunpack.c.l.b16 %v349
  %v441 = vunpack.c.h.b16 %v349
  %v442 = vunpack.c.l.b16 %v350
  %v443 = vunpack.c.l.b16 %v351
  %v444 = vunpack.c.h.b16 %v351
  %v445 = vunpack.c.l.b16 %v352
  %v446 = vunpack.c.l.b16 %v353
  %v447 = vunpack.c.h.b16 %v353
  %v448 = vunpack.c.l.b16 %v354
  %v449 = vunpack.c.l.b16 %v355
  %v450 = vunpack.c.h.b16 %v355
  %v451 = vunpack.c.l.b16 %v356
  %v452 = vunpack.c.l.b16 %v357
  %v453 = vunpack.c.h.b16 %v357
  %v454 = vunpack.c.l.b16 %v358
  %v455 = vunpack.c.l.b16 %v359
  %v456 = vunpack.c.h.b16 %v359
  %v457 = vunpack.c.l.b16 %v360
  %v458 = vpack.c.b16 %v413, %v410
  %v459 = vpack.c.b16 %v414, %v411
  %v460 = vpack.c.b16 %v415, %v412
  %v461 = vpack.c.b16 %v419, %v416
  %v462 = vpack.c.b16 %v420, %v417
  %v463 = vpack.c.b16 %v421, %v418
  %v464 = vpack.c.b16 %v425, %v422
  %v465 = vpack.c.b16 %v426, %v423
  %v466 = vpack.c.b16 %v427, %v424
  %v467 = vpack.c.b16 %v431, %v428
  %v468 = vpack.c.b16 %v432, %v429
  %v469 = vpack.c.b16 %v433, %v430
  %v470 = vpack.c.b16 %v437, %v434
  %v471 = vpack.c.b16 %v438, %v435
  %v472 = vpack.c.b16 %v439, %v436
  %v473 = vpack.c.b16 %v443, %v440
  %v474 = vpack.c.b16 %v444, %v441
  %v475 = vpack.c.b16 %v445, %v442
  %v476 = vpack.c.b16 %v449, %v446
  %v477 = vpack.c.b16 %v450, %v447
  %v478 = vpack.c.b16 %v451, %v448
  %v479 = vpack.c.b16 %v455, %v452
  %v480 = vpack.c.b16 %v456, %v453
  %v481 = vpack.c.b16 %v457, %v454
  %506 = vmatprep.subr.bf16.mxu0 %v480
  %507 = vmatpush1.bf16.msra.mxu0 %v479
  %508 = vmatprep.subr.bf16.mxu0 %v477
  %509 = vmatpush1.bf16.msra.mxu0 %v476
  %510 = vmatprep.subr.bf16.mxu0 %v474
  %511 = vmatpush1.bf16.msra.mxu0 %v473
  %512 = vmatprep.subr.bf16.mxu0 %v471
  %513 = vmatpush1.bf16.msra.mxu0 %v470
  %514 = vmatprep.subr.bf16.mxu0 %v468
  %515 = vmatpush1.bf16.msra.mxu0 %v467
  %516 = vmatprep.subr.bf16.mxu0 %v465
  %517 = vmatpush1.bf16.msra.mxu0 %v464
  %518 = vmatprep.subr.bf16.mxu0 %v462
  %519 = vmatpush1.bf16.msra.mxu0 %v461
  %520 = vmatprep.subr.bf16.mxu0 %v459
  %521 = vmatpush1.bf16.msra.mxu0 %v458
  %522 = vmatprep.subr.bf16.mxu0 0
  %523 = vmatpush2.bf16.msra.mxu0 0
  %524 = vmatprep.subr.bf16.mxu0 0
  %525 = vmatpush2.bf16.msra.mxu0 0
  %526 = vmatprep.subr.bf16.mxu0 0
  %527 = vmatpush2.bf16.msra.mxu0 0
  %528 = vmatprep.subr.bf16.mxu0 0
  %529 = vmatpush2.bf16.msra.mxu0 0
  %530 = vmatprep.subr.bf16.mxu0 0
  %531 = vmatpush2.bf16.msra.mxu0 0
  %532 = vmatprep.subr.bf16.mxu0 0
  %533 = vmatpush2.bf16.msra.mxu0 0
  %534 = vmatprep.subr.bf16.mxu0 0
  %535 = vmatpush2.bf16.msra.mxu0 0
  %536 = vmatprep.subr.bf16.mxu0 0
  %537 = vmatpush2.bf16.msra.mxu0 0
  %538 = vmatprep.mubr.bf16.mxu0 0
  %539 = vmatmul.mubr.bf16.gmra.mxu0 %v321
  %v540 = vpop.f32.mrf.mxu0
  %v541 = vadd.f32 %v366, %v540
  %v542 = vpop.f32.mrf.mxu0
  %v543 = vadd.f32 %v370, %v542
  %v544 = vpop.f32.mrf.mxu0
  %v545 = vadd.f32 %v366, %v544
  %v546 = vpop.f32.mrf.mxu0
  %v547 = vadd.f32 %v370, %v546
  %548 = vmatprep.mubr.bf16.mxu0 0
  %549 = vmatmul.mubr.bf16.gmra.mxu0 %v322
  %v550 = vpop.f32.mrf.mxu0
  %v551 = vadd.f32 %v366, %v550
  %v552 = vpop.f32.mrf.mxu0
  %v553 = vadd.f32 %v370, %v552
  %v554 = vpop.f32.mrf.mxu0
  %v555 = vadd.f32 %v366, %v554
  %v556 = vpop.f32.mrf.mxu0
  %v557 = vadd.f32 %v370, %v556
  %558 = vmatprep.mubr.bf16.mxu0 0
  %559 = vmatmul.mubr.bf16.gmra.mxu0 %v323
  %v560 = vpop.f32.mrf.mxu0
  %v561 = vadd.f32 %v366, %v560
  %v562 = vpop.f32.mrf.mxu0
  %v563 = vadd.f32 %v370, %v562
  %v564 = vpop.f32.mrf.mxu0
  %v565 = vadd.f32 %v366, %v564
  %v566 = vpop.f32.mrf.mxu0
  %v567 = vadd.f32 %v370, %v566
  %568 = vmatprep.mubr.bf16.mxu0 0
  %569 = vmatmul.mubr.bf16.gmra.mxu0 %v324
  %v570 = vpop.f32.mrf.mxu0
  %v571 = vadd.f32 %v366, %v570
  %v572 = vpop.f32.mrf.mxu0
  %v573 = vadd.f32 %v370, %v572
  %v574 = vpop.f32.mrf.mxu0
  %v575 = vadd.f32 %v366, %v574
  %v576 = vpop.f32.mrf.mxu0
  %v577 = vadd.f32 %v370, %v576
  %578 = vmatprep.mubr.bf16.mxu0 0
  %579 = vmatmul.mubr.bf16.gmra.mxu0 %v325
  %v580 = vpop.f32.mrf.mxu0
  %v581 = vadd.f32 %v366, %v580
  %v582 = vpop.f32.mrf.mxu0
  %v583 = vadd.f32 %v370, %v582
  %v584 = vpop.f32.mrf.mxu0
  %v585 = vadd.f32 %v366, %v584
  %v586 = vpop.f32.mrf.mxu0
  %v587 = vadd.f32 %v370, %v586
  %588 = vmatprep.mubr.bf16.mxu0 0
  %589 = vmatmul.mubr.bf16.gmra.mxu0 %v326
  %v590 = vpop.f32.mrf.mxu0
  %v591 = vadd.f32 %v366, %v590
  %v592 = vpop.f32.mrf.mxu0
  %v593 = vadd.f32 %v370, %v592
  %v594 = vpop.f32.mrf.mxu0
  %v595 = vadd.f32 %v366, %v594
  %v596 = vpop.f32.mrf.mxu0
  %v597 = vadd.f32 %v370, %v596
  %598 = vmatprep.mubr.bf16.mxu0 0
  %599 = vmatmul.mubr.bf16.gmra.mxu0 %v327
  %v600 = vpop.f32.mrf.mxu0
  %v601 = vadd.f32 %v366, %v600
  %v602 = vpop.f32.mrf.mxu0
  %v603 = vadd.f32 %v370, %v602
  %v604 = vpop.f32.mrf.mxu0
  %v605 = vadd.f32 %v366, %v604
  %v606 = vpop.f32.mrf.mxu0
  %v607 = vadd.f32 %v370, %v606
  %608 = vmatprep.mubr.bf16.mxu0 0
  %609 = vmatmul.mubr.bf16.gmra.mxu0 %v328
  %v610 = vpop.f32.mrf.mxu0
  %v611 = vadd.f32 %v366, %v610
  %v612 = vpop.f32.mrf.mxu0
  %v613 = vadd.f32 %v370, %v612
  %v614 = vpop.f32.mrf.mxu0
  %v615 = vadd.f32 %v366, %v614
  %v616 = vpop.f32.mrf.mxu0
  %v617 = vadd.f32 %v370, %v616
  %618 = vdwg.mxu0
  %619 = vmatprep.subr.bf16.mxu0 0
  %620 = vmatpush1.bf16.msra.mxu0 %v481
  %621 = vmatprep.subr.bf16.mxu0 0
  %622 = vmatpush1.bf16.msra.mxu0 %v478
  %623 = vmatprep.subr.bf16.mxu0 0
  %624 = vmatpush1.bf16.msra.mxu0 %v475
  %625 = vmatprep.subr.bf16.mxu0 0
  %626 = vmatpush1.bf16.msra.mxu0 %v472
  %627 = vmatprep.subr.bf16.mxu0 0
  %628 = vmatpush1.bf16.msra.mxu0 %v469
  %629 = vmatprep.subr.bf16.mxu0 0
  %630 = vmatpush1.bf16.msra.mxu0 %v466
  %631 = vmatprep.subr.bf16.mxu0 0
  %632 = vmatpush1.bf16.msra.mxu0 %v463
  %633 = vmatprep.subr.bf16.mxu0 0
  %634 = vmatpush1.bf16.msra.mxu0 %v460
  %635 = vmatprep.subr.bf16.mxu0 0
  %636 = vmatpush2.bf16.msra.mxu0 0
  %637 = vmatprep.subr.bf16.mxu0 0
  %638 = vmatpush2.bf16.msra.mxu0 0
  %639 = vmatprep.subr.bf16.mxu0 0
  %640 = vmatpush2.bf16.msra.mxu0 0
  %641 = vmatprep.subr.bf16.mxu0 0
  %642 = vmatpush2.bf16.msra.mxu0 0
  %643 = vmatprep.subr.bf16.mxu0 0
  %644 = vmatpush2.bf16.msra.mxu0 0
  %645 = vmatprep.subr.bf16.mxu0 0
  %646 = vmatpush2.bf16.msra.mxu0 0
  %647 = vmatprep.subr.bf16.mxu0 0
  %648 = vmatpush2.bf16.msra.mxu0 0
  %649 = vmatprep.subr.bf16.mxu0 0
  %650 = vmatpush2.bf16.msra.mxu0 0
  %651 = vmatprep.mubr.bf16.mxu0 0
  %652 = vmatmul.mubr.bf16.gmra.mxu0 %v321
  %v653 = vpop.f32.mrf.mxu0
  %v654 = vadd.f32 %v374, %v653
  %v655 = vpop.f32.mrf.mxu0
  %v656 = vpop.f32.mrf.mxu0
  %v657 = vadd.f32 %v374, %v656
  %v658 = vpop.f32.mrf.mxu0
  %659 = vmatprep.mubr.bf16.mxu0 0
  %660 = vmatmul.mubr.bf16.gmra.mxu0 %v322
  %v661 = vpop.f32.mrf.mxu0
  %v662 = vadd.f32 %v374, %v661
  %v663 = vpop.f32.mrf.mxu0
  %v664 = vpop.f32.mrf.mxu0
  %v665 = vadd.f32 %v374, %v664
  %v666 = vpop.f32.mrf.mxu0
  %667 = vmatprep.mubr.bf16.mxu0 0
  %668 = vmatmul.mubr.bf16.gmra.mxu0 %v323
  %v669 = vpop.f32.mrf.mxu0
  %v670 = vadd.f32 %v374, %v669
  %v671 = vpop.f32.mrf.mxu0
  %v672 = vpop.f32.mrf.mxu0
  %v673 = vadd.f32 %v374, %v672
  %v674 = vpop.f32.mrf.mxu0
  %675 = vmatprep.mubr.bf16.mxu0 0
  %676 = vmatmul.mubr.bf16.gmra.mxu0 %v324
  %v677 = vpop.f32.mrf.mxu0
  %v678 = vadd.f32 %v374, %v677
  %v679 = vpop.f32.mrf.mxu0
  %v680 = vpop.f32.mrf.mxu0
  %v681 = vadd.f32 %v374, %v680
  %v682 = vpop.f32.mrf.mxu0
  %683 = vmatprep.mubr.bf16.mxu0 0
  %684 = vmatmul.mubr.bf16.gmra.mxu0 %v325
  %v685 = vpop.f32.mrf.mxu0
  %v686 = vadd.f32 %v374, %v685
  %v687 = vpop.f32.mrf.mxu0
  %v688 = vpop.f32.mrf.mxu0
  %v689 = vadd.f32 %v374, %v688
  %v690 = vpop.f32.mrf.mxu0
  %691 = vmatprep.mubr.bf16.mxu0 0
  %692 = vmatmul.mubr.bf16.gmra.mxu0 %v326
  %v693 = vpop.f32.mrf.mxu0
  %v694 = vadd.f32 %v374, %v693
  %v695 = vpop.f32.mrf.mxu0
  %v696 = vpop.f32.mrf.mxu0
  %v697 = vadd.f32 %v374, %v696
  %v698 = vpop.f32.mrf.mxu0
  %699 = vmatprep.mubr.bf16.mxu0 0
  %700 = vmatmul.mubr.bf16.gmra.mxu0 %v327
  %v701 = vpop.f32.mrf.mxu0
  %v702 = vadd.f32 %v374, %v701
  %v703 = vpop.f32.mrf.mxu0
  %v704 = vpop.f32.mrf.mxu0
  %v705 = vadd.f32 %v374, %v704
  %v706 = vpop.f32.mrf.mxu0
  %707 = vmatprep.mubr.bf16.mxu0 0
  %708 = vmatmul.mubr.bf16.gmra.mxu0 %v328
  %v709 = vpop.f32.mrf.mxu0
  %v710 = vadd.f32 %v374, %v709
  %v711 = vpop.f32.mrf.mxu0
  %v712 = vpop.f32.mrf.mxu0
  %v713 = vadd.f32 %v374, %v712
  %v714 = vpop.f32.mrf.mxu0
  %715 = vdwg.mxu0
  %v716 = vpack.c.bf16 %v545, %v541
  %v717 = vpack.c.bf16 %v555, %v551
  %v718 = vpack.c.bf16 %v565, %v561
  %v719 = vpack.c.bf16 %v575, %v571
  %v720 = vpack.c.bf16 %v585, %v581
  %v721 = vpack.c.bf16 %v595, %v591
  %v722 = vpack.c.bf16 %v605, %v601
  %v723 = vpack.c.bf16 %v615, %v611
  %v724 = vpack.c.bf16 %v547, %v543
  %v725 = vpack.c.bf16 %v557, %v553
  %v726 = vpack.c.bf16 %v567, %v563
  %v727 = vpack.c.bf16 %v577, %v573
  %v728 = vpack.c.bf16 %v587, %v583
  %v729 = vpack.c.bf16 %v597, %v593
  %v730 = vpack.c.bf16 %v607, %v603
  %v731 = vpack.c.bf16 %v617, %v613
  %v732 = vpack.c.bf16 %v657, %v654
  %v733 = vpack.c.bf16 %v665, %v662
  %v734 = vpack.c.bf16 %v673, %v670
  %v735 = vpack.c.bf16 %v681, %v678
  %v736 = vpack.c.bf16 %v689, %v686
  %v737 = vpack.c.bf16 %v697, %v694
  %v738 = vpack.c.bf16 %v705, %v702
  %v739 = vpack.c.bf16 %v713, %v710
  %vm740 = vcmask 523264
  %v742 = vsel %vm740, %v716, 0
  %v745 = vsel %vm740, %v717, 0
  %v748 = vsel %vm740, %v718, 0
  %v751 = vsel %vm740, %v719, 0
  %v754 = vsel %vm740, %v720, 0
  %v757 = vsel %vm740, %v721, 0
  %v760 = vsel %vm740, %v722, 0
  %v763 = vsel %vm740, %v723, 0
  %v766 = vsel %vm740, %v724, 0
  %v769 = vsel %vm740, %v725, 0
  %v772 = vsel %vm740, %v726, 0
  %v775 = vsel %vm740, %v727, 0
  %v778 = vsel %vm740, %v728, 0
  %v781 = vsel %vm740, %v729, 0
  %v784 = vsel %vm740, %v730, 0
  %v787 = vsel %vm740, %v731, 0
  %789 = vmatprep.subr.bf16.mxu0 0
  %790 = vmatpush1.bf16.xpose.msra.mxu0 %v787
  %791 = vmatprep.subr.bf16.mxu0 0
  %792 = vmatpush1.bf16.xpose.msra.mxu0 %v784
  %793 = vmatprep.subr.bf16.mxu0 0
  %794 = vmatpush1.bf16.xpose.msra.mxu0 %v781
  %795 = vmatprep.subr.bf16.mxu0 0
  %796 = vmatpush1.bf16.xpose.msra.mxu0 %v778
  %797 = vmatprep.subr.bf16.mxu0 0
  %798 = vmatpush1.bf16.xpose.msra.mxu0 %v775
  %799 = vmatprep.subr.bf16.mxu0 0
  %800 = vmatpush1.bf16.xpose.msra.mxu0 %v772
  %801 = vmatprep.subr.bf16.mxu0 0
  %802 = vmatpush1.bf16.xpose.msra.mxu0 %v769
  %803 = vmatprep.subr.bf16.mxu0 0
  %804 = vmatpush1.bf16.xpose.msra.mxu0 %v766
  %805 = vmatprep.subr.bf16.mxu0 0
  %806 = vmatpush2.bf16.xpose.msra.mxu0 0
  %807 = vmatprep.subr.bf16.mxu0 0
  %808 = vmatpush2.bf16.xpose.msra.mxu0 0
  %809 = vmatprep.subr.bf16.mxu0 0
  %810 = vmatpush2.bf16.xpose.msra.mxu0 0
  %811 = vmatprep.subr.bf16.mxu0 0
  %812 = vmatpush2.bf16.xpose.msra.mxu0 0
  %813 = vmatprep.subr.bf16.mxu0 0
  %814 = vmatpush2.bf16.xpose.msra.mxu0 0
  %815 = vmatprep.subr.bf16.mxu0 0
  %816 = vmatpush2.bf16.xpose.msra.mxu0 0
  %817 = vmatprep.subr.bf16.mxu0 0
  %818 = vmatpush2.bf16.xpose.msra.mxu0 0
  %819 = vmatprep.subr.bf16.mxu0 0
  %820 = vmatpush2.bf16.xpose.msra.mxu0 0
  %821 = vmatprep.mubr.bf16.mxu0 0
  %822 = vmatmul.mubr.bf16.gmra.mxu0 %v742
  %v823 = vpop.f32.mrf.mxu0
  %v824 = vadd.f32 %v305, %v823
  %v825 = vpop.f32.mrf.mxu0
  %v826 = vpop.f32.mrf.mxu0
  %v827 = vadd.f32 %v306, %v826
  %v828 = vpop.f32.mrf.mxu0
  %829 = vmatprep.mubr.bf16.mxu0 0
  %830 = vmatmul.mubr.bf16.gmra.mxu0 %v745
  %v831 = vpop.f32.mrf.mxu0
  %v832 = vadd.f32 %v307, %v831
  %v833 = vpop.f32.mrf.mxu0
  %v834 = vpop.f32.mrf.mxu0
  %v835 = vadd.f32 %v308, %v834
  %v836 = vpop.f32.mrf.mxu0
  %837 = vmatprep.mubr.bf16.mxu0 0
  %838 = vmatmul.mubr.bf16.gmra.mxu0 %v748
  %v839 = vpop.f32.mrf.mxu0
  %v840 = vadd.f32 %v309, %v839
  %v841 = vpop.f32.mrf.mxu0
  %v842 = vpop.f32.mrf.mxu0
  %v843 = vadd.f32 %v310, %v842
  %v844 = vpop.f32.mrf.mxu0
  %845 = vmatprep.mubr.bf16.mxu0 0
  %846 = vmatmul.mubr.bf16.gmra.mxu0 %v751
  %v847 = vpop.f32.mrf.mxu0
  %v848 = vadd.f32 %v311, %v847
  %v849 = vpop.f32.mrf.mxu0
  %v850 = vpop.f32.mrf.mxu0
  %v851 = vadd.f32 %v312, %v850
  %v852 = vpop.f32.mrf.mxu0
  %853 = vmatprep.mubr.bf16.mxu0 0
  %854 = vmatmul.mubr.bf16.gmra.mxu0 %v754
  %v855 = vpop.f32.mrf.mxu0
  %v856 = vadd.f32 %v313, %v855
  %v857 = vpop.f32.mrf.mxu0
  %v858 = vpop.f32.mrf.mxu0
  %v859 = vadd.f32 %v314, %v858
  %v860 = vpop.f32.mrf.mxu0
  %861 = vmatprep.mubr.bf16.mxu0 0
  %862 = vmatmul.mubr.bf16.gmra.mxu0 %v757
  %v863 = vpop.f32.mrf.mxu0
  %v864 = vadd.f32 %v315, %v863
  %v865 = vpop.f32.mrf.mxu0
  %v866 = vpop.f32.mrf.mxu0
  %v867 = vadd.f32 %v316, %v866
  %v868 = vpop.f32.mrf.mxu0
  %869 = vmatprep.mubr.bf16.mxu0 0
  %870 = vmatmul.mubr.bf16.gmra.mxu0 %v760
  %v871 = vpop.f32.mrf.mxu0
  %v872 = vadd.f32 %v317, %v871
  %v873 = vpop.f32.mrf.mxu0
  %v874 = vpop.f32.mrf.mxu0
  %v875 = vadd.f32 %v318, %v874
  %v876 = vpop.f32.mrf.mxu0
  %877 = vmatprep.mubr.bf16.mxu0 0
  %878 = vmatmul.mubr.bf16.gmra.mxu0 %v763
  %v879 = vpop.f32.mrf.mxu0
  %v880 = vadd.f32 %v319, %v879
  %v881 = vpop.f32.mrf.mxu0
  %v882 = vpop.f32.mrf.mxu0
  %v883 = vadd.f32 %v320, %v882
  %v884 = vpop.f32.mrf.mxu0
  %885 = vdwg.mxu0
  %886 = vmax.xlane.f32.xlu0 %v824
  %v887 = vpop.xlane.xlu0 %886
  %888 = vmax.xlane.f32.xlu0 %v827
  %v889 = vpop.xlane.xlu0 %888
  %890 = vmax.xlane.f32.xlu0 %v832
  %v891 = vpop.xlane.xlu0 %890
  %892 = vmax.xlane.f32.xlu0 %v835
  %v893 = vpop.xlane.xlu0 %892
  %894 = vmax.xlane.f32.xlu0 %v840
  %v895 = vpop.xlane.xlu0 %894
  %896 = vmax.xlane.f32.xlu0 %v843
  %v897 = vpop.xlane.xlu0 %896
  %898 = vmax.xlane.f32.xlu0 %v848
  %v899 = vpop.xlane.xlu0 %898
  %900 = vmax.xlane.f32.xlu0 %v851
  %v901 = vpop.xlane.xlu0 %900
  %902 = vmax.xlane.f32.xlu0 %v856
  %v903 = vpop.xlane.xlu0 %902
  %904 = vmax.xlane.f32.xlu0 %v859
  %v905 = vpop.xlane.xlu0 %904
  %906 = vmax.xlane.f32.xlu0 %v864
  %v907 = vpop.xlane.xlu0 %906
  %908 = vmax.xlane.f32.xlu0 %v867
  %v909 = vpop.xlane.xlu0 %908
  %910 = vmax.xlane.f32.xlu0 %v872
  %v911 = vpop.xlane.xlu0 %910
  %912 = vmax.xlane.f32.xlu0 %v875
  %v913 = vpop.xlane.xlu0 %912
  %914 = vmax.xlane.f32.xlu0 %v880
  %v915 = vpop.xlane.xlu0 %914
  %916 = vmax.xlane.f32.xlu0 %v883
  %v917 = vpop.xlane.xlu0 %916
  %v918 = vsub.f32 %v824, %v887
  %v919 = vsub.f32 %v827, %v889
  %v920 = vsub.f32 %v832, %v891
  %v921 = vsub.f32 %v835, %v893
  %v922 = vsub.f32 %v840, %v895
  %v923 = vsub.f32 %v843, %v897
  %v924 = vsub.f32 %v848, %v899
  %v925 = vsub.f32 %v851, %v901
  %v926 = vsub.f32 %v856, %v903
  %v927 = vsub.f32 %v859, %v905
  %v928 = vsub.f32 %v864, %v907
  %v929 = vsub.f32 %v867, %v909
  %v930 = vsub.f32 %v872, %v911
  %v931 = vsub.f32 %v875, %v913
  %v932 = vsub.f32 %v880, %v915
  %v933 = vsub.f32 %v883, %v917
  %v934 = vmul.f32 %v918, 1.442695
  %v935 = vpow.pop %v934
  %v936 = vmul.f32 %v919, 1.442695
  %v937 = vpow.pop %v936
  %v938 = vmul.f32 %v920, 1.442695
  %v939 = vpow.pop %v938
  %v940 = vmul.f32 %v921, 1.442695
  %v941 = vpow.pop %v940
  %v942 = vmul.f32 %v922, 1.442695
  %v943 = vpow.pop %v942
  %v944 = vmul.f32 %v923, 1.442695
  %v945 = vpow.pop %v944
  %v946 = vmul.f32 %v924, 1.442695
  %v947 = vpow.pop %v946
  %v948 = vmul.f32 %v925, 1.442695
  %v949 = vpow.pop %v948
  %v950 = vmul.f32 %v926, 1.442695
  %v951 = vpow.pop %v950
  %v952 = vmul.f32 %v927, 1.442695
  %v953 = vpow.pop %v952
  %v954 = vmul.f32 %v928, 1.442695
  %v955 = vpow.pop %v954
  %v956 = vmul.f32 %v929, 1.442695
  %v957 = vpow.pop %v956
  %v958 = vmul.f32 %v930, 1.442695
  %v959 = vpow.pop %v958
  %v960 = vmul.f32 %v931, 1.442695
  %v961 = vpow.pop %v960
  %v962 = vmul.f32 %v932, 1.442695
  %v963 = vpow.pop %v962
  %v964 = vmul.f32 %v933, 1.442695
  %v965 = vpow.pop %v964
  %966 = vadd.xlane.f32.xlu0 %v935
  %v967 = vpop.xlane.xlu0 %966
  %968 = vadd.xlane.f32.xlu0 %v937
  %v969 = vpop.xlane.xlu0 %968
  %970 = vadd.xlane.f32.xlu0 %v939
  %v971 = vpop.xlane.xlu0 %970
  %972 = vadd.xlane.f32.xlu0 %v941
  %v973 = vpop.xlane.xlu0 %972
  %974 = vadd.xlane.f32.xlu0 %v943
  %v975 = vpop.xlane.xlu0 %974
  %976 = vadd.xlane.f32.xlu0 %v945
  %v977 = vpop.xlane.xlu0 %976
  %978 = vadd.xlane.f32.xlu0 %v947
  %v979 = vpop.xlane.xlu0 %978
  %980 = vadd.xlane.f32.xlu0 %v949
  %v981 = vpop.xlane.xlu0 %980
  %982 = vadd.xlane.f32.xlu0 %v951
  %v983 = vpop.xlane.xlu0 %982
  %984 = vadd.xlane.f32.xlu0 %v953
  %v985 = vpop.xlane.xlu0 %984
  %986 = vadd.xlane.f32.xlu0 %v955
  %v987 = vpop.xlane.xlu0 %986
  %988 = vadd.xlane.f32.xlu0 %v957
  %v989 = vpop.xlane.xlu0 %988
  %990 = vadd.xlane.f32.xlu0 %v959
  %v991 = vpop.xlane.xlu0 %990
  %992 = vadd.xlane.f32.xlu0 %v961
  %v993 = vpop.xlane.xlu0 %992
  %994 = vadd.xlane.f32.xlu0 %v963
  %v995 = vpop.xlane.xlu0 %994
  %996 = vadd.xlane.f32.xlu0 %v965
  %v997 = vpop.xlane.xlu0 %996
  %v998 = vrcp.pop %v967
  %v999 = vrcp.pop %v969
  %v1000 = vrcp.pop %v971
  %v1001 = vrcp.pop %v973
  %v1002 = vrcp.pop %v975
  %v1003 = vrcp.pop %v977
  %v1004 = vrcp.pop %v979
  %v1005 = vrcp.pop %v981
  %v1006 = vrcp.pop %v983
  %v1007 = vrcp.pop %v985
  %v1008 = vrcp.pop %v987
  %v1009 = vrcp.pop %v989
  %v1010 = vrcp.pop %v991
  %v1011 = vrcp.pop %v993
  %v1012 = vrcp.pop %v995
  %v1013 = vrcp.pop %v997
  %v1014 = vmul.f32 %v935, %v998
  %v1015 = vmul.f32 %v937, %v999
  %v1016 = vmul.f32 %v939, %v1000
  %v1017 = vmul.f32 %v941, %v1001
  %v1018 = vmul.f32 %v943, %v1002
  %v1019 = vmul.f32 %v945, %v1003
  %v1020 = vmul.f32 %v947, %v1004
  %v1021 = vmul.f32 %v949, %v1005
  %v1022 = vmul.f32 %v951, %v1006
  %v1023 = vmul.f32 %v953, %v1007
  %v1024 = vmul.f32 %v955, %v1008
  %v1025 = vmul.f32 %v957, %v1009
  %v1026 = vmul.f32 %v959, %v1010
  %v1027 = vmul.f32 %v961, %v1011
  %v1028 = vmul.f32 %v963, %v1012
  %v1029 = vmul.f32 %v965, %v1013
  %v1030 = vpack.c.bf16 %v1015, %v1014
  %v1031 = vpack.c.bf16 %v1017, %v1016
  %v1032 = vpack.c.bf16 %v1019, %v1018
  %v1033 = vpack.c.bf16 %v1021, %v1020
  %v1034 = vpack.c.bf16 %v1023, %v1022
  %v1035 = vpack.c.bf16 %v1025, %v1024
  %v1036 = vpack.c.bf16 %v1027, %v1026
  %v1037 = vpack.c.bf16 %v1029, %v1028
  %1038 = vmatprep.subr.bf16.mxu0 0
  %1039 = vmatpush1.bf16.msra.mxu0 %v739
  %1040 = vmatprep.subr.bf16.mxu0 0
  %1041 = vmatpush1.bf16.msra.mxu0 %v738
  %1042 = vmatprep.subr.bf16.mxu0 0
  %1043 = vmatpush1.bf16.msra.mxu0 %v737
  %1044 = vmatprep.subr.bf16.mxu0 0
  %1045 = vmatpush1.bf16.msra.mxu0 %v736
  %1046 = vmatprep.subr.bf16.mxu0 0
  %1047 = vmatpush1.bf16.msra.mxu0 %v735
  %1048 = vmatprep.subr.bf16.mxu0 0
  %1049 = vmatpush1.bf16.msra.mxu0 %v734
  %1050 = vmatprep.subr.bf16.mxu0 0
  %1051 = vmatpush1.bf16.msra.mxu0 %v733
  %1052 = vmatprep.subr.bf16.mxu0 0
  %1053 = vmatpush1.bf16.msra.mxu0 %v732
  %1054 = vmatprep.subr.bf16.mxu0 0
  %1055 = vmatpush2.bf16.msra.mxu0 0
  %1056 = vmatprep.subr.bf16.mxu0 0
  %1057 = vmatpush2.bf16.msra.mxu0 0
  %1058 = vmatprep.subr.bf16.mxu0 0
  %1059 = vmatpush2.bf16.msra.mxu0 0
  %1060 = vmatprep.subr.bf16.mxu0 0
  %1061 = vmatpush2.bf16.msra.mxu0 0
  %1062 = vmatprep.subr.bf16.mxu0 0
  %1063 = vmatpush2.bf16.msra.mxu0 0
  %1064 = vmatprep.subr.bf16.mxu0 0
  %1065 = vmatpush2.bf16.msra.mxu0 0
  %1066 = vmatprep.subr.bf16.mxu0 0
  %1067 = vmatpush2.bf16.msra.mxu0 0
  %1068 = vmatprep.subr.bf16.mxu0 0
  %1069 = vmatpush2.bf16.msra.mxu0 0
  %1070 = vmatprep.mubr.bf16.mxu0 0
  %1071 = vmatmul.mubr.bf16.gmra.mxu0 %v1030
  %v1072 = vpop.f32.mrf.mxu0
  %v1073 = vadd.f32 0.0, %v1072
  %v1074 = vpop.f32.mrf.mxu0
  %v1075 = vpop.f32.mrf.mxu0
  %v1076 = vadd.f32 0.0, %v1075
  %v1077 = vpop.f32.mrf.mxu0
  %1078 = vmatprep.mubr.bf16.mxu0 0
  %1079 = vmatmul.mubr.bf16.gmra.mxu0 %v1031
  %v1080 = vpop.f32.mrf.mxu0
  %v1081 = vadd.f32 0.0, %v1080
  %v1082 = vpop.f32.mrf.mxu0
  %v1083 = vpop.f32.mrf.mxu0
  %v1084 = vadd.f32 0.0, %v1083
  %v1085 = vpop.f32.mrf.mxu0
  %1086 = vmatprep.mubr.bf16.mxu0 0
  %1087 = vmatmul.mubr.bf16.gmra.mxu0 %v1032
  %v1088 = vpop.f32.mrf.mxu0
  %v1089 = vadd.f32 0.0, %v1088
  %v1090 = vpop.f32.mrf.mxu0
  %v1091 = vpop.f32.mrf.mxu0
  %v1092 = vadd.f32 0.0, %v1091
  %v1093 = vpop.f32.mrf.mxu0
  %1094 = vmatprep.mubr.bf16.mxu0 0
  %1095 = vmatmul.mubr.bf16.gmra.mxu0 %v1033
  %v1096 = vpop.f32.mrf.mxu0
  %v1097 = vadd.f32 0.0, %v1096
  %v1098 = vpop.f32.mrf.mxu0
  %v1099 = vpop.f32.mrf.mxu0
  %v1100 = vadd.f32 0.0, %v1099
  %v1101 = vpop.f32.mrf.mxu0
  %1102 = vmatprep.mubr.bf16.mxu0 0
  %1103 = vmatmul.mubr.bf16.gmra.mxu0 %v1034
  %v1104 = vpop.f32.mrf.mxu0
  %v1105 = vadd.f32 0.0, %v1104
  %v1106 = vpop.f32.mrf.mxu0
  %v1107 = vpop.f32.mrf.mxu0
  %v1108 = vadd.f32 0.0, %v1107
  %v1109 = vpop.f32.mrf.mxu0
  %1110 = vmatprep.mubr.bf16.mxu0 0
  %1111 = vmatmul.mubr.bf16.gmra.mxu0 %v1035
  %v1112 = vpop.f32.mrf.mxu0
  %v1113 = vadd.f32 0.0, %v1112
  %v1114 = vpop.f32.mrf.mxu0
  %v1115 = vpop.f32.mrf.mxu0
  %v1116 = vadd.f32 0.0, %v1115
  %v1117 = vpop.f32.mrf.mxu0
  %1118 = vmatprep.mubr.bf16.mxu0 0
  %1119 = vmatmul.mubr.bf16.gmra.mxu0 %v1036
  %v1120 = vpop.f32.mrf.mxu0
  %v1121 = vadd.f32 0.0, %v1120
  %v1122 = vpop.f32.mrf.mxu0
  %v1123 = vpop.f32.mrf.mxu0
  %v1124 = vadd.f32 0.0, %v1123
  %v1125 = vpop.f32.mrf.mxu0
  %1126 = vmatprep.mubr.bf16.mxu0 0
  %1127 = vmatmul.mubr.bf16.gmra.mxu0 %v1037
  %v1128 = vpop.f32.mrf.mxu0
  %v1129 = vadd.f32 0.0, %v1128
  %v1130 = vpop.f32.mrf.mxu0
  %v1131 = vpop.f32.mrf.mxu0
  %v1132 = vadd.f32 0.0, %v1131
  %v1133 = vpop.f32.mrf.mxu0
  %1134 = vdwg.mxu0
  %1143 = vrot.lane.b32.xlu0 %v716, 64
  %v1144 = vpop.permute.xlu0 %1143
  %1145 = vrot.lane.b32.xlu0 %v717, 64
  %v1146 = vpop.permute.xlu0 %1145
  %1147 = vrot.lane.b32.xlu0 %v718, 64
  %v1148 = vpop.permute.xlu0 %1147
  %1149 = vrot.lane.b32.xlu0 %v719, 64
  %v1150 = vpop.permute.xlu0 %1149
  %1151 = vrot.lane.b32.xlu0 %v720, 64
  %v1152 = vpop.permute.xlu0 %1151
  %1153 = vrot.lane.b32.xlu0 %v721, 64
  %v1154 = vpop.permute.xlu0 %1153
  %1155 = vrot.lane.b32.xlu0 %v722, 64
  %v1156 = vpop.permute.xlu0 %1155
  %1157 = vrot.lane.b32.xlu0 %v723, 64
  %v1158 = vpop.permute.xlu0 %1157
  %1167 = vrot.lane.b32.xlu0 %v724, 64
  %v1168 = vpop.permute.xlu0 %1167
  %1169 = vrot.lane.b32.xlu0 %v725, 64
  %v1170 = vpop.permute.xlu0 %1169
  %1171 = vrot.lane.b32.xlu0 %v726, 64
  %v1172 = vpop.permute.xlu0 %1171
  %1173 = vrot.lane.b32.xlu0 %v727, 64
  %v1174 = vpop.permute.xlu0 %1173
  %1175 = vrot.lane.b32.xlu0 %v728, 64
  %v1176 = vpop.permute.xlu0 %1175
  %1177 = vrot.lane.b32.xlu0 %v729, 64
  %v1178 = vpop.permute.xlu0 %1177
  %1179 = vrot.lane.b32.xlu0 %v730, 64
  %v1180 = vpop.permute.xlu0 %1179
  %1181 = vrot.lane.b32.xlu0 %v731, 64
  %v1182 = vpop.permute.xlu0 %1181
  %v1184 = vsel %vm740, %v1144, 0
  %v1187 = vsel %vm740, %v1146, 0
  %v1190 = vsel %vm740, %v1148, 0
  %v1193 = vsel %vm740, %v1150, 0
  %v1196 = vsel %vm740, %v1152, 0
  %v1199 = vsel %vm740, %v1154, 0
  %v1202 = vsel %vm740, %v1156, 0
  %v1205 = vsel %vm740, %v1158, 0
  %v1208 = vsel %vm740, %v1168, 0
  %v1211 = vsel %vm740, %v1170, 0
  %v1214 = vsel %vm740, %v1172, 0
  %v1217 = vsel %vm740, %v1174, 0
  %v1220 = vsel %vm740, %v1176, 0
  %v1223 = vsel %vm740, %v1178, 0
  %v1226 = vsel %vm740, %v1180, 0
  %v1229 = vsel %vm740, %v1182, 0
  %1231 = vmatprep.subr.bf16.mxu0 0
  %1232 = vmatpush1.bf16.xpose.msra.mxu0 %v1229
  %1233 = vmatprep.subr.bf16.mxu0 0
  %1234 = vmatpush1.bf16.xpose.msra.mxu0 %v1226
  %1235 = vmatprep.subr.bf16.mxu0 0
  %1236 = vmatpush1.bf16.xpose.msra.mxu0 %v1223
  %1237 = vmatprep.subr.bf16.mxu0 0
  %1238 = vmatpush1.bf16.xpose.msra.mxu0 %v1220
  %1239 = vmatprep.subr.bf16.mxu0 0
  %1240 = vmatpush1.bf16.xpose.msra.mxu0 %v1217
  %1241 = vmatprep.subr.bf16.mxu0 0
  %1242 = vmatpush1.bf16.xpose.msra.mxu0 %v1214
  %1243 = vmatprep.subr.bf16.mxu0 0
  %1244 = vmatpush1.bf16.xpose.msra.mxu0 %v1211
  %1245 = vmatprep.subr.bf16.mxu0 0
  %1246 = vmatpush1.bf16.xpose.msra.mxu0 %v1208
  %1247 = vmatprep.subr.bf16.mxu0 0
  %1248 = vmatpush2.bf16.xpose.msra.mxu0 0
  %1249 = vmatprep.subr.bf16.mxu0 0
  %1250 = vmatpush2.bf16.xpose.msra.mxu0 0
  %1251 = vmatprep.subr.bf16.mxu0 0
  %1252 = vmatpush2.bf16.xpose.msra.mxu0 0
  %1253 = vmatprep.subr.bf16.mxu0 0
  %1254 = vmatpush2.bf16.xpose.msra.mxu0 0
  %1255 = vmatprep.subr.bf16.mxu0 0
  %1256 = vmatpush2.bf16.xpose.msra.mxu0 0
  %1257 = vmatprep.subr.bf16.mxu0 0
  %1258 = vmatpush2.bf16.xpose.msra.mxu0 0
  %1259 = vmatprep.subr.bf16.mxu0 0
  %1260 = vmatpush2.bf16.xpose.msra.mxu0 0
  %1261 = vmatprep.subr.bf16.mxu0 0
  %1262 = vmatpush2.bf16.xpose.msra.mxu0 0
  %1263 = vmatprep.mubr.bf16.mxu0 0
  %1264 = vmatmul.mubr.bf16.gmra.mxu0 %v1184
  %v1265 = vpop.f32.mrf.mxu0
  %v1266 = vadd.f32 %v305, %v1265
  %v1267 = vpop.f32.mrf.mxu0
  %v1268 = vpop.f32.mrf.mxu0
  %v1269 = vadd.f32 %v306, %v1268
  %v1270 = vpop.f32.mrf.mxu0
  %1271 = vmatprep.mubr.bf16.mxu0 0
  %1272 = vmatmul.mubr.bf16.gmra.mxu0 %v1187
  %v1273 = vpop.f32.mrf.mxu0
  %v1274 = vadd.f32 %v307, %v1273
  %v1275 = vpop.f32.mrf.mxu0
  %v1276 = vpop.f32.mrf.mxu0
  %v1277 = vadd.f32 %v308, %v1276
  %v1278 = vpop.f32.mrf.mxu0
  %1279 = vmatprep.mubr.bf16.mxu0 0
  %1280 = vmatmul.mubr.bf16.gmra.mxu0 %v1190
  %v1281 = vpop.f32.mrf.mxu0
  %v1282 = vadd.f32 %v309, %v1281
  %v1283 = vpop.f32.mrf.mxu0
  %v1284 = vpop.f32.mrf.mxu0
  %v1285 = vadd.f32 %v310, %v1284
  %v1286 = vpop.f32.mrf.mxu0
  %1287 = vmatprep.mubr.bf16.mxu0 0
  %1288 = vmatmul.mubr.bf16.gmra.mxu0 %v1193
  %v1289 = vpop.f32.mrf.mxu0
  %v1290 = vadd.f32 %v311, %v1289
  %v1291 = vpop.f32.mrf.mxu0
  %v1292 = vpop.f32.mrf.mxu0
  %v1293 = vadd.f32 %v312, %v1292
  %v1294 = vpop.f32.mrf.mxu0
  %1295 = vmatprep.mubr.bf16.mxu0 0
  %1296 = vmatmul.mubr.bf16.gmra.mxu0 %v1196
  %v1297 = vpop.f32.mrf.mxu0
  %v1298 = vadd.f32 %v313, %v1297
  %v1299 = vpop.f32.mrf.mxu0
  %v1300 = vpop.f32.mrf.mxu0
  %v1301 = vadd.f32 %v314, %v1300
  %v1302 = vpop.f32.mrf.mxu0
  %1303 = vmatprep.mubr.bf16.mxu0 0
  %1304 = vmatmul.mubr.bf16.gmra.mxu0 %v1199
  %v1305 = vpop.f32.mrf.mxu0
  %v1306 = vadd.f32 %v315, %v1305
  %v1307 = vpop.f32.mrf.mxu0
  %v1308 = vpop.f32.mrf.mxu0
  %v1309 = vadd.f32 %v316, %v1308
  %v1310 = vpop.f32.mrf.mxu0
  %1311 = vmatprep.mubr.bf16.mxu0 0
  %1312 = vmatmul.mubr.bf16.gmra.mxu0 %v1202
  %v1313 = vpop.f32.mrf.mxu0
  %v1314 = vadd.f32 %v317, %v1313
  %v1315 = vpop.f32.mrf.mxu0
  %v1316 = vpop.f32.mrf.mxu0
  %v1317 = vadd.f32 %v318, %v1316
  %v1318 = vpop.f32.mrf.mxu0
  %1319 = vmatprep.mubr.bf16.mxu0 0
  %1320 = vmatmul.mubr.bf16.gmra.mxu0 %v1205
  %v1321 = vpop.f32.mrf.mxu0
  %v1322 = vadd.f32 %v319, %v1321
  %v1323 = vpop.f32.mrf.mxu0
  %v1324 = vpop.f32.mrf.mxu0
  %v1325 = vadd.f32 %v320, %v1324
  %v1326 = vpop.f32.mrf.mxu0
  %1327 = vdwg.mxu0
  %1328 = vmax.xlane.f32.xlu0 %v1266
  %v1329 = vpop.xlane.xlu0 %1328
  %1330 = vmax.xlane.f32.xlu0 %v1269
  %v1331 = vpop.xlane.xlu0 %1330
  %1332 = vmax.xlane.f32.xlu0 %v1274
  %v1333 = vpop.xlane.xlu0 %1332
  %1334 = vmax.xlane.f32.xlu0 %v1277
  %v1335 = vpop.xlane.xlu0 %1334
  %1336 = vmax.xlane.f32.xlu0 %v1282
  %v1337 = vpop.xlane.xlu0 %1336
  %1338 = vmax.xlane.f32.xlu0 %v1285
  %v1339 = vpop.xlane.xlu0 %1338
  %1340 = vmax.xlane.f32.xlu0 %v1290
  %v1341 = vpop.xlane.xlu0 %1340
  %1342 = vmax.xlane.f32.xlu0 %v1293
  %v1343 = vpop.xlane.xlu0 %1342
  %1344 = vmax.xlane.f32.xlu0 %v1298
  %v1345 = vpop.xlane.xlu0 %1344
  %1346 = vmax.xlane.f32.xlu0 %v1301
  %v1347 = vpop.xlane.xlu0 %1346
  %1348 = vmax.xlane.f32.xlu0 %v1306
  %v1349 = vpop.xlane.xlu0 %1348
  %1350 = vmax.xlane.f32.xlu0 %v1309
  %v1351 = vpop.xlane.xlu0 %1350
  %1352 = vmax.xlane.f32.xlu0 %v1314
  %v1353 = vpop.xlane.xlu0 %1352
  %1354 = vmax.xlane.f32.xlu0 %v1317
  %v1355 = vpop.xlane.xlu0 %1354
  %1356 = vmax.xlane.f32.xlu0 %v1322
  %v1357 = vpop.xlane.xlu0 %1356
  %1358 = vmax.xlane.f32.xlu0 %v1325
  %v1359 = vpop.xlane.xlu0 %1358
  %v1360 = vsub.f32 %v1266, %v1329
  %v1361 = vsub.f32 %v1269, %v1331
  %v1362 = vsub.f32 %v1274, %v1333
  %v1363 = vsub.f32 %v1277, %v1335
  %v1364 = vsub.f32 %v1282, %v1337
  %v1365 = vsub.f32 %v1285, %v1339
  %v1366 = vsub.f32 %v1290, %v1341
  %v1367 = vsub.f32 %v1293, %v1343
  %v1368 = vsub.f32 %v1298, %v1345
  %v1369 = vsub.f32 %v1301, %v1347
  %v1370 = vsub.f32 %v1306, %v1349
  %v1371 = vsub.f32 %v1309, %v1351
  %v1372 = vsub.f32 %v1314, %v1353
  %v1373 = vsub.f32 %v1317, %v1355
  %v1374 = vsub.f32 %v1322, %v1357
  %v1375 = vsub.f32 %v1325, %v1359
  %v1376 = vmul.f32 %v1360, 1.442695
  %v1377 = vpow.pop %v1376
  %v1378 = vmul.f32 %v1361, 1.442695
  %v1379 = vpow.pop %v1378
  %v1380 = vmul.f32 %v1362, 1.442695
  %v1381 = vpow.pop %v1380
  %v1382 = vmul.f32 %v1363, 1.442695
  %v1383 = vpow.pop %v1382
  %v1384 = vmul.f32 %v1364, 1.442695
  %v1385 = vpow.pop %v1384
  %v1386 = vmul.f32 %v1365, 1.442695
  %v1387 = vpow.pop %v1386
  %v1388 = vmul.f32 %v1366, 1.442695
  %v1389 = vpow.pop %v1388
  %v1390 = vmul.f32 %v1367, 1.442695
  %v1391 = vpow.pop %v1390
  %v1392 = vmul.f32 %v1368, 1.442695
  %v1393 = vpow.pop %v1392
  %v1394 = vmul.f32 %v1369, 1.442695
  %v1395 = vpow.pop %v1394
  %v1396 = vmul.f32 %v1370, 1.442695
  %v1397 = vpow.pop %v1396
  %v1398 = vmul.f32 %v1371, 1.442695
  %v1399 = vpow.pop %v1398
  %v1400 = vmul.f32 %v1372, 1.442695
  %v1401 = vpow.pop %v1400
  %v1402 = vmul.f32 %v1373, 1.442695
  %v1403 = vpow.pop %v1402
  %v1404 = vmul.f32 %v1374, 1.442695
  %v1405 = vpow.pop %v1404
  %v1406 = vmul.f32 %v1375, 1.442695
  %v1407 = vpow.pop %v1406
  %1408 = vadd.xlane.f32.xlu0 %v1377
  %v1409 = vpop.xlane.xlu0 %1408
  %1410 = vadd.xlane.f32.xlu0 %v1379
  %v1411 = vpop.xlane.xlu0 %1410
  %1412 = vadd.xlane.f32.xlu0 %v1381
  %v1413 = vpop.xlane.xlu0 %1412
  %1414 = vadd.xlane.f32.xlu0 %v1383
  %v1415 = vpop.xlane.xlu0 %1414
  %1416 = vadd.xlane.f32.xlu0 %v1385
  %v1417 = vpop.xlane.xlu0 %1416
  %1418 = vadd.xlane.f32.xlu0 %v1387
  %v1419 = vpop.xlane.xlu0 %1418
  %1420 = vadd.xlane.f32.xlu0 %v1389
  %v1421 = vpop.xlane.xlu0 %1420
  %1422 = vadd.xlane.f32.xlu0 %v1391
  %v1423 = vpop.xlane.xlu0 %1422
  %1424 = vadd.xlane.f32.xlu0 %v1393
  %v1425 = vpop.xlane.xlu0 %1424
  %1426 = vadd.xlane.f32.xlu0 %v1395
  %v1427 = vpop.xlane.xlu0 %1426
  %1428 = vadd.xlane.f32.xlu0 %v1397
  %v1429 = vpop.xlane.xlu0 %1428
  %1430 = vadd.xlane.f32.xlu0 %v1399
  %v1431 = vpop.xlane.xlu0 %1430
  %1432 = vadd.xlane.f32.xlu0 %v1401
  %v1433 = vpop.xlane.xlu0 %1432
  %1434 = vadd.xlane.f32.xlu0 %v1403
  %v1435 = vpop.xlane.xlu0 %1434
  %1436 = vadd.xlane.f32.xlu0 %v1405
  %v1437 = vpop.xlane.xlu0 %1436
  %1438 = vadd.xlane.f32.xlu0 %v1407
  %v1439 = vpop.xlane.xlu0 %1438
  %v1440 = vrcp.pop %v1409
  %v1441 = vrcp.pop %v1411
  %v1442 = vrcp.pop %v1413
  %v1443 = vrcp.pop %v1415
  %v1444 = vrcp.pop %v1417
  %v1445 = vrcp.pop %v1419
  %v1446 = vrcp.pop %v1421
  %v1447 = vrcp.pop %v1423
  %v1448 = vrcp.pop %v1425
  %v1449 = vrcp.pop %v1427
  %v1450 = vrcp.pop %v1429
  %v1451 = vrcp.pop %v1431
  %v1452 = vrcp.pop %v1433
  %v1453 = vrcp.pop %v1435
  %v1454 = vrcp.pop %v1437
  %v1455 = vrcp.pop %v1439
  %v1456 = vmul.f32 %v1377, %v1440
  %v1457 = vmul.f32 %v1379, %v1441
  %v1458 = vmul.f32 %v1381, %v1442
  %v1459 = vmul.f32 %v1383, %v1443
  %v1460 = vmul.f32 %v1385, %v1444
  %v1461 = vmul.f32 %v1387, %v1445
  %v1462 = vmul.f32 %v1389, %v1446
  %v1463 = vmul.f32 %v1391, %v1447
  %v1464 = vmul.f32 %v1393, %v1448
  %v1465 = vmul.f32 %v1395, %v1449
  %v1466 = vmul.f32 %v1397, %v1450
  %v1467 = vmul.f32 %v1399, %v1451
  %v1468 = vmul.f32 %v1401, %v1452
  %v1469 = vmul.f32 %v1403, %v1453
  %v1470 = vmul.f32 %v1405, %v1454
  %v1471 = vmul.f32 %v1407, %v1455
  %v1472 = vpack.c.bf16 %v1457, %v1456
  %v1473 = vpack.c.bf16 %v1459, %v1458
  %v1474 = vpack.c.bf16 %v1461, %v1460
  %v1475 = vpack.c.bf16 %v1463, %v1462
  %v1476 = vpack.c.bf16 %v1465, %v1464
  %v1477 = vpack.c.bf16 %v1467, %v1466
  %v1478 = vpack.c.bf16 %v1469, %v1468
  %v1479 = vpack.c.bf16 %v1471, %v1470
  %1488 = vrot.lane.b32.xlu0 %v732, 64
  %v1489 = vpop.permute.xlu0 %1488
  %1490 = vrot.lane.b32.xlu0 %v733, 64
  %v1491 = vpop.permute.xlu0 %1490
  %1492 = vrot.lane.b32.xlu0 %v734, 64
  %v1493 = vpop.permute.xlu0 %1492
  %1494 = vrot.lane.b32.xlu0 %v735, 64
  %v1495 = vpop.permute.xlu0 %1494
  %1496 = vrot.lane.b32.xlu0 %v736, 64
  %v1497 = vpop.permute.xlu0 %1496
  %1498 = vrot.lane.b32.xlu0 %v737, 64
  %v1499 = vpop.permute.xlu0 %1498
  %1500 = vrot.lane.b32.xlu0 %v738, 64
  %v1501 = vpop.permute.xlu0 %1500
  %1502 = vrot.lane.b32.xlu0 %v739, 64
  %v1503 = vpop.permute.xlu0 %1502
  %1512 = vmatprep.subr.bf16.mxu0 0
  %1513 = vmatpush1.bf16.msra.mxu0 %v1503
  %1514 = vmatprep.subr.bf16.mxu0 0
  %1515 = vmatpush1.bf16.msra.mxu0 %v1501
  %1516 = vmatprep.subr.bf16.mxu0 0
  %1517 = vmatpush1.bf16.msra.mxu0 %v1499
  %1518 = vmatprep.subr.bf16.mxu0 0
  %1519 = vmatpush1.bf16.msra.mxu0 %v1497
  %1520 = vmatprep.subr.bf16.mxu0 0
  %1521 = vmatpush1.bf16.msra.mxu0 %v1495
  %1522 = vmatprep.subr.bf16.mxu0 0
  %1523 = vmatpush1.bf16.msra.mxu0 %v1493
  %1524 = vmatprep.subr.bf16.mxu0 0
  %1525 = vmatpush1.bf16.msra.mxu0 %v1491
  %1526 = vmatprep.subr.bf16.mxu0 0
  %1527 = vmatpush1.bf16.msra.mxu0 %v1489
  %1528 = vmatprep.subr.bf16.mxu0 0
  %1529 = vmatpush2.bf16.msra.mxu0 0
  %1530 = vmatprep.subr.bf16.mxu0 0
  %1531 = vmatpush2.bf16.msra.mxu0 0
  %1532 = vmatprep.subr.bf16.mxu0 0
  %1533 = vmatpush2.bf16.msra.mxu0 0
  %1534 = vmatprep.subr.bf16.mxu0 0
  %1535 = vmatpush2.bf16.msra.mxu0 0
  %1536 = vmatprep.subr.bf16.mxu0 0
  %1537 = vmatpush2.bf16.msra.mxu0 0
  %1538 = vmatprep.subr.bf16.mxu0 0
  %1539 = vmatpush2.bf16.msra.mxu0 0
  %1540 = vmatprep.subr.bf16.mxu0 0
  %1541 = vmatpush2.bf16.msra.mxu0 0
  %1542 = vmatprep.subr.bf16.mxu0 0
  %1543 = vmatpush2.bf16.msra.mxu0 0
  %1544 = vmatprep.mubr.bf16.mxu0 0
  %1545 = vmatmul.mubr.bf16.gmra.mxu0 %v1472
  %v1546 = vpop.f32.mrf.mxu0
  %v1547 = vadd.f32 0.0, %v1546
  %v1548 = vpop.f32.mrf.mxu0
  %v1549 = vpop.f32.mrf.mxu0
  %v1550 = vadd.f32 0.0, %v1549
  %v1551 = vpop.f32.mrf.mxu0
  %1552 = vmatprep.mubr.bf16.mxu0 0
  %1553 = vmatmul.mubr.bf16.gmra.mxu0 %v1473
  %v1554 = vpop.f32.mrf.mxu0
  %v1555 = vadd.f32 0.0, %v1554
  %v1556 = vpop.f32.mrf.mxu0
  %v1557 = vpop.f32.mrf.mxu0
  %v1558 = vadd.f32 0.0, %v1557
  %v1559 = vpop.f32.mrf.mxu0
  %1560 = vmatprep.mubr.bf16.mxu0 0
  %1561 = vmatmul.mubr.bf16.gmra.mxu0 %v1474
  %v1562 = vpop.f32.mrf.mxu0
  %v1563 = vadd.f32 0.0, %v1562
  %v1564 = vpop.f32.mrf.mxu0
  %v1565 = vpop.f32.mrf.mxu0
  %v1566 = vadd.f32 0.0, %v1565
  %v1567 = vpop.f32.mrf.mxu0
  %1568 = vmatprep.mubr.bf16.mxu0 0
  %1569 = vmatmul.mubr.bf16.gmra.mxu0 %v1475
  %v1570 = vpop.f32.mrf.mxu0
  %v1571 = vadd.f32 0.0, %v1570
  %v1572 = vpop.f32.mrf.mxu0
  %v1573 = vpop.f32.mrf.mxu0
  %v1574 = vadd.f32 0.0, %v1573
  %v1575 = vpop.f32.mrf.mxu0
  %1576 = vmatprep.mubr.bf16.mxu0 0
  %1577 = vmatmul.mubr.bf16.gmra.mxu0 %v1476
  %v1578 = vpop.f32.mrf.mxu0
  %v1579 = vadd.f32 0.0, %v1578
  %v1580 = vpop.f32.mrf.mxu0
  %v1581 = vpop.f32.mrf.mxu0
  %v1582 = vadd.f32 0.0, %v1581
  %v1583 = vpop.f32.mrf.mxu0
  %1584 = vmatprep.mubr.bf16.mxu0 0
  %1585 = vmatmul.mubr.bf16.gmra.mxu0 %v1477
  %v1586 = vpop.f32.mrf.mxu0
  %v1587 = vadd.f32 0.0, %v1586
  %v1588 = vpop.f32.mrf.mxu0
  %v1589 = vpop.f32.mrf.mxu0
  %v1590 = vadd.f32 0.0, %v1589
  %v1591 = vpop.f32.mrf.mxu0
  %1592 = vmatprep.mubr.bf16.mxu0 0
  %1593 = vmatmul.mubr.bf16.gmra.mxu0 %v1478
  %v1594 = vpop.f32.mrf.mxu0
  %v1595 = vadd.f32 0.0, %v1594
  %v1596 = vpop.f32.mrf.mxu0
  %v1597 = vpop.f32.mrf.mxu0
  %v1598 = vadd.f32 0.0, %v1597
  %v1599 = vpop.f32.mrf.mxu0
  %1600 = vmatprep.mubr.bf16.mxu0 0
  %1601 = vmatmul.mubr.bf16.gmra.mxu0 %v1479
  %v1602 = vpop.f32.mrf.mxu0
  %v1603 = vadd.f32 0.0, %v1602
  %v1604 = vpop.f32.mrf.mxu0
  %v1605 = vpop.f32.mrf.mxu0
  %v1606 = vadd.f32 0.0, %v1605
  %v1607 = vpop.f32.mrf.mxu0
  %1608 = vdwg.mxu0
  %1625 = vrot.lane.b32.xlu0 %v1547, 64
  %v1626 = vpop.permute.xlu0 %1625
  %1627 = vrot.lane.b32.xlu0 %v1550, 64
  %v1628 = vpop.permute.xlu0 %1627
  %1629 = vrot.lane.b32.xlu0 %v1555, 64
  %v1630 = vpop.permute.xlu0 %1629
  %1631 = vrot.lane.b32.xlu0 %v1558, 64
  %v1632 = vpop.permute.xlu0 %1631
  %1633 = vrot.lane.b32.xlu0 %v1563, 64
  %v1634 = vpop.permute.xlu0 %1633
  %1635 = vrot.lane.b32.xlu0 %v1566, 64
  %v1636 = vpop.permute.xlu0 %1635
  %1637 = vrot.lane.b32.xlu0 %v1571, 64
  %v1638 = vpop.permute.xlu0 %1637
  %1639 = vrot.lane.b32.xlu0 %v1574, 64
  %v1640 = vpop.permute.xlu0 %1639
  %1641 = vrot.lane.b32.xlu0 %v1579, 64
  %v1642 = vpop.permute.xlu0 %1641
  %1643 = vrot.lane.b32.xlu0 %v1582, 64
  %v1644 = vpop.permute.xlu0 %1643
  %1645 = vrot.lane.b32.xlu0 %v1587, 64
  %v1646 = vpop.permute.xlu0 %1645
  %1647 = vrot.lane.b32.xlu0 %v1590, 64
  %v1648 = vpop.permute.xlu0 %1647
  %1649 = vrot.lane.b32.xlu0 %v1595, 64
  %v1650 = vpop.permute.xlu0 %1649
  %1651 = vrot.lane.b32.xlu0 %v1598, 64
  %v1652 = vpop.permute.xlu0 %1651
  %1653 = vrot.lane.b32.xlu0 %v1603, 64
  %v1654 = vpop.permute.xlu0 %1653
  %1655 = vrot.lane.b32.xlu0 %v1606, 64
  %v1656 = vpop.permute.xlu0 %1655
  %v1673 = vsel %vm740, %v1073, %v1626
  %v1674 = vsel %vm740, %v1076, %v1628
  %v1675 = vsel %vm740, %v1081, %v1630
  %v1676 = vsel %vm740, %v1084, %v1632
  %v1677 = vsel %vm740, %v1089, %v1634
  %v1678 = vsel %vm740, %v1092, %v1636
  %v1679 = vsel %vm740, %v1097, %v1638
  %v1680 = vsel %vm740, %v1100, %v1640
  %v1681 = vsel %vm740, %v1105, %v1642
  %v1682 = vsel %vm740, %v1108, %v1644
  %v1683 = vsel %vm740, %v1113, %v1646
  %v1684 = vsel %vm740, %v1116, %v1648
  %v1685 = vsel %vm740, %v1121, %v1650
  %v1686 = vsel %vm740, %v1124, %v1652
  %v1687 = vsel %vm740, %v1129, %v1654
  %v1688 = vsel %vm740, %v1132, %v1656
  %v1689 = vpack.c.bf16 %v1674, %v1673
  %v1690 = vpack.c.bf16 %v1676, %v1675
  %v1691 = vpack.c.bf16 %v1678, %v1677
  %v1692 = vpack.c.bf16 %v1680, %v1679
  %v1693 = vpack.c.bf16 %v1682, %v1681
  %v1694 = vpack.c.bf16 %v1684, %v1683
  %v1695 = vpack.c.bf16 %v1686, %v1685
  %v1696 = vpack.c.bf16 %v1688, %v1687
  %v1697 = vld [vmem:[%s6] sm:$0xf]
  %v1698 = vld [vmem:[%s6 + $0x4] sm:$0xf]
  %v1699 = vld [vmem:[%s6 + $0x8] sm:$0xf]
  %v1700 = vld [vmem:[%s6 + $0xc] sm:$0xf]
  %v1701 = vld [vmem:[%s6 + $0x10] sm:$0xf]
  %v1702 = vld [vmem:[%s6 + $0x14] sm:$0xf]
  %v1703 = vld [vmem:[%s6 + $0x18] sm:$0xf]
  %v1704 = vld [vmem:[%s6 + $0x1c] sm:$0xf]
  %v1705 = vld [vmem:[%s6 + $0x20] sm:$0xf]
  %v1706 = vld [vmem:[%s6 + $0x24] sm:$0xf]
  %v1707 = vld [vmem:[%s6 + $0x28] sm:$0xf]
  %v1708 = vld [vmem:[%s6 + $0x2c] sm:$0xf]
  %v1709 = vld [vmem:[%s6 + $0x30] sm:$0xf]
  %v1710 = vld [vmem:[%s6 + $0x34] sm:$0xf]
  %v1711 = vld [vmem:[%s6 + $0x38] sm:$0xf]
  %v1712 = vld [vmem:[%s6 + $0x3c] sm:$0xf]
  %v1713 = vld [vmem:[%s7] sm:$0x1]
  %v1715 = vlaneseq
  %v1716 = vshrl.u32 %v1715, 7
  %v1717 = vsub.s32 0, %v1716
  %v1718 = vrot.slane %v1713, %v1717
  %v1736 = vunpack.c.l.b16 %v1697
  %v1737 = vunpack.c.l.b16 %v1698
  %v1738 = vunpack.c.l.b16 %v1699
  %v1739 = vunpack.c.l.b16 %v1700
  %v1740 = vunpack.c.l.b16 %v1701
  %v1741 = vunpack.c.l.b16 %v1702
  %v1742 = vunpack.c.l.b16 %v1703
  %v1743 = vunpack.c.l.b16 %v1704
  %v1744 = vunpack.c.l.b16 %v1705
  %v1745 = vunpack.c.l.b16 %v1706
  %v1746 = vunpack.c.l.b16 %v1707
  %v1747 = vunpack.c.l.b16 %v1708
  %v1748 = vunpack.c.l.b16 %v1709
  %v1749 = vunpack.c.l.b16 %v1710
  %v1750 = vunpack.c.l.b16 %v1711
  %v1751 = vunpack.c.l.b16 %v1712
  %v1752 = vpack.c.b16 %v1737, %v1736
  %v1753 = vpack.c.b16 %v1739, %v1738
  %v1754 = vpack.c.b16 %v1741, %v1740
  %v1755 = vpack.c.b16 %v1743, %v1742
  %v1756 = vpack.c.b16 %v1745, %v1744
  %v1757 = vpack.c.b16 %v1747, %v1746
  %v1758 = vpack.c.b16 %v1749, %v1748
  %v1759 = vpack.c.b16 %v1751, %v1750
  %1768 = vmatprep.subr.bf16.mxu0 0
  %1769 = vmatpush1.bf16.msra.mxu0 %v1759
  %1770 = vmatprep.subr.bf16.mxu0 0
  %1771 = vmatpush1.bf16.msra.mxu0 %v1758
  %1772 = vmatprep.subr.bf16.mxu0 0
  %1773 = vmatpush1.bf16.msra.mxu0 %v1757
  %1774 = vmatprep.subr.bf16.mxu0 0
  %1775 = vmatpush1.bf16.msra.mxu0 %v1756
  %1776 = vmatprep.subr.bf16.mxu0 0
  %1777 = vmatpush1.bf16.msra.mxu0 %v1755
  %1778 = vmatprep.subr.bf16.mxu0 0
  %1779 = vmatpush1.bf16.msra.mxu0 %v1754
  %1780 = vmatprep.subr.bf16.mxu0 0
  %1781 = vmatpush1.bf16.msra.mxu0 %v1753
  %1782 = vmatprep.subr.bf16.mxu0 0
  %1783 = vmatpush1.bf16.msra.mxu0 %v1752
  %1784 = vmatprep.subr.bf16.mxu0 0
  %1785 = vmatpush2.bf16.msra.mxu0 0
  %1786 = vmatprep.subr.bf16.mxu0 0
  %1787 = vmatpush2.bf16.msra.mxu0 0
  %1788 = vmatprep.subr.bf16.mxu0 0
  %1789 = vmatpush2.bf16.msra.mxu0 0
  %1790 = vmatprep.subr.bf16.mxu0 0
  %1791 = vmatpush2.bf16.msra.mxu0 0
  %1792 = vmatprep.subr.bf16.mxu0 0
  %1793 = vmatpush2.bf16.msra.mxu0 0
  %1794 = vmatprep.subr.bf16.mxu0 0
  %1795 = vmatpush2.bf16.msra.mxu0 0
  %1796 = vmatprep.subr.bf16.mxu0 0
  %1797 = vmatpush2.bf16.msra.mxu0 0
  %1798 = vmatprep.subr.bf16.mxu0 0
  %1799 = vmatpush2.bf16.msra.mxu0 0
  %1800 = vmatprep.mubr.bf16.mxu0 0
  %1801 = vmatmul.mubr.bf16.gmra.mxu0 %v1689
  %v1802 = vpop.f32.mrf.mxu0
  %v1803 = vadd.f32 %v1718, %v1802
  %v1804 = vpop.f32.mrf.mxu0
  %v1805 = vpop.f32.mrf.mxu0
  %v1806 = vadd.f32 %v1718, %v1805
  %v1807 = vpop.f32.mrf.mxu0
  %1808 = vmatprep.mubr.bf16.mxu0 0
  %1809 = vmatmul.mubr.bf16.gmra.mxu0 %v1690
  %v1810 = vpop.f32.mrf.mxu0
  %v1811 = vadd.f32 %v1718, %v1810
  %v1812 = vpop.f32.mrf.mxu0
  %v1813 = vpop.f32.mrf.mxu0
  %v1814 = vadd.f32 %v1718, %v1813
  %v1815 = vpop.f32.mrf.mxu0
  %1816 = vmatprep.mubr.bf16.mxu0 0
  %1817 = vmatmul.mubr.bf16.gmra.mxu0 %v1691
  %v1818 = vpop.f32.mrf.mxu0
  %v1819 = vadd.f32 %v1718, %v1818
  %v1820 = vpop.f32.mrf.mxu0
  %v1821 = vpop.f32.mrf.mxu0
  %v1822 = vadd.f32 %v1718, %v1821
  %v1823 = vpop.f32.mrf.mxu0
  %1824 = vmatprep.mubr.bf16.mxu0 0
  %1825 = vmatmul.mubr.bf16.gmra.mxu0 %v1692
  %v1826 = vpop.f32.mrf.mxu0
  %v1827 = vadd.f32 %v1718, %v1826
  %v1828 = vpop.f32.mrf.mxu0
  %v1829 = vpop.f32.mrf.mxu0
  %v1830 = vadd.f32 %v1718, %v1829
  %v1831 = vpop.f32.mrf.mxu0
  %1832 = vmatprep.mubr.bf16.mxu0 0
  %1833 = vmatmul.mubr.bf16.gmra.mxu0 %v1693
  %v1834 = vpop.f32.mrf.mxu0
  %v1835 = vadd.f32 %v1718, %v1834
  %v1836 = vpop.f32.mrf.mxu0
  %v1837 = vpop.f32.mrf.mxu0
  %v1838 = vadd.f32 %v1718, %v1837
  %v1839 = vpop.f32.mrf.mxu0
  %1840 = vmatprep.mubr.bf16.mxu0 0
  %1841 = vmatmul.mubr.bf16.gmra.mxu0 %v1694
  %v1842 = vpop.f32.mrf.mxu0
  %v1843 = vadd.f32 %v1718, %v1842
  %v1844 = vpop.f32.mrf.mxu0
  %v1845 = vpop.f32.mrf.mxu0
  %v1846 = vadd.f32 %v1718, %v1845
  %v1847 = vpop.f32.mrf.mxu0
  %1848 = vmatprep.mubr.bf16.mxu0 0
  %1849 = vmatmul.mubr.bf16.gmra.mxu0 %v1695
  %v1850 = vpop.f32.mrf.mxu0
  %v1851 = vadd.f32 %v1718, %v1850
  %v1852 = vpop.f32.mrf.mxu0
  %v1853 = vpop.f32.mrf.mxu0
  %v1854 = vadd.f32 %v1718, %v1853
  %v1855 = vpop.f32.mrf.mxu0
  %1856 = vmatprep.mubr.bf16.mxu0 0
  %1857 = vmatmul.mubr.bf16.gmra.mxu0 %v1696
  %v1858 = vpop.f32.mrf.mxu0
  %v1859 = vadd.f32 %v1718, %v1858
  %v1860 = vpop.f32.mrf.mxu0
  %v1861 = vpop.f32.mrf.mxu0
  %v1862 = vadd.f32 %v1718, %v1861
  %v1863 = vpop.f32.mrf.mxu0
  %1864 = vdwg.mxu0
  %v1865 = vadd.f32 %v289, %v1803
  %v1866 = vadd.f32 %v290, %v1806
  %v1867 = vadd.f32 %v291, %v1811
  %v1868 = vadd.f32 %v292, %v1814
  %v1869 = vadd.f32 %v293, %v1819
  %v1870 = vadd.f32 %v294, %v1822
  %v1871 = vadd.f32 %v295, %v1827
  %v1872 = vadd.f32 %v296, %v1830
  %v1873 = vadd.f32 %v297, %v1835
  %v1874 = vadd.f32 %v298, %v1838
  %v1875 = vadd.f32 %v299, %v1843
  %v1876 = vadd.f32 %v300, %v1846
  %v1877 = vadd.f32 %v301, %v1851
  %v1878 = vadd.f32 %v302, %v1854
  %v1879 = vadd.f32 %v303, %v1859
  %v1880 = vadd.f32 %v304, %v1862
  %v1881 = vld [vmem:[%s8] sm:$0x1]
  %v1882 = vld [vmem:[%s9] sm:$0x1]
  %1883 = vadd.xlane.f32.xlu0 %v1865
  %v1884 = vpop.xlane.xlu0 %1883
  %1885 = vadd.xlane.f32.xlu0 %v1866
  %v1886 = vpop.xlane.xlu0 %1885
  %1887 = vadd.xlane.f32.xlu0 %v1867
  %v1888 = vpop.xlane.xlu0 %1887
  %1889 = vadd.xlane.f32.xlu0 %v1868
  %v1890 = vpop.xlane.xlu0 %1889
  %1891 = vadd.xlane.f32.xlu0 %v1869
  %v1892 = vpop.xlane.xlu0 %1891
  %1893 = vadd.xlane.f32.xlu0 %v1870
  %v1894 = vpop.xlane.xlu0 %1893
  %1895 = vadd.xlane.f32.xlu0 %v1871
  %v1896 = vpop.xlane.xlu0 %1895
  %1897 = vadd.xlane.f32.xlu0 %v1872
  %v1898 = vpop.xlane.xlu0 %1897
  %1899 = vadd.xlane.f32.xlu0 %v1873
  %v1900 = vpop.xlane.xlu0 %1899
  %1901 = vadd.xlane.f32.xlu0 %v1874
  %v1902 = vpop.xlane.xlu0 %1901
  %1903 = vadd.xlane.f32.xlu0 %v1875
  %v1904 = vpop.xlane.xlu0 %1903
  %1905 = vadd.xlane.f32.xlu0 %v1876
  %v1906 = vpop.xlane.xlu0 %1905
  %1907 = vadd.xlane.f32.xlu0 %v1877
  %v1908 = vpop.xlane.xlu0 %1907
  %1909 = vadd.xlane.f32.xlu0 %v1878
  %v1910 = vpop.xlane.xlu0 %1909
  %1911 = vadd.xlane.f32.xlu0 %v1879
  %v1912 = vpop.xlane.xlu0 %1911
  %1913 = vadd.xlane.f32.xlu0 %v1880
  %v1914 = vpop.xlane.xlu0 %1913
  %v1915 = vmul.f32 %v1884, %v116
  %v1916 = vmul.f32 %v1886, %v116
  %v1917 = vmul.f32 %v1888, %v116
  %v1918 = vmul.f32 %v1890, %v116
  %v1919 = vmul.f32 %v1892, %v116
  %v1920 = vmul.f32 %v1894, %v116
  %v1921 = vmul.f32 %v1896, %v116
  %v1922 = vmul.f32 %v1898, %v116
  %v1923 = vmul.f32 %v1900, %v116
  %v1924 = vmul.f32 %v1902, %v116
  %v1925 = vmul.f32 %v1904, %v116
  %v1926 = vmul.f32 %v1906, %v116
  %v1927 = vmul.f32 %v1908, %v116
  %v1928 = vmul.f32 %v1910, %v116
  %v1929 = vmul.f32 %v1912, %v116
  %v1930 = vmul.f32 %v1914, %v116
  %v1931 = vsub.f32 %v1865, %v1915
  %v1932 = vsub.f32 %v1866, %v1916
  %v1933 = vsub.f32 %v1867, %v1917
  %v1934 = vsub.f32 %v1868, %v1918
  %v1935 = vsub.f32 %v1869, %v1919
  %v1936 = vsub.f32 %v1870, %v1920
  %v1937 = vsub.f32 %v1871, %v1921
  %v1938 = vsub.f32 %v1872, %v1922
  %v1939 = vsub.f32 %v1873, %v1923
  %v1940 = vsub.f32 %v1874, %v1924
  %v1941 = vsub.f32 %v1875, %v1925
  %v1942 = vsub.f32 %v1876, %v1926
  %v1943 = vsub.f32 %v1877, %v1927
  %v1944 = vsub.f32 %v1878, %v1928
  %v1945 = vsub.f32 %v1879, %v1929
  %v1946 = vsub.f32 %v1880, %v1930
  %v1947 = vmul.f32 %v1931, %v1931
  %v1948 = vmul.f32 %v1932, %v1932
  %v1949 = vmul.f32 %v1933, %v1933
  %v1950 = vmul.f32 %v1934, %v1934
  %v1951 = vmul.f32 %v1935, %v1935
  %v1952 = vmul.f32 %v1936, %v1936
  %v1953 = vmul.f32 %v1937, %v1937
  %v1954 = vmul.f32 %v1938, %v1938
  %v1955 = vmul.f32 %v1939, %v1939
  %v1956 = vmul.f32 %v1940, %v1940
  %v1957 = vmul.f32 %v1941, %v1941
  %v1958 = vmul.f32 %v1942, %v1942
  %v1959 = vmul.f32 %v1943, %v1943
  %v1960 = vmul.f32 %v1944, %v1944
  %v1961 = vmul.f32 %v1945, %v1945
  %v1962 = vmul.f32 %v1946, %v1946
  %1963 = vadd.xlane.f32.xlu0 %v1947
  %v1964 = vpop.xlane.xlu0 %1963
  %1965 = vadd.xlane.f32.xlu0 %v1948
  %v1966 = vpop.xlane.xlu0 %1965
  %1967 = vadd.xlane.f32.xlu0 %v1949
  %v1968 = vpop.xlane.xlu0 %1967
  %1969 = vadd.xlane.f32.xlu0 %v1950
  %v1970 = vpop.xlane.xlu0 %1969
  %1971 = vadd.xlane.f32.xlu0 %v1951
  %v1972 = vpop.xlane.xlu0 %1971
  %1973 = vadd.xlane.f32.xlu0 %v1952
  %v1974 = vpop.xlane.xlu0 %1973
  %1975 = vadd.xlane.f32.xlu0 %v1953
  %v1976 = vpop.xlane.xlu0 %1975
  %1977 = vadd.xlane.f32.xlu0 %v1954
  %v1978 = vpop.xlane.xlu0 %1977
  %1979 = vadd.xlane.f32.xlu0 %v1955
  %v1980 = vpop.xlane.xlu0 %1979
  %1981 = vadd.xlane.f32.xlu0 %v1956
  %v1982 = vpop.xlane.xlu0 %1981
  %1983 = vadd.xlane.f32.xlu0 %v1957
  %v1984 = vpop.xlane.xlu0 %1983
  %1985 = vadd.xlane.f32.xlu0 %v1958
  %v1986 = vpop.xlane.xlu0 %1985
  %1987 = vadd.xlane.f32.xlu0 %v1959
  %v1988 = vpop.xlane.xlu0 %1987
  %1989 = vadd.xlane.f32.xlu0 %v1960
  %v1990 = vpop.xlane.xlu0 %1989
  %1991 = vadd.xlane.f32.xlu0 %v1961
  %v1992 = vpop.xlane.xlu0 %1991
  %1993 = vadd.xlane.f32.xlu0 %v1962
  %v1994 = vpop.xlane.xlu0 %1993
  %v1995 = vmul.f32 %v1964, %v116
  %v1996 = vmul.f32 %v1966, %v116
  %v1997 = vmul.f32 %v1968, %v116
  %v1998 = vmul.f32 %v1970, %v116
  %v1999 = vmul.f32 %v1972, %v116
  %v2000 = vmul.f32 %v1974, %v116
  %v2001 = vmul.f32 %v1976, %v116
  %v2002 = vmul.f32 %v1978, %v116
  %v2003 = vmul.f32 %v1980, %v116
  %v2004 = vmul.f32 %v1982, %v116
  %v2005 = vmul.f32 %v1984, %v116
  %v2006 = vmul.f32 %v1986, %v116
  %v2007 = vmul.f32 %v1988, %v116
  %v2008 = vmul.f32 %v1990, %v116
  %v2009 = vmul.f32 %v1992, %v116
  %v2010 = vmul.f32 %v1994, %v116
  %v2011 = vadd.f32 %v1995, 1e-12
  %v2012 = vadd.f32 %v1996, 1e-12
  %v2013 = vadd.f32 %v1997, 1e-12
  %v2014 = vadd.f32 %v1998, 1e-12
  %v2015 = vadd.f32 %v1999, 1e-12
  %v2016 = vadd.f32 %v2000, 1e-12
  %v2017 = vadd.f32 %v2001, 1e-12
  %v2018 = vadd.f32 %v2002, 1e-12
  %v2019 = vadd.f32 %v2003, 1e-12
  %v2020 = vadd.f32 %v2004, 1e-12
  %v2021 = vadd.f32 %v2005, 1e-12
  %v2022 = vadd.f32 %v2006, 1e-12
  %v2023 = vadd.f32 %v2007, 1e-12
  %v2024 = vadd.f32 %v2008, 1e-12
  %v2025 = vadd.f32 %v2009, 1e-12
  %v2026 = vadd.f32 %v2010, 1e-12
  %v2027 = vrsqrt.pop %v2011
  %v2028 = vrsqrt.pop %v2012
  %v2029 = vrsqrt.pop %v2013
  %v2030 = vrsqrt.pop %v2014
  %v2031 = vrsqrt.pop %v2015
  %v2032 = vrsqrt.pop %v2016
  %v2033 = vrsqrt.pop %v2017
  %v2034 = vrsqrt.pop %v2018
  %v2035 = vrsqrt.pop %v2019
  %v2036 = vrsqrt.pop %v2020
  %v2037 = vrsqrt.pop %v2021
  %v2038 = vrsqrt.pop %v2022
  %v2039 = vrsqrt.pop %v2023
  %v2040 = vrsqrt.pop %v2024
  %v2041 = vrsqrt.pop %v2025
  %v2042 = vrsqrt.pop %v2026
  %v2043 = vmul.f32 %v1931, %v2027
  %v2044 = vmul.f32 %v1932, %v2028
  %v2045 = vmul.f32 %v1933, %v2029
  %v2046 = vmul.f32 %v1934, %v2030
  %v2047 = vmul.f32 %v1935, %v2031
  %v2048 = vmul.f32 %v1936, %v2032
  %v2049 = vmul.f32 %v1937, %v2033
  %v2050 = vmul.f32 %v1938, %v2034
  %v2051 = vmul.f32 %v1939, %v2035
  %v2052 = vmul.f32 %v1940, %v2036
  %v2053 = vmul.f32 %v1941, %v2037
  %v2054 = vmul.f32 %v1942, %v2038
  %v2055 = vmul.f32 %v1943, %v2039
  %v2056 = vmul.f32 %v1944, %v2040
  %v2057 = vmul.f32 %v1945, %v2041
  %v2058 = vmul.f32 %v1946, %v2042
  %v2060 = vlaneseq
  %v2061 = vshrl.u32 %v2060, 7
  %v2062 = vsub.s32 0, %v2061
  %v2063 = vrot.slane %v1881, %v2062
  %v2065 = vmul.f32 %v2043, %v2063
  %v2066 = vmul.f32 %v2044, %v2063
  %v2067 = vmul.f32 %v2045, %v2063
  %v2068 = vmul.f32 %v2046, %v2063
  %v2069 = vmul.f32 %v2047, %v2063
  %v2070 = vmul.f32 %v2048, %v2063
  %v2071 = vmul.f32 %v2049, %v2063
  %v2072 = vmul.f32 %v2050, %v2063
  %v2073 = vmul.f32 %v2051, %v2063
  %v2074 = vmul.f32 %v2052, %v2063
  %v2075 = vmul.f32 %v2053, %v2063
  %v2076 = vmul.f32 %v2054, %v2063
  %v2077 = vmul.f32 %v2055, %v2063
  %v2078 = vmul.f32 %v2056, %v2063
  %v2079 = vmul.f32 %v2057, %v2063
  %v2080 = vmul.f32 %v2058, %v2063
  %v2082 = vlaneseq
  %v2083 = vshrl.u32 %v2082, 7
  %v2084 = vsub.s32 0, %v2083
  %v2085 = vrot.slane %v1882, %v2084
  %v2087 = vadd.f32 %v2065, %v2085
  %v2088 = vadd.f32 %v2066, %v2085
  %v2089 = vadd.f32 %v2067, %v2085
  %v2090 = vadd.f32 %v2068, %v2085
  %v2091 = vadd.f32 %v2069, %v2085
  %v2092 = vadd.f32 %v2070, %v2085
  %v2093 = vadd.f32 %v2071, %v2085
  %v2094 = vadd.f32 %v2072, %v2085
  %v2095 = vadd.f32 %v2073, %v2085
  %v2096 = vadd.f32 %v2074, %v2085
  %v2097 = vadd.f32 %v2075, %v2085
  %v2098 = vadd.f32 %v2076, %v2085
  %v2099 = vadd.f32 %v2077, %v2085
  %v2100 = vadd.f32 %v2078, %v2085
  %v2101 = vadd.f32 %v2079, %v2085
  %v2102 = vadd.f32 %v2080, %v2085
  %v2103 = vpack.c.bf16 %v2088, %v2087
  %v2104 = vpack.c.bf16 %v2090, %v2089
  %v2105 = vpack.c.bf16 %v2092, %v2091
  %v2106 = vpack.c.bf16 %v2094, %v2093
  %v2107 = vpack.c.bf16 %v2096, %v2095
  %v2108 = vpack.c.bf16 %v2098, %v2097
  %v2109 = vpack.c.bf16 %v2100, %v2099
  %v2110 = vpack.c.bf16 %v2102, %v2101
  %v2111 = vld [vmem:[%s10] sm:$0xff]
  %v2112 = vld [vmem:[%s10 + $0x8] sm:$0xff]
  %v2113 = vld [vmem:[%s10 + $0x10] sm:$0xff]
  %v2114 = vld [vmem:[%s10 + $0x18] sm:$0xff]
  %v2115 = vld [vmem:[%s10 + $0x20] sm:$0xff]
  %v2116 = vld [vmem:[%s10 + $0x28] sm:$0xff]
  %v2117 = vld [vmem:[%s10 + $0x30] sm:$0xff]
  %v2118 = vld [vmem:[%s10 + $0x38] sm:$0xff]
  %v2119 = vld [vmem:[%s10 + $0x40] sm:$0xff]
  %v2120 = vld [vmem:[%s10 + $0x48] sm:$0xff]
  %v2121 = vld [vmem:[%s10 + $0x50] sm:$0xff]
  %v2122 = vld [vmem:[%s10 + $0x58] sm:$0xff]
  %v2123 = vld [vmem:[%s10 + $0x60] sm:$0xff]
  %v2124 = vld [vmem:[%s10 + $0x68] sm:$0xff]
  %v2125 = vld [vmem:[%s10 + $0x70] sm:$0xff]
  %v2126 = vld [vmem:[%s10 + $0x78] sm:$0xff]
  %v2127 = vld [vmem:[%s11] sm:$0x3]
  %v2129 = vlaneseq
  %v2130 = vshrl.u32 %v2129, 7
  %v2131 = vsub.s32 0, %v2130
  %v2132 = vrot.slane %v2127, %v2131
  %v2133 = vlaneseq
  %v2134 = vshrl.u32 %v2133, 7
  %v2135 = vsub.s32 1, %v2134
  %v2136 = vrot.slane %v2127, %v2135
  %v2155 = vunpack.c.l.b16 %v2111
  %v2156 = vunpack.c.h.b16 %v2111
  %v2157 = vunpack.c.l.b16 %v2112
  %v2158 = vunpack.c.h.b16 %v2112
  %v2159 = vunpack.c.l.b16 %v2113
  %v2160 = vunpack.c.h.b16 %v2113
  %v2161 = vunpack.c.l.b16 %v2114
  %v2162 = vunpack.c.h.b16 %v2114
  %v2163 = vunpack.c.l.b16 %v2115
  %v2164 = vunpack.c.h.b16 %v2115
  %v2165 = vunpack.c.l.b16 %v2116
  %v2166 = vunpack.c.h.b16 %v2116
  %v2167 = vunpack.c.l.b16 %v2117
  %v2168 = vunpack.c.h.b16 %v2117
  %v2169 = vunpack.c.l.b16 %v2118
  %v2170 = vunpack.c.h.b16 %v2118
  %v2171 = vunpack.c.l.b16 %v2119
  %v2172 = vunpack.c.h.b16 %v2119
  %v2173 = vunpack.c.l.b16 %v2120
  %v2174 = vunpack.c.h.b16 %v2120
  %v2175 = vunpack.c.l.b16 %v2121
  %v2176 = vunpack.c.h.b16 %v2121
  %v2177 = vunpack.c.l.b16 %v2122
  %v2178 = vunpack.c.h.b16 %v2122
  %v2179 = vunpack.c.l.b16 %v2123
  %v2180 = vunpack.c.h.b16 %v2123
  %v2181 = vunpack.c.l.b16 %v2124
  %v2182 = vunpack.c.h.b16 %v2124
  %v2183 = vunpack.c.l.b16 %v2125
  %v2184 = vunpack.c.h.b16 %v2125
  %v2185 = vunpack.c.l.b16 %v2126
  %v2186 = vunpack.c.h.b16 %v2126
  %v2187 = vpack.c.b16 %v2157, %v2155
  %v2188 = vpack.c.b16 %v2158, %v2156
  %v2189 = vpack.c.b16 %v2161, %v2159
  %v2190 = vpack.c.b16 %v2162, %v2160
  %v2191 = vpack.c.b16 %v2165, %v2163
  %v2192 = vpack.c.b16 %v2166, %v2164
  %v2193 = vpack.c.b16 %v2169, %v2167
  %v2194 = vpack.c.b16 %v2170, %v2168
  %v2195 = vpack.c.b16 %v2173, %v2171
  %v2196 = vpack.c.b16 %v2174, %v2172
  %v2197 = vpack.c.b16 %v2177, %v2175
  %v2198 = vpack.c.b16 %v2178, %v2176
  %v2199 = vpack.c.b16 %v2181, %v2179
  %v2200 = vpack.c.b16 %v2182, %v2180
  %v2201 = vpack.c.b16 %v2185, %v2183
  %v2202 = vpack.c.b16 %v2186, %v2184
  %2219 = vmatprep.subr.bf16.mxu0 %v2202
  %2220 = vmatpush1.bf16.msra.mxu0 %v2201
  %2221 = vmatprep.subr.bf16.mxu0 %v2200
  %2222 = vmatpush1.bf16.msra.mxu0 %v2199
  %2223 = vmatprep.subr.bf16.mxu0 %v2198
  %2224 = vmatpush1.bf16.msra.mxu0 %v2197
  %2225 = vmatprep.subr.bf16.mxu0 %v2196
  %2226 = vmatpush1.bf16.msra.mxu0 %v2195
  %2227 = vmatprep.subr.bf16.mxu0 %v2194
  %2228 = vmatpush1.bf16.msra.mxu0 %v2193
  %2229 = vmatprep.subr.bf16.mxu0 %v2192
  %2230 = vmatpush1.bf16.msra.mxu0 %v2191
  %2231 = vmatprep.subr.bf16.mxu0 %v2190
  %2232 = vmatpush1.bf16.msra.mxu0 %v2189
  %2233 = vmatprep.subr.bf16.mxu0 %v2188
  %2234 = vmatpush1.bf16.msra.mxu0 %v2187
  %2235 = vmatprep.subr.bf16.mxu0 0
  %2236 = vmatpush2.bf16.msra.mxu0 0
  %2237 = vmatprep.subr.bf16.mxu0 0
  %2238 = vmatpush2.bf16.msra.mxu0 0
  %2239 = vmatprep.subr.bf16.mxu0 0
  %2240 = vmatpush2.bf16.msra.mxu0 0
  %2241 = vmatprep.subr.bf16.mxu0 0
  %2242 = vmatpush2.bf16.msra.mxu0 0
  %2243 = vmatprep.subr.bf16.mxu0 0
  %2244 = vmatpush2.bf16.msra.mxu0 0
  %2245 = vmatprep.subr.bf16.mxu0 0
  %2246 = vmatpush2.bf16.msra.mxu0 0
  %2247 = vmatprep.subr.bf16.mxu0 0
  %2248 = vmatpush2.bf16.msra.mxu0 0
  %2249 = vmatprep.subr.bf16.mxu0 0
  %2250 = vmatpush2.bf16.msra.mxu0 0
  %2251 = vmatprep.mubr.bf16.mxu0 0
  %2252 = vmatmul.mubr.bf16.gmra.mxu0 %v2103
  %v2253 = vpop.f32.mrf.mxu0
  %v2254 = vadd.f32 %v2132, %v2253
  %v2255 = vpop.f32.mrf.mxu0
  %v2256 = vadd.f32 %v2136, %v2255
  %v2257 = vpop.f32.mrf.mxu0
  %v2258 = vadd.f32 %v2132, %v2257
  %v2259 = vpop.f32.mrf.mxu0
  %v2260 = vadd.f32 %v2136, %v2259
  %2261 = vmatprep.mubr.bf16.mxu0 0
  %2262 = vmatmul.mubr.bf16.gmra.mxu0 %v2104
  %v2263 = vpop.f32.mrf.mxu0
  %v2264 = vadd.f32 %v2132, %v2263
  %v2265 = vpop.f32.mrf.mxu0
  %v2266 = vadd.f32 %v2136, %v2265
  %v2267 = vpop.f32.mrf.mxu0
  %v2268 = vadd.f32 %v2132, %v2267
  %v2269 = vpop.f32.mrf.mxu0
  %v2270 = vadd.f32 %v2136, %v2269
  %2271 = vmatprep.mubr.bf16.mxu0 0
  %2272 = vmatmul.mubr.bf16.gmra.mxu0 %v2105
  %v2273 = vpop.f32.mrf.mxu0
  %v2274 = vadd.f32 %v2132, %v2273
  %v2275 = vpop.f32.mrf.mxu0
  %v2276 = vadd.f32 %v2136, %v2275
  %v2277 = vpop.f32.mrf.mxu0
  %v2278 = vadd.f32 %v2132, %v2277
  %v2279 = vpop.f32.mrf.mxu0
  %v2280 = vadd.f32 %v2136, %v2279
  %2281 = vmatprep.mubr.bf16.mxu0 0
  %2282 = vmatmul.mubr.bf16.gmra.mxu0 %v2106
  %v2283 = vpop.f32.mrf.mxu0
  %v2284 = vadd.f32 %v2132, %v2283
  %v2285 = vpop.f32.mrf.mxu0
  %v2286 = vadd.f32 %v2136, %v2285
  %v2287 = vpop.f32.mrf.mxu0
  %v2288 = vadd.f32 %v2132, %v2287
  %v2289 = vpop.f32.mrf.mxu0
  %v2290 = vadd.f32 %v2136, %v2289
  %2291 = vmatprep.mubr.bf16.mxu0 0
  %2292 = vmatmul.mubr.bf16.gmra.mxu0 %v2107
  %v2293 = vpop.f32.mrf.mxu0
  %v2294 = vadd.f32 %v2132, %v2293
  %v2295 = vpop.f32.mrf.mxu0
  %v2296 = vadd.f32 %v2136, %v2295
  %v2297 = vpop.f32.mrf.mxu0
  %v2298 = vadd.f32 %v2132, %v2297
  %v2299 = vpop.f32.mrf.mxu0
  %v2300 = vadd.f32 %v2136, %v2299
  %2301 = vmatprep.mubr.bf16.mxu0 0
  %2302 = vmatmul.mubr.bf16.gmra.mxu0 %v2108
  %v2303 = vpop.f32.mrf.mxu0
  %v2304 = vadd.f32 %v2132, %v2303
  %v2305 = vpop.f32.mrf.mxu0
  %v2306 = vadd.f32 %v2136, %v2305
  %v2307 = vpop.f32.mrf.mxu0
  %v2308 = vadd.f32 %v2132, %v2307
  %v2309 = vpop.f32.mrf.mxu0
  %v2310 = vadd.f32 %v2136, %v2309
  %2311 = vmatprep.mubr.bf16.mxu0 0
  %2312 = vmatmul.mubr.bf16.gmra.mxu0 %v2109
  %v2313 = vpop.f32.mrf.mxu0
  %v2314 = vadd.f32 %v2132, %v2313
  %v2315 = vpop.f32.mrf.mxu0
  %v2316 = vadd.f32 %v2136, %v2315
  %v2317 = vpop.f32.mrf.mxu0
  %v2318 = vadd.f32 %v2132, %v2317
  %v2319 = vpop.f32.mrf.mxu0
  %v2320 = vadd.f32 %v2136, %v2319
  %2321 = vmatprep.mubr.bf16.mxu0 0
  %2322 = vmatmul.mubr.bf16.gmra.mxu0 %v2110
  %v2323 = vpop.f32.mrf.mxu0
  %v2324 = vadd.f32 %v2132, %v2323
  %v2325 = vpop.f32.mrf.mxu0
  %v2326 = vadd.f32 %v2136, %v2325
  %v2327 = vpop.f32.mrf.mxu0
  %v2328 = vadd.f32 %v2132, %v2327
  %v2329 = vpop.f32.mrf.mxu0
  %v2330 = vadd.f32 %v2136, %v2329
  %2331 = vdwg.mxu0
  %v2332 = vmul.f32 %v2254, 0.5
  %v2333 = vmul.f32 %v2256, 0.5
  %v2334 = vmul.f32 %v2258, 0.5
  %v2335 = vmul.f32 %v2260, 0.5
  %v2336 = vmul.f32 %v2264, 0.5
  %v2337 = vmul.f32 %v2266, 0.5
  %v2338 = vmul.f32 %v2268, 0.5
  %v2339 = vmul.f32 %v2270, 0.5
  %v2340 = vmul.f32 %v2274, 0.5
  %v2341 = vmul.f32 %v2276, 0.5
  %v2342 = vmul.f32 %v2278, 0.5
  %v2343 = vmul.f32 %v2280, 0.5
  %v2344 = vmul.f32 %v2284, 0.5
  %v2345 = vmul.f32 %v2286, 0.5
  %v2346 = vmul.f32 %v2288, 0.5
  %v2347 = vmul.f32 %v2290, 0.5
  %v2348 = vmul.f32 %v2294, 0.5
  %v2349 = vmul.f32 %v2296, 0.5
  %v2350 = vmul.f32 %v2298, 0.5
  %v2351 = vmul.f32 %v2300, 0.5
  %v2352 = vmul.f32 %v2304, 0.5
  %v2353 = vmul.f32 %v2306, 0.5
  %v2354 = vmul.f32 %v2308, 0.5
  %v2355 = vmul.f32 %v2310, 0.5
  %v2356 = vmul.f32 %v2314, 0.5
  %v2357 = vmul.f32 %v2316, 0.5
  %v2358 = vmul.f32 %v2318, 0.5
  %v2359 = vmul.f32 %v2320, 0.5
  %v2360 = vmul.f32 %v2324, 0.5
  %v2361 = vmul.f32 %v2326, 0.5
  %v2362 = vmul.f32 %v2328, 0.5
  %v2363 = vmul.f32 %v2330, 0.5
  %v2364 = vmul.f32 %v2254, 0.044715
  %v2365 = vmul.f32 %v2256, 0.044715
  %v2366 = vmul.f32 %v2258, 0.044715
  %v2367 = vmul.f32 %v2260, 0.044715
  %v2368 = vmul.f32 %v2264, 0.044715
  %v2369 = vmul.f32 %v2266, 0.044715
  %v2370 = vmul.f32 %v2268, 0.044715
  %v2371 = vmul.f32 %v2270, 0.044715
  %v2372 = vmul.f32 %v2274, 0.044715
  %v2373 = vmul.f32 %v2276, 0.044715
  %v2374 = vmul.f32 %v2278, 0.044715
  %v2375 = vmul.f32 %v2280, 0.044715
  %v2376 = vmul.f32 %v2284, 0.044715
  %v2377 = vmul.f32 %v2286, 0.044715
  %v2378 = vmul.f32 %v2288, 0.044715
  %v2379 = vmul.f32 %v2290, 0.044715
  %v2380 = vmul.f32 %v2294, 0.044715
  %v2381 = vmul.f32 %v2296, 0.044715
  %v2382 = vmul.f32 %v2298, 0.044715
  %v2383 = vmul.f32 %v2300, 0.044715
  %v2384 = vmul.f32 %v2304, 0.044715
  %v2385 = vmul.f32 %v2306, 0.044715
  %v2386 = vmul.f32 %v2308, 0.044715
  %v2387 = vmul.f32 %v2310, 0.044715
  %v2388 = vmul.f32 %v2314, 0.044715
  %v2389 = vmul.f32 %v2316, 0.044715
  %v2390 = vmul.f32 %v2318, 0.044715
  %v2391 = vmul.f32 %v2320, 0.044715
  %v2392 = vmul.f32 %v2324, 0.044715
  %v2393 = vmul.f32 %v2326, 0.044715
  %v2394 = vmul.f32 %v2328, 0.044715
  %v2395 = vmul.f32 %v2330, 0.044715
  %v2396 = vmul.f32 %v2364, %v2254
  %v2397 = vmul.f32 %v2365, %v2256
  %v2398 = vmul.f32 %v2366, %v2258
  %v2399 = vmul.f32 %v2367, %v2260
  %v2400 = vmul.f32 %v2368, %v2264
  %v2401 = vmul.f32 %v2369, %v2266
  %v2402 = vmul.f32 %v2370, %v2268
  %v2403 = vmul.f32 %v2371, %v2270
  %v2404 = vmul.f32 %v2372, %v2274
  %v2405 = vmul.f32 %v2373, %v2276
  %v2406 = vmul.f32 %v2374, %v2278
  %v2407 = vmul.f32 %v2375, %v2280
  %v2408 = vmul.f32 %v2376, %v2284
  %v2409 = vmul.f32 %v2377, %v2286
  %v2410 = vmul.f32 %v2378, %v2288
  %v2411 = vmul.f32 %v2379, %v2290
  %v2412 = vmul.f32 %v2380, %v2294
  %v2413 = vmul.f32 %v2381, %v2296
  %v2414 = vmul.f32 %v2382, %v2298
  %v2415 = vmul.f32 %v2383, %v2300
  %v2416 = vmul.f32 %v2384, %v2304
  %v2417 = vmul.f32 %v2385, %v2306
  %v2418 = vmul.f32 %v2386, %v2308
  %v2419 = vmul.f32 %v2387, %v2310
  %v2420 = vmul.f32 %v2388, %v2314
  %v2421 = vmul.f32 %v2389, %v2316
  %v2422 = vmul.f32 %v2390, %v2318
  %v2423 = vmul.f32 %v2391, %v2320
  %v2424 = vmul.f32 %v2392, %v2324
  %v2425 = vmul.f32 %v2393, %v2326
  %v2426 = vmul.f32 %v2394, %v2328
  %v2427 = vmul.f32 %v2395, %v2330
  %v2428 = vmul.f32 %v2396, %v2254
  %v2429 = vmul.f32 %v2397, %v2256
  %v2430 = vmul.f32 %v2398, %v2258
  %v2431 = vmul.f32 %v2399, %v2260
  %v2432 = vmul.f32 %v2400, %v2264
  %v2433 = vmul.f32 %v2401, %v2266
  %v2434 = vmul.f32 %v2402, %v2268
  %v2435 = vmul.f32 %v2403, %v2270
  %v2436 = vmul.f32 %v2404, %v2274
  %v2437 = vmul.f32 %v2405, %v2276
  %v2438 = vmul.f32 %v2406, %v2278
  %v2439 = vmul.f32 %v2407, %v2280
  %v2440 = vmul.f32 %v2408, %v2284
  %v2441 = vmul.f32 %v2409, %v2286
  %v2442 = vmul.f32 %v2410, %v2288
  %v2443 = vmul.f32 %v2411, %v2290
  %v2444 = vmul.f32 %v2412, %v2294
  %v2445 = vmul.f32 %v2413, %v2296
  %v2446 = vmul.f32 %v2414, %v2298
  %v2447 = vmul.f32 %v2415, %v2300
  %v2448 = vmul.f32 %v2416, %v2304
  %v2449 = vmul.f32 %v2417, %v2306
  %v2450 = vmul.f32 %v2418, %v2308
  %v2451 = vmul.f32 %v2419, %v2310
  %v2452 = vmul.f32 %v2420, %v2314
  %v2453 = vmul.f32 %v2421, %v2316
  %v2454 = vmul.f32 %v2422, %v2318
  %v2455 = vmul.f32 %v2423, %v2320
  %v2456 = vmul.f32 %v2424, %v2324
  %v2457 = vmul.f32 %v2425, %v2326
  %v2458 = vmul.f32 %v2426, %v2328
  %v2459 = vmul.f32 %v2427, %v2330
  %v2460 = vadd.f32 %v2254, %v2428
  %v2461 = vadd.f32 %v2256, %v2429
  %v2462 = vadd.f32 %v2258, %v2430
  %v2463 = vadd.f32 %v2260, %v2431
  %v2464 = vadd.f32 %v2264, %v2432
  %v2465 = vadd.f32 %v2266, %v2433
  %v2466 = vadd.f32 %v2268, %v2434
  %v2467 = vadd.f32 %v2270, %v2435
  %v2468 = vadd.f32 %v2274, %v2436
  %v2469 = vadd.f32 %v2276, %v2437
  %v2470 = vadd.f32 %v2278, %v2438
  %v2471 = vadd.f32 %v2280, %v2439
  %v2472 = vadd.f32 %v2284, %v2440
  %v2473 = vadd.f32 %v2286, %v2441
  %v2474 = vadd.f32 %v2288, %v2442
  %v2475 = vadd.f32 %v2290, %v2443
  %v2476 = vadd.f32 %v2294, %v2444
  %v2477 = vadd.f32 %v2296, %v2445
  %v2478 = vadd.f32 %v2298, %v2446
  %v2479 = vadd.f32 %v2300, %v2447
  %v2480 = vadd.f32 %v2304, %v2448
  %v2481 = vadd.f32 %v2306, %v2449
  %v2482 = vadd.f32 %v2308, %v2450
  %v2483 = vadd.f32 %v2310, %v2451
  %v2484 = vadd.f32 %v2314, %v2452
  %v2485 = vadd.f32 %v2316, %v2453
  %v2486 = vadd.f32 %v2318, %v2454
  %v2487 = vadd.f32 %v2320, %v2455
  %v2488 = vadd.f32 %v2324, %v2456
  %v2489 = vadd.f32 %v2326, %v2457
  %v2490 = vadd.f32 %v2328, %v2458
  %v2491 = vadd.f32 %v2330, %v2459
  %v2492 = vmul.f32 %v2460, 0.7978846
  %v2493 = vmul.f32 %v2461, 0.7978846
  %v2494 = vmul.f32 %v2462, 0.7978846
  %v2495 = vmul.f32 %v2463, 0.7978846
  %v2496 = vmul.f32 %v2464, 0.7978846
  %v2497 = vmul.f32 %v2465, 0.7978846
  %v2498 = vmul.f32 %v2466, 0.7978846
  %v2499 = vmul.f32 %v2467, 0.7978846
  %v2500 = vmul.f32 %v2468, 0.7978846
  %v2501 = vmul.f32 %v2469, 0.7978846
  %v2502 = vmul.f32 %v2470, 0.7978846
  %v2503 = vmul.f32 %v2471, 0.7978846
  %v2504 = vmul.f32 %v2472, 0.7978846
  %v2505 = vmul.f32 %v2473, 0.7978846
  %v2506 = vmul.f32 %v2474, 0.7978846
  %v2507 = vmul.f32 %v2475, 0.7978846
  %v2508 = vmul.f32 %v2476, 0.7978846
  %v2509 = vmul.f32 %v2477, 0.7978846
  %v2510 = vmul.f32 %v2478, 0.7978846
  %v2511 = vmul.f32 %v2479, 0.7978846
  %v2512 = vmul.f32 %v2480, 0.7978846
  %v2513 = vmul.f32 %v2481, 0.7978846
  %v2514 = vmul.f32 %v2482, 0.7978846
  %v2515 = vmul.f32 %v2483, 0.7978846
  %v2516 = vmul.f32 %v2484, 0.7978846
  %v2517 = vmul.f32 %v2485, 0.7978846
  %v2518 = vmul.f32 %v2486, 0.7978846
  %v2519 = vmul.f32 %v2487, 0.7978846
  %v2520 = vmul.f32 %v2488, 0.7978846
  %v2521 = vmul.f32 %v2489, 0.7978846
  %v2522 = vmul.f32 %v2490, 0.7978846
  %v2523 = vmul.f32 %v2491, 0.7978846
  %v2524 = vtanh.pop %v2492
  %v2525 = vtanh.pop %v2493
  %v2526 = vtanh.pop %v2494
  %v2527 = vtanh.pop %v2495
  %v2528 = vtanh.pop %v2496
  %v2529 = vtanh.pop %v2497
  %v2530 = vtanh.pop %v2498
  %v2531 = vtanh.pop %v2499
  %v2532 = vtanh.pop %v2500
  %v2533 = vtanh.pop %v2501
  %v2534 = vtanh.pop %v2502
  %v2535 = vtanh.pop %v2503
  %v2536 = vtanh.pop %v2504
  %v2537 = vtanh.pop %v2505
  %v2538 = vtanh.pop %v2506
  %v2539 = vtanh.pop %v2507
  %v2540 = vtanh.pop %v2508
  %v2541 = vtanh.pop %v2509
  %v2542 = vtanh.pop %v2510
  %v2543 = vtanh.pop %v2511
  %v2544 = vtanh.pop %v2512
  %v2545 = vtanh.pop %v2513
  %v2546 = vtanh.pop %v2514
  %v2547 = vtanh.pop %v2515
  %v2548 = vtanh.pop %v2516
  %v2549 = vtanh.pop %v2517
  %v2550 = vtanh.pop %v2518
  %v2551 = vtanh.pop %v2519
  %v2552 = vtanh.pop %v2520
  %v2553 = vtanh.pop %v2521
  %v2554 = vtanh.pop %v2522
  %v2555 = vtanh.pop %v2523
  %v2556 = vadd.f32 %v2524, 1.0
  %v2557 = vadd.f32 %v2525, 1.0
  %v2558 = vadd.f32 %v2526, 1.0
  %v2559 = vadd.f32 %v2527, 1.0
  %v2560 = vadd.f32 %v2528, 1.0
  %v2561 = vadd.f32 %v2529, 1.0
  %v2562 = vadd.f32 %v2530, 1.0
  %v2563 = vadd.f32 %v2531, 1.0
  %v2564 = vadd.f32 %v2532, 1.0
  %v2565 = vadd.f32 %v2533, 1.0
  %v2566 = vadd.f32 %v2534, 1.0
  %v2567 = vadd.f32 %v2535, 1.0
  %v2568 = vadd.f32 %v2536, 1.0
  %v2569 = vadd.f32 %v2537, 1.0
  %v2570 = vadd.f32 %v2538, 1.0
  %v2571 = vadd.f32 %v2539, 1.0
  %v2572 = vadd.f32 %v2540, 1.0
  %v2573 = vadd.f32 %v2541, 1.0
  %v2574 = vadd.f32 %v2542, 1.0
  %v2575 = vadd.f32 %v2543, 1.0
  %v2576 = vadd.f32 %v2544, 1.0
  %v2577 = vadd.f32 %v2545, 1.0
  %v2578 = vadd.f32 %v2546, 1.0
  %v2579 = vadd.f32 %v2547, 1.0
  %v2580 = vadd.f32 %v2548, 1.0
  %v2581 = vadd.f32 %v2549, 1.0
  %v2582 = vadd.f32 %v2550, 1.0
  %v2583 = vadd.f32 %v2551, 1.0
  %v2584 = vadd.f32 %v2552, 1.0
  %v2585 = vadd.f32 %v2553, 1.0
  %v2586 = vadd.f32 %v2554, 1.0
  %v2587 = vadd.f32 %v2555, 1.0
  %v2588 = vmul.f32 %v2332, %v2556
  %v2589 = vmul.f32 %v2333, %v2557
  %v2590 = vmul.f32 %v2334, %v2558
  %v2591 = vmul.f32 %v2335, %v2559
  %v2592 = vmul.f32 %v2336, %v2560
  %v2593 = vmul.f32 %v2337, %v2561
  %v2594 = vmul.f32 %v2338, %v2562
  %v2595 = vmul.f32 %v2339, %v2563
  %v2596 = vmul.f32 %v2340, %v2564
  %v2597 = vmul.f32 %v2341, %v2565
  %v2598 = vmul.f32 %v2342, %v2566
  %v2599 = vmul.f32 %v2343, %v2567
  %v2600 = vmul.f32 %v2344, %v2568
  %v2601 = vmul.f32 %v2345, %v2569
  %v2602 = vmul.f32 %v2346, %v2570
  %v2603 = vmul.f32 %v2347, %v2571
  %v2604 = vmul.f32 %v2348, %v2572
  %v2605 = vmul.f32 %v2349, %v2573
  %v2606 = vmul.f32 %v2350, %v2574
  %v2607 = vmul.f32 %v2351, %v2575
  %v2608 = vmul.f32 %v2352, %v2576
  %v2609 = vmul.f32 %v2353, %v2577
  %v2610 = vmul.f32 %v2354, %v2578
  %v2611 = vmul.f32 %v2355, %v2579
  %v2612 = vmul.f32 %v2356, %v2580
  %v2613 = vmul.f32 %v2357, %v2581
  %v2614 = vmul.f32 %v2358, %v2582
  %v2615 = vmul.f32 %v2359, %v2583
  %v2616 = vmul.f32 %v2360, %v2584
  %v2617 = vmul.f32 %v2361, %v2585
  %v2618 = vmul.f32 %v2362, %v2586
  %v2619 = vmul.f32 %v2363, %v2587
  %v2620 = vpack.c.bf16 %v2590, %v2588
  %v2621 = vpack.c.bf16 %v2591, %v2589
  %v2622 = vpack.c.bf16 %v2594, %v2592
  %v2623 = vpack.c.bf16 %v2595, %v2593
  %v2624 = vpack.c.bf16 %v2598, %v2596
  %v2625 = vpack.c.bf16 %v2599, %v2597
  %v2626 = vpack.c.bf16 %v2602, %v2600
  %v2627 = vpack.c.bf16 %v2603, %v2601
  %v2628 = vpack.c.bf16 %v2606, %v2604
  %v2629 = vpack.c.bf16 %v2607, %v2605
  %v2630 = vpack.c.bf16 %v2610, %v2608
  %v2631 = vpack.c.bf16 %v2611, %v2609
  %v2632 = vpack.c.bf16 %v2614, %v2612
  %v2633 = vpack.c.bf16 %v2615, %v2613
  %v2634 = vpack.c.bf16 %v2618, %v2616
  %v2635 = vpack.c.bf16 %v2619, %v2617
  %v2636 = vld [vmem:[%s12] sm:$0xf]
  %v2637 = vld [vmem:[%s12 + $0x4] sm:$0xf]
  %v2638 = vld [vmem:[%s12 + $0x8] sm:$0xf]
  %v2639 = vld [vmem:[%s12 + $0xc] sm:$0xf]
  %v2640 = vld [vmem:[%s12 + $0x10] sm:$0xf]
  %v2641 = vld [vmem:[%s12 + $0x14] sm:$0xf]
  %v2642 = vld [vmem:[%s12 + $0x18] sm:$0xf]
  %v2643 = vld [vmem:[%s12 + $0x1c] sm:$0xf]
  %v2644 = vld [vmem:[%s12 + $0x20] sm:$0xf]
  %v2645 = vld [vmem:[%s12 + $0x24] sm:$0xf]
  %v2646 = vld [vmem:[%s12 + $0x28] sm:$0xf]
  %v2647 = vld [vmem:[%s12 + $0x2c] sm:$0xf]
  %v2648 = vld [vmem:[%s12 + $0x30] sm:$0xf]
  %v2649 = vld [vmem:[%s12 + $0x34] sm:$0xf]
  %v2650 = vld [vmem:[%s12 + $0x38] sm:$0xf]
  %v2651 = vld [vmem:[%s12 + $0x3c] sm:$0xf]
  %v2652 = vld [vmem:[%s12 + $0x40] sm:$0xf]
  %v2653 = vld [vmem:[%s12 + $0x44] sm:$0xf]
  %v2654 = vld [vmem:[%s12 + $0x48] sm:$0xf]
  %v2655 = vld [vmem:[%s12 + $0x4c] sm:$0xf]
  %v2656 = vld [vmem:[%s12 + $0x50] sm:$0xf]
  %v2657 = vld [vmem:[%s12 + $0x54] sm:$0xf]
  %v2658 = vld [vmem:[%s12 + $0x58] sm:$0xf]
  %v2659 = vld [vmem:[%s12 + $0x5c] sm:$0xf]
  %v2660 = vld [vmem:[%s12 + $0x60] sm:$0xf]
  %v2661 = vld [vmem:[%s12 + $0x64] sm:$0xf]
  %v2662 = vld [vmem:[%s12 + $0x68] sm:$0xf]
  %v2663 = vld [vmem:[%s12 + $0x6c] sm:$0xf]
  %v2664 = vld [vmem:[%s12 + $0x70] sm:$0xf]
  %v2665 = vld [vmem:[%s12 + $0x74] sm:$0xf]
  %v2666 = vld [vmem:[%s12 + $0x78] sm:$0xf]
  %v2667 = vld [vmem:[%s12 + $0x7c] sm:$0xf]
  %v2668 = vld [vmem:[%s13] sm:$0x1]
  %v2670 = vlaneseq
  %v2671 = vshrl.u32 %v2670, 7
  %v2672 = vsub.s32 0, %v2671
  %v2673 = vrot.slane %v2668, %v2672
  %v2707 = vunpack.c.l.b16 %v2636
  %v2708 = vunpack.c.l.b16 %v2637
  %v2709 = vunpack.c.l.b16 %v2638
  %v2710 = vunpack.c.l.b16 %v2639
  %v2711 = vunpack.c.l.b16 %v2640
  %v2712 = vunpack.c.l.b16 %v2641
  %v2713 = vunpack.c.l.b16 %v2642
  %v2714 = vunpack.c.l.b16 %v2643
  %v2715 = vunpack.c.l.b16 %v2644
  %v2716 = vunpack.c.l.b16 %v2645
  %v2717 = vunpack.c.l.b16 %v2646
  %v2718 = vunpack.c.l.b16 %v2647
  %v2719 = vunpack.c.l.b16 %v2648
  %v2720 = vunpack.c.l.b16 %v2649
  %v2721 = vunpack.c.l.b16 %v2650
  %v2722 = vunpack.c.l.b16 %v2651
  %v2723 = vunpack.c.l.b16 %v2652
  %v2724 = vunpack.c.l.b16 %v2653
  %v2725 = vunpack.c.l.b16 %v2654
  %v2726 = vunpack.c.l.b16 %v2655
  %v2727 = vunpack.c.l.b16 %v2656
  %v2728 = vunpack.c.l.b16 %v2657
  %v2729 = vunpack.c.l.b16 %v2658
  %v2730 = vunpack.c.l.b16 %v2659
  %v2731 = vunpack.c.l.b16 %v2660
  %v2732 = vunpack.c.l.b16 %v2661
  %v2733 = vunpack.c.l.b16 %v2662
  %v2734 = vunpack.c.l.b16 %v2663
  %v2735 = vunpack.c.l.b16 %v2664
  %v2736 = vunpack.c.l.b16 %v2665
  %v2737 = vunpack.c.l.b16 %v2666
  %v2738 = vunpack.c.l.b16 %v2667
  %v2739 = vpack.c.b16 %v2708, %v2707
  %v2740 = vpack.c.b16 %v2710, %v2709
  %v2741 = vpack.c.b16 %v2712, %v2711
  %v2742 = vpack.c.b16 %v2714, %v2713
  %v2743 = vpack.c.b16 %v2716, %v2715
  %v2744 = vpack.c.b16 %v2718, %v2717
  %v2745 = vpack.c.b16 %v2720, %v2719
  %v2746 = vpack.c.b16 %v2722, %v2721
  %v2747 = vpack.c.b16 %v2724, %v2723
  %v2748 = vpack.c.b16 %v2726, %v2725
  %v2749 = vpack.c.b16 %v2728, %v2727
  %v2750 = vpack.c.b16 %v2730, %v2729
  %v2751 = vpack.c.b16 %v2732, %v2731
  %v2752 = vpack.c.b16 %v2734, %v2733
  %v2753 = vpack.c.b16 %v2736, %v2735
  %v2754 = vpack.c.b16 %v2738, %v2737
  %2771 = vmatprep.subr.bf16.mxu0 0
  %2772 = vmatpush1.bf16.msra.mxu0 %v2746
  %2773 = vmatprep.subr.bf16.mxu0 0
  %2774 = vmatpush1.bf16.msra.mxu0 %v2745
  %2775 = vmatprep.subr.bf16.mxu0 0
  %2776 = vmatpush1.bf16.msra.mxu0 %v2744
  %2777 = vmatprep.subr.bf16.mxu0 0
  %2778 = vmatpush1.bf16.msra.mxu0 %v2743
  %2779 = vmatprep.subr.bf16.mxu0 0
  %2780 = vmatpush1.bf16.msra.mxu0 %v2742
  %2781 = vmatprep.subr.bf16.mxu0 0
  %2782 = vmatpush1.bf16.msra.mxu0 %v2741
  %2783 = vmatprep.subr.bf16.mxu0 0
  %2784 = vmatpush1.bf16.msra.mxu0 %v2740
  %2785 = vmatprep.subr.bf16.mxu0 0
  %2786 = vmatpush1.bf16.msra.mxu0 %v2739
  %2787 = vmatprep.subr.bf16.mxu0 0
  %2788 = vmatpush2.bf16.msra.mxu0 %v2754
  %2789 = vmatprep.subr.bf16.mxu0 0
  %2790 = vmatpush2.bf16.msra.mxu0 %v2753
  %2791 = vmatprep.subr.bf16.mxu0 0
  %2792 = vmatpush2.bf16.msra.mxu0 %v2752
  %2793 = vmatprep.subr.bf16.mxu0 0
  %2794 = vmatpush2.bf16.msra.mxu0 %v2751
  %2795 = vmatprep.subr.bf16.mxu0 0
  %2796 = vmatpush2.bf16.msra.mxu0 %v2750
  %2797 = vmatprep.subr.bf16.mxu0 0
  %2798 = vmatpush2.bf16.msra.mxu0 %v2749
  %2799 = vmatprep.subr.bf16.mxu0 0
  %2800 = vmatpush2.bf16.msra.mxu0 %v2748
  %2801 = vmatprep.subr.bf16.mxu0 0
  %2802 = vmatpush2.bf16.msra.mxu0 %v2747
  %2803 = vmatprep.mubr.bf16.mxu0 %v2621
  %2804 = vmatmul.mubr.bf16.gmra.mxu0 %v2620
  %v2805 = vpop.f32.mrf.mxu0
  %v2806 = vadd.f32 %v2673, %v2805
  %v2807 = vpop.f32.mrf.mxu0
  %v2808 = vpop.f32.mrf.mxu0
  %v2809 = vadd.f32 %v2673, %v2808
  %v2810 = vpop.f32.mrf.mxu0
  %2811 = vmatprep.mubr.bf16.mxu0 %v2623
  %2812 = vmatmul.mubr.bf16.gmra.mxu0 %v2622
  %v2813 = vpop.f32.mrf.mxu0
  %v2814 = vadd.f32 %v2673, %v2813
  %v2815 = vpop.f32.mrf.mxu0
  %v2816 = vpop.f32.mrf.mxu0
  %v2817 = vadd.f32 %v2673, %v2816
  %v2818 = vpop.f32.mrf.mxu0
  %2819 = vmatprep.mubr.bf16.mxu0 %v2625
  %2820 = vmatmul.mubr.bf16.gmra.mxu0 %v2624
  %v2821 = vpop.f32.mrf.mxu0
  %v2822 = vadd.f32 %v2673, %v2821
  %v2823 = vpop.f32.mrf.mxu0
  %v2824 = vpop.f32.mrf.mxu0
  %v2825 = vadd.f32 %v2673, %v2824
  %v2826 = vpop.f32.mrf.mxu0
  %2827 = vmatprep.mubr.bf16.mxu0 %v2627
  %2828 = vmatmul.mubr.bf16.gmra.mxu0 %v2626
  %v2829 = vpop.f32.mrf.mxu0
  %v2830 = vadd.f32 %v2673, %v2829
  %v2831 = vpop.f32.mrf.mxu0
  %v2832 = vpop.f32.mrf.mxu0
  %v2833 = vadd.f32 %v2673, %v2832
  %v2834 = vpop.f32.mrf.mxu0
  %2835 = vmatprep.mubr.bf16.mxu0 %v2629
  %2836 = vmatmul.mubr.bf16.gmra.mxu0 %v2628
  %v2837 = vpop.f32.mrf.mxu0
  %v2838 = vadd.f32 %v2673, %v2837
  %v2839 = vpop.f32.mrf.mxu0
  %v2840 = vpop.f32.mrf.mxu0
  %v2841 = vadd.f32 %v2673, %v2840
  %v2842 = vpop.f32.mrf.mxu0
  %2843 = vmatprep.mubr.bf16.mxu0 %v2631
  %2844 = vmatmul.mubr.bf16.gmra.mxu0 %v2630
  %v2845 = vpop.f32.mrf.mxu0
  %v2846 = vadd.f32 %v2673, %v2845
  %v2847 = vpop.f32.mrf.mxu0
  %v2848 = vpop.f32.mrf.mxu0
  %v2849 = vadd.f32 %v2673, %v2848
  %v2850 = vpop.f32.mrf.mxu0
  %2851 = vmatprep.mubr.bf16.mxu0 %v2633
  %2852 = vmatmul.mubr.bf16.gmra.mxu0 %v2632
  %v2853 = vpop.f32.mrf.mxu0
  %v2854 = vadd.f32 %v2673, %v2853
  %v2855 = vpop.f32.mrf.mxu0
  %v2856 = vpop.f32.mrf.mxu0
  %v2857 = vadd.f32 %v2673, %v2856
  %v2858 = vpop.f32.mrf.mxu0
  %2859 = vmatprep.mubr.bf16.mxu0 %v2635
  %2860 = vmatmul.mubr.bf16.gmra.mxu0 %v2634
  %v2861 = vpop.f32.mrf.mxu0
  %v2862 = vadd.f32 %v2673, %v2861
  %v2863 = vpop.f32.mrf.mxu0
  %v2864 = vpop.f32.mrf.mxu0
  %v2865 = vadd.f32 %v2673, %v2864
  %v2866 = vpop.f32.mrf.mxu0
  %2867 = vdwg.mxu0
  %v2868 = vadd.f32 %v2087, %v2806
  %v2869 = vadd.f32 %v2088, %v2809
  %v2870 = vadd.f32 %v2089, %v2814
  %v2871 = vadd.f32 %v2090, %v2817
  %v2872 = vadd.f32 %v2091, %v2822
  %v2873 = vadd.f32 %v2092, %v2825
  %v2874 = vadd.f32 %v2093, %v2830
  %v2875 = vadd.f32 %v2094, %v2833
  %v2876 = vadd.f32 %v2095, %v2838
  %v2877 = vadd.f32 %v2096, %v2841
  %v2878 = vadd.f32 %v2097, %v2846
  %v2879 = vadd.f32 %v2098, %v2849
  %v2880 = vadd.f32 %v2099, %v2854
  %v2881 = vadd.f32 %v2100, %v2857
  %v2882 = vadd.f32 %v2101, %v2862
  %v2883 = vadd.f32 %v2102, %v2865
  %v2884 = vld [vmem:[%s14] sm:$0x1]
  %v2885 = vld [vmem:[%s15] sm:$0x1]
  %2886 = vadd.xlane.f32.xlu0 %v2868
  %v2887 = vpop.xlane.xlu0 %2886
  %2888 = vadd.xlane.f32.xlu0 %v2869
  %v2889 = vpop.xlane.xlu0 %2888
  %2890 = vadd.xlane.f32.xlu0 %v2870
  %v2891 = vpop.xlane.xlu0 %2890
  %2892 = vadd.xlane.f32.xlu0 %v2871
  %v2893 = vpop.xlane.xlu0 %2892
  %2894 = vadd.xlane.f32.xlu0 %v2872
  %v2895 = vpop.xlane.xlu0 %2894
  %2896 = vadd.xlane.f32.xlu0 %v2873
  %v2897 = vpop.xlane.xlu0 %2896
  %2898 = vadd.xlane.f32.xlu0 %v2874
  %v2899 = vpop.xlane.xlu0 %2898
  %2900 = vadd.xlane.f32.xlu0 %v2875
  %v2901 = vpop.xlane.xlu0 %2900
  %2902 = vadd.xlane.f32.xlu0 %v2876
  %v2903 = vpop.xlane.xlu0 %2902
  %2904 = vadd.xlane.f32.xlu0 %v2877
  %v2905 = vpop.xlane.xlu0 %2904
  %2906 = vadd.xlane.f32.xlu0 %v2878
  %v2907 = vpop.xlane.xlu0 %2906
  %2908 = vadd.xlane.f32.xlu0 %v2879
  %v2909 = vpop.xlane.xlu0 %2908
  %2910 = vadd.xlane.f32.xlu0 %v2880
  %v2911 = vpop.xlane.xlu0 %2910
  %2912 = vadd.xlane.f32.xlu0 %v2881
  %v2913 = vpop.xlane.xlu0 %2912
  %2914 = vadd.xlane.f32.xlu0 %v2882
  %v2915 = vpop.xlane.xlu0 %2914
  %2916 = vadd.xlane.f32.xlu0 %v2883
  %v2917 = vpop.xlane.xlu0 %2916
  %v2918 = vmul.f32 %v2887, %v116
  %v2919 = vmul.f32 %v2889, %v116
  %v2920 = vmul.f32 %v2891, %v116
  %v2921 = vmul.f32 %v2893, %v116
  %v2922 = vmul.f32 %v2895, %v116
  %v2923 = vmul.f32 %v2897, %v116
  %v2924 = vmul.f32 %v2899, %v116
  %v2925 = vmul.f32 %v2901, %v116
  %v2926 = vmul.f32 %v2903, %v116
  %v2927 = vmul.f32 %v2905, %v116
  %v2928 = vmul.f32 %v2907, %v116
  %v2929 = vmul.f32 %v2909, %v116
  %v2930 = vmul.f32 %v2911, %v116
  %v2931 = vmul.f32 %v2913, %v116
  %v2932 = vmul.f32 %v2915, %v116
  %v2933 = vmul.f32 %v2917, %v116
  %v2934 = vsub.f32 %v2868, %v2918
  %v2935 = vsub.f32 %v2869, %v2919
  %v2936 = vsub.f32 %v2870, %v2920
  %v2937 = vsub.f32 %v2871, %v2921
  %v2938 = vsub.f32 %v2872, %v2922
  %v2939 = vsub.f32 %v2873, %v2923
  %v2940 = vsub.f32 %v2874, %v2924
  %v2941 = vsub.f32 %v2875, %v2925
  %v2942 = vsub.f32 %v2876, %v2926
  %v2943 = vsub.f32 %v2877, %v2927
  %v2944 = vsub.f32 %v2878, %v2928
  %v2945 = vsub.f32 %v2879, %v2929
  %v2946 = vsub.f32 %v2880, %v2930
  %v2947 = vsub.f32 %v2881, %v2931
  %v2948 = vsub.f32 %v2882, %v2932
  %v2949 = vsub.f32 %v2883, %v2933
  %v2950 = vmul.f32 %v2934, %v2934
  %v2951 = vmul.f32 %v2935, %v2935
  %v2952 = vmul.f32 %v2936, %v2936
  %v2953 = vmul.f32 %v2937, %v2937
  %v2954 = vmul.f32 %v2938, %v2938
  %v2955 = vmul.f32 %v2939, %v2939
  %v2956 = vmul.f32 %v2940, %v2940
  %v2957 = vmul.f32 %v2941, %v2941
  %v2958 = vmul.f32 %v2942, %v2942
  %v2959 = vmul.f32 %v2943, %v2943
  %v2960 = vmul.f32 %v2944, %v2944
  %v2961 = vmul.f32 %v2945, %v2945
  %v2962 = vmul.f32 %v2946, %v2946
  %v2963 = vmul.f32 %v2947, %v2947
  %v2964 = vmul.f32 %v2948, %v2948
  %v2965 = vmul.f32 %v2949, %v2949
  %2966 = vadd.xlane.f32.xlu0 %v2950
  %v2967 = vpop.xlane.xlu0 %2966
  %2968 = vadd.xlane.f32.xlu0 %v2951
  %v2969 = vpop.xlane.xlu0 %2968
  %2970 = vadd.xlane.f32.xlu0 %v2952
  %v2971 = vpop.xlane.xlu0 %2970
  %2972 = vadd.xlane.f32.xlu0 %v2953
  %v2973 = vpop.xlane.xlu0 %2972
  %2974 = vadd.xlane.f32.xlu0 %v2954
  %v2975 = vpop.xlane.xlu0 %2974
  %2976 = vadd.xlane.f32.xlu0 %v2955
  %v2977 = vpop.xlane.xlu0 %2976
  %2978 = vadd.xlane.f32.xlu0 %v2956
  %v2979 = vpop.xlane.xlu0 %2978
  %2980 = vadd.xlane.f32.xlu0 %v2957
  %v2981 = vpop.xlane.xlu0 %2980
  %2982 = vadd.xlane.f32.xlu0 %v2958
  %v2983 = vpop.xlane.xlu0 %2982
  %2984 = vadd.xlane.f32.xlu0 %v2959
  %v2985 = vpop.xlane.xlu0 %2984
  %2986 = vadd.xlane.f32.xlu0 %v2960
  %v2987 = vpop.xlane.xlu0 %2986
  %2988 = vadd.xlane.f32.xlu0 %v2961
  %v2989 = vpop.xlane.xlu0 %2988
  %2990 = vadd.xlane.f32.xlu0 %v2962
  %v2991 = vpop.xlane.xlu0 %2990
  %2992 = vadd.xlane.f32.xlu0 %v2963
  %v2993 = vpop.xlane.xlu0 %2992
  %2994 = vadd.xlane.f32.xlu0 %v2964
  %v2995 = vpop.xlane.xlu0 %2994
  %2996 = vadd.xlane.f32.xlu0 %v2965
  %v2997 = vpop.xlane.xlu0 %2996
  %v2998 = vmul.f32 %v2967, %v116
  %v2999 = vmul.f32 %v2969, %v116
  %v3000 = vmul.f32 %v2971, %v116
  %v3001 = vmul.f32 %v2973, %v116
  %v3002 = vmul.f32 %v2975, %v116
  %v3003 = vmul.f32 %v2977, %v116
  %v3004 = vmul.f32 %v2979, %v116
  %v3005 = vmul.f32 %v2981, %v116
  %v3006 = vmul.f32 %v2983, %v116
  %v3007 = vmul.f32 %v2985, %v116
  %v3008 = vmul.f32 %v2987, %v116
  %v3009 = vmul.f32 %v2989, %v116
  %v3010 = vmul.f32 %v2991, %v116
  %v3011 = vmul.f32 %v2993, %v116
  %v3012 = vmul.f32 %v2995, %v116
  %v3013 = vmul.f32 %v2997, %v116
  %v3014 = vadd.f32 %v2998, 1e-12
  %v3015 = vadd.f32 %v2999, 1e-12
  %v3016 = vadd.f32 %v3000, 1e-12
  %v3017 = vadd.f32 %v3001, 1e-12
  %v3018 = vadd.f32 %v3002, 1e-12
  %v3019 = vadd.f32 %v3003, 1e-12
  %v3020 = vadd.f32 %v3004, 1e-12
  %v3021 = vadd.f32 %v3005, 1e-12
  %v3022 = vadd.f32 %v3006, 1e-12
  %v3023 = vadd.f32 %v3007, 1e-12
  %v3024 = vadd.f32 %v3008, 1e-12
  %v3025 = vadd.f32 %v3009, 1e-12
  %v3026 = vadd.f32 %v3010, 1e-12
  %v3027 = vadd.f32 %v3011, 1e-12
  %v3028 = vadd.f32 %v3012, 1e-12
  %v3029 = vadd.f32 %v3013, 1e-12
  %v3030 = vrsqrt.pop %v3014
  %v3031 = vrsqrt.pop %v3015
  %v3032 = vrsqrt.pop %v3016
  %v3033 = vrsqrt.pop %v3017
  %v3034 = vrsqrt.pop %v3018
  %v3035 = vrsqrt.pop %v3019
  %v3036 = vrsqrt.pop %v3020
  %v3037 = vrsqrt.pop %v3021
  %v3038 = vrsqrt.pop %v3022
  %v3039 = vrsqrt.pop %v3023
  %v3040 = vrsqrt.pop %v3024
  %v3041 = vrsqrt.pop %v3025
  %v3042 = vrsqrt.pop %v3026
  %v3043 = vrsqrt.pop %v3027
  %v3044 = vrsqrt.pop %v3028
  %v3045 = vrsqrt.pop %v3029
  %v3046 = vmul.f32 %v2934, %v3030
  %v3047 = vmul.f32 %v2935, %v3031
  %v3048 = vmul.f32 %v2936, %v3032
  %v3049 = vmul.f32 %v2937, %v3033
  %v3050 = vmul.f32 %v2938, %v3034
  %v3051 = vmul.f32 %v2939, %v3035
  %v3052 = vmul.f32 %v2940, %v3036
  %v3053 = vmul.f32 %v2941, %v3037
  %v3054 = vmul.f32 %v2942, %v3038
  %v3055 = vmul.f32 %v2943, %v3039
  %v3056 = vmul.f32 %v2944, %v3040
  %v3057 = vmul.f32 %v2945, %v3041
  %v3058 = vmul.f32 %v2946, %v3042
  %v3059 = vmul.f32 %v2947, %v3043
  %v3060 = vmul.f32 %v2948, %v3044
  %v3061 = vmul.f32 %v2949, %v3045
  %v3063 = vlaneseq
  %v3064 = vshrl.u32 %v3063, 7
  %v3065 = vsub.s32 0, %v3064
  %v3066 = vrot.slane %v2884, %v3065
  %v3068 = vmul.f32 %v3046, %v3066
  %v3069 = vmul.f32 %v3047, %v3066
  %v3070 = vmul.f32 %v3048, %v3066
  %v3071 = vmul.f32 %v3049, %v3066
  %v3072 = vmul.f32 %v3050, %v3066
  %v3073 = vmul.f32 %v3051, %v3066
  %v3074 = vmul.f32 %v3052, %v3066
  %v3075 = vmul.f32 %v3053, %v3066
  %v3076 = vmul.f32 %v3054, %v3066
  %v3077 = vmul.f32 %v3055, %v3066
  %v3078 = vmul.f32 %v3056, %v3066
  %v3079 = vmul.f32 %v3057, %v3066
  %v3080 = vmul.f32 %v3058, %v3066
  %v3081 = vmul.f32 %v3059, %v3066
  %v3082 = vmul.f32 %v3060, %v3066
  %v3083 = vmul.f32 %v3061, %v3066
  %v3085 = vlaneseq
  %v3086 = vshrl.u32 %v3085, 7
  %v3087 = vsub.s32 0, %v3086
  %v3088 = vrot.slane %v2885, %v3087
  %v3090 = vadd.f32 %v3068, %v3088
  %v3091 = vadd.f32 %v3069, %v3088
  %v3092 = vadd.f32 %v3070, %v3088
  %v3093 = vadd.f32 %v3071, %v3088
  %v3094 = vadd.f32 %v3072, %v3088
  %v3095 = vadd.f32 %v3073, %v3088
  %v3096 = vadd.f32 %v3074, %v3088
  %v3097 = vadd.f32 %v3075, %v3088
  %v3098 = vadd.f32 %v3076, %v3088
  %v3099 = vadd.f32 %v3077, %v3088
  %v3100 = vadd.f32 %v3078, %v3088
  %v3101 = vadd.f32 %v3079, %v3088
  %v3102 = vadd.f32 %v3080, %v3088
  %v3103 = vadd.f32 %v3081, %v3088
  %v3104 = vadd.f32 %v3082, %v3088
  %v3105 = vadd.f32 %v3083, %v3088
  %v3106 = vpack.c.bf16 %v3091, %v3090
  %v3107 = vpack.c.bf16 %v3093, %v3092
  %v3108 = vpack.c.bf16 %v3095, %v3094
  %v3109 = vpack.c.bf16 %v3097, %v3096
  %v3110 = vpack.c.bf16 %v3099, %v3098
  %v3111 = vpack.c.bf16 %v3101, %v3100
  %v3112 = vpack.c.bf16 %v3103, %v3102
  %v3113 = vpack.c.bf16 %v3105, %v3104
  %s3114 = scalar_lea.vmem %s4, 192
  %v3115 = vld [vmem:[%s3114] sm:$0xff]
  %v3116 = vld [vmem:[%s3114 + $0x8] sm:$0xf]
  %v3117 = vld [vmem:[%s3114 + $0xc] sm:$0xff]
  %v3118 = vld [vmem:[%s3114 + $0x14] sm:$0xf]
  %v3119 = vld [vmem:[%s3114 + $0x18] sm:$0xff]
  %v3120 = vld [vmem:[%s3114 + $0x20] sm:$0xf]
  %v3121 = vld [vmem:[%s3114 + $0x24] sm:$0xff]
  %v3122 = vld [vmem:[%s3114 + $0x2c] sm:$0xf]
  %v3123 = vld [vmem:[%s3114 + $0x30] sm:$0xff]
  %v3124 = vld [vmem:[%s3114 + $0x38] sm:$0xf]
  %v3125 = vld [vmem:[%s3114 + $0x3c] sm:$0xff]
  %v3126 = vld [vmem:[%s3114 + $0x44] sm:$0xf]
  %v3127 = vld [vmem:[%s3114 + $0x48] sm:$0xff]
  %v3128 = vld [vmem:[%s3114 + $0x50] sm:$0xf]
  %v3129 = vld [vmem:[%s3114 + $0x54] sm:$0xff]
  %v3130 = vld [vmem:[%s3114 + $0x5c] sm:$0xf]
  %v3131 = vld [vmem:[%s3114 + $0x60] sm:$0xff]
  %v3132 = vld [vmem:[%s3114 + $0x68] sm:$0xf]
  %v3133 = vld [vmem:[%s3114 + $0x6c] sm:$0xff]
  %v3134 = vld [vmem:[%s3114 + $0x74] sm:$0xf]
  %v3135 = vld [vmem:[%s3114 + $0x78] sm:$0xff]
  %v3136 = vld [vmem:[%s3114 + $0x80] sm:$0xf]
  %v3137 = vld [vmem:[%s3114 + $0x84] sm:$0xff]
  %v3138 = vld [vmem:[%s3114 + $0x8c] sm:$0xf]
  %v3139 = vld [vmem:[%s3114 + $0x90] sm:$0xff]
  %v3140 = vld [vmem:[%s3114 + $0x98] sm:$0xf]
  %v3141 = vld [vmem:[%s3114 + $0x9c] sm:$0xff]
  %v3142 = vld [vmem:[%s3114 + $0xa4] sm:$0xf]
  %v3143 = vld [vmem:[%s3114 + $0xa8] sm:$0xff]
  %v3144 = vld [vmem:[%s3114 + $0xb0] sm:$0xf]
  %v3145 = vld [vmem:[%s3114 + $0xb4] sm:$0xff]
  %v3146 = vld [vmem:[%s3114 + $0xbc] sm:$0xf]
  %s3147 = scalar_lea.vmem %s5, 3
  %v3148 = vld [vmem:[%s3147] sm:$0x7]
  %v3150 = vlaneseq
  %v3151 = vshrl.u32 %v3150, 7
  %v3152 = vsub.s32 0, %v3151
  %v3153 = vrot.slane %v3148, %v3152
  %v3154 = vlaneseq
  %v3155 = vshrl.u32 %v3154, 7
  %v3156 = vsub.s32 1, %v3155
  %v3157 = vrot.slane %v3148, %v3156
  %v3158 = vlaneseq
  %v3159 = vshrl.u32 %v3158, 7
  %v3160 = vsub.s32 2, %v3159
  %v3161 = vrot.slane %v3148, %v3160
  %v3197 = vunpack.c.l.b16 %v3115
  %v3198 = vunpack.c.h.b16 %v3115
  %v3199 = vunpack.c.l.b16 %v3116
  %v3200 = vunpack.c.l.b16 %v3117
  %v3201 = vunpack.c.h.b16 %v3117
  %v3202 = vunpack.c.l.b16 %v3118
  %v3203 = vunpack.c.l.b16 %v3119
  %v3204 = vunpack.c.h.b16 %v3119
  %v3205 = vunpack.c.l.b16 %v3120
  %v3206 = vunpack.c.l.b16 %v3121
  %v3207 = vunpack.c.h.b16 %v3121
  %v3208 = vunpack.c.l.b16 %v3122
  %v3209 = vunpack.c.l.b16 %v3123
  %v3210 = vunpack.c.h.b16 %v3123
  %v3211 = vunpack.c.l.b16 %v3124
  %v3212 = vunpack.c.l.b16 %v3125
  %v3213 = vunpack.c.h.b16 %v3125
  %v3214 = vunpack.c.l.b16 %v3126
  %v3215 = vunpack.c.l.b16 %v3127
  %v3216 = vunpack.c.h.b16 %v3127
  %v3217 = vunpack.c.l.b16 %v3128
  %v3218 = vunpack.c.l.b16 %v3129
  %v3219 = vunpack.c.h.b16 %v3129
  %v3220 = vunpack.c.l.b16 %v3130
  %v3221 = vunpack.c.l.b16 %v3131
  %v3222 = vunpack.c.h.b16 %v3131
  %v3223 = vunpack.c.l.b16 %v3132
  %v3224 = vunpack.c.l.b16 %v3133
  %v3225 = vunpack.c.h.b16 %v3133
  %v3226 = vunpack.c.l.b16 %v3134
  %v3227 = vunpack.c.l.b16 %v3135
  %v3228 = vunpack.c.h.b16 %v3135
  %v3229 = vunpack.c.l.b16 %v3136
  %v3230 = vunpack.c.l.b16 %v3137
  %v3231 = vunpack.c.h.b16 %v3137
  %v3232 = vunpack.c.l.b16 %v3138
  %v3233 = vunpack.c.l.b16 %v3139
  %v3234 = vunpack.c.h.b16 %v3139
  %v3235 = vunpack.c.l.b16 %v3140
  %v3236 = vunpack.c.l.b16 %v3141
  %v3237 = vunpack.c.h.b16 %v3141
  %v3238 = vunpack.c.l.b16 %v3142
  %v3239 = vunpack.c.l.b16 %v3143
  %v3240 = vunpack.c.h.b16 %v3143
  %v3241 = vunpack.c.l.b16 %v3144
  %v3242 = vunpack.c.l.b16 %v3145
  %v3243 = vunpack.c.h.b16 %v3145
  %v3244 = vunpack.c.l.b16 %v3146
  %v3245 = vpack.c.b16 %v3200, %v3197
  %v3246 = vpack.c.b16 %v3201, %v3198
  %v3247 = vpack.c.b16 %v3202, %v3199
  %v3248 = vpack.c.b16 %v3206, %v3203
  %v3249 = vpack.c.b16 %v3207, %v3204
  %v3250 = vpack.c.b16 %v3208, %v3205
  %v3251 = vpack.c.b16 %v3212, %v3209
  %v3252 = vpack.c.b16 %v3213, %v3210
  %v3253 = vpack.c.b16 %v3214, %v3211
  %v3254 = vpack.c.b16 %v3218, %v3215
  %v3255 = vpack.c.b16 %v3219, %v3216
  %v3256 = vpack.c.b16 %v3220, %v3217
  %v3257 = vpack.c.b16 %v3224, %v3221
  %v3258 = vpack.c.b16 %v3225, %v3222
  %v3259 = vpack.c.b16 %v3226, %v3223
  %v3260 = vpack.c.b16 %v3230, %v3227
  %v3261 = vpack.c.b16 %v3231, %v3228
  %v3262 = vpack.c.b16 %v3232, %v3229
  %v3263 = vpack.c.b16 %v3236, %v3233
  %v3264 = vpack.c.b16 %v3237, %v3234
  %v3265 = vpack.c.b16 %v3238, %v3235
  %v3266 = vpack.c.b16 %v3242, %v3239
  %v3267 = vpack.c.b16 %v3243, %v3240
  %v3268 = vpack.c.b16 %v3244, %v3241
  %3293 = vmatprep.subr.bf16.mxu0 %v3267
  %3294 = vmatpush1.bf16.msra.mxu0 %v3266
  %3295 = vmatprep.subr.bf16.mxu0 %v3264
  %3296 = vmatpush1.bf16.msra.mxu0 %v3263
  %3297 = vmatprep.subr.bf16.mxu0 %v3261
  %3298 = vmatpush1.bf16.msra.mxu0 %v3260
  %3299 = vmatprep.subr.bf16.mxu0 %v3258
  %3300 = vmatpush1.bf16.msra.mxu0 %v3257
  %3301 = vmatprep.subr.bf16.mxu0 %v3255
  %3302 = vmatpush1.bf16.msra.mxu0 %v3254
  %3303 = vmatprep.subr.bf16.mxu0 %v3252
  %3304 = vmatpush1.bf16.msra.mxu0 %v3251
  %3305 = vmatprep.subr.bf16.mxu0 %v3249
  %3306 = vmatpush1.bf16.msra.mxu0 %v3248
  %3307 = vmatprep.subr.bf16.mxu0 %v3246
  %3308 = vmatpush1.bf16.msra.mxu0 %v3245
  %3309 = vmatprep.subr.bf16.mxu0 0
  %3310 = vmatpush2.bf16.msra.mxu0 0
  %3311 = vmatprep.subr.bf16.mxu0 0
  %3312 = vmatpush2.bf16.msra.mxu0 0
  %3313 = vmatprep.subr.bf16.mxu0 0
  %3314 = vmatpush2.bf16.msra.mxu0 0
  %3315 = vmatprep.subr.bf16.mxu0 0
  %3316 = vmatpush2.bf16.msra.mxu0 0
  %3317 = vmatprep.subr.bf16.mxu0 0
  %3318 = vmatpush2.bf16.msra.mxu0 0
  %3319 = vmatprep.subr.bf16.mxu0 0
  %3320 = vmatpush2.bf16.msra.mxu0 0
  %3321 = vmatprep.subr.bf16.mxu0 0
  %3322 = vmatpush2.bf16.msra.mxu0 0
  %3323 = vmatprep.subr.bf16.mxu0 0
  %3324 = vmatpush2.bf16.msra.mxu0 0
  %3325 = vmatprep.mubr.bf16.mxu0 0
  %3326 = vmatmul.mubr.bf16.gmra.mxu0 %v3106
  %v3327 = vpop.f32.mrf.mxu0
  %v3328 = vadd.f32 %v3153, %v3327
  %v3329 = vpop.f32.mrf.mxu0
  %v3330 = vadd.f32 %v3157, %v3329
  %v3331 = vpop.f32.mrf.mxu0
  %v3332 = vadd.f32 %v3153, %v3331
  %v3333 = vpop.f32.mrf.mxu0
  %v3334 = vadd.f32 %v3157, %v3333
  %3335 = vmatprep.mubr.bf16.mxu0 0
  %3336 = vmatmul.mubr.bf16.gmra.mxu0 %v3107
  %v3337 = vpop.f32.mrf.mxu0
  %v3338 = vadd.f32 %v3153, %v3337
  %v3339 = vpop.f32.mrf.mxu0
  %v3340 = vadd.f32 %v3157, %v3339
  %v3341 = vpop.f32.mrf.mxu0
  %v3342 = vadd.f32 %v3153, %v3341
  %v3343 = vpop.f32.mrf.mxu0
  %v3344 = vadd.f32 %v3157, %v3343
  %3345 = vmatprep.mubr.bf16.mxu0 0
  %3346 = vmatmul.mubr.bf16.gmra.mxu0 %v3108
  %v3347 = vpop.f32.mrf.mxu0
  %v3348 = vadd.f32 %v3153, %v3347
  %v3349 = vpop.f32.mrf.mxu0
  %v3350 = vadd.f32 %v3157, %v3349
  %v3351 = vpop.f32.mrf.mxu0
  %v3352 = vadd.f32 %v3153, %v3351
  %v3353 = vpop.f32.mrf.mxu0
  %v3354 = vadd.f32 %v3157, %v3353
  %3355 = vmatprep.mubr.bf16.mxu0 0
  %3356 = vmatmul.mubr.bf16.gmra.mxu0 %v3109
  %v3357 = vpop.f32.mrf.mxu0
  %v3358 = vadd.f32 %v3153, %v3357
  %v3359 = vpop.f32.mrf.mxu0
  %v3360 = vadd.f32 %v3157, %v3359
  %v3361 = vpop.f32.mrf.mxu0
  %v3362 = vadd.f32 %v3153, %v3361
  %v3363 = vpop.f32.mrf.mxu0
  %v3364 = vadd.f32 %v3157, %v3363
  %3365 = vmatprep.mubr.bf16.mxu0 0
  %3366 = vmatmul.mubr.bf16.gmra.mxu0 %v3110
  %v3367 = vpop.f32.mrf.mxu0
  %v3368 = vadd.f32 %v3153, %v3367
  %v3369 = vpop.f32.mrf.mxu0
  %v3370 = vadd.f32 %v3157, %v3369
  %v3371 = vpop.f32.mrf.mxu0
  %v3372 = vadd.f32 %v3153, %v3371
  %v3373 = vpop.f32.mrf.mxu0
  %v3374 = vadd.f32 %v3157, %v3373
  %3375 = vmatprep.mubr.bf16.mxu0 0
  %3376 = vmatmul.mubr.bf16.gmra.mxu0 %v3111
  %v3377 = vpop.f32.mrf.mxu0
  %v3378 = vadd.f32 %v3153, %v3377
  %v3379 = vpop.f32.mrf.mxu0
  %v3380 = vadd.f32 %v3157, %v3379
  %v3381 = vpop.f32.mrf.mxu0
  %v3382 = vadd.f32 %v3153, %v3381
  %v3383 = vpop.f32.mrf.mxu0
  %v3384 = vadd.f32 %v3157, %v3383
  %3385 = vmatprep.mubr.bf16.mxu0 0
  %3386 = vmatmul.mubr.bf16.gmra.mxu0 %v3112
  %v3387 = vpop.f32.mrf.mxu0
  %v3388 = vadd.f32 %v3153, %v3387
  %v3389 = vpop.f32.mrf.mxu0
  %v3390 = vadd.f32 %v3157, %v3389
  %v3391 = vpop.f32.mrf.mxu0
  %v3392 = vadd.f32 %v3153, %v3391
  %v3393 = vpop.f32.mrf.mxu0
  %v3394 = vadd.f32 %v3157, %v3393
  %3395 = vmatprep.mubr.bf16.mxu0 0
  %3396 = vmatmul.mubr.bf16.gmra.mxu0 %v3113
  %v3397 = vpop.f32.mrf.mxu0
  %v3398 = vadd.f32 %v3153, %v3397
  %v3399 = vpop.f32.mrf.mxu0
  %v3400 = vadd.f32 %v3157, %v3399
  %v3401 = vpop.f32.mrf.mxu0
  %v3402 = vadd.f32 %v3153, %v3401
  %v3403 = vpop.f32.mrf.mxu0
  %v3404 = vadd.f32 %v3157, %v3403
  %3405 = vdwg.mxu0
  %3406 = vmatprep.subr.bf16.mxu0 0
  %3407 = vmatpush1.bf16.msra.mxu0 %v3268
  %3408 = vmatprep.subr.bf16.mxu0 0
  %3409 = vmatpush1.bf16.msra.mxu0 %v3265
  %3410 = vmatprep.subr.bf16.mxu0 0
  %3411 = vmatpush1.bf16.msra.mxu0 %v3262
  %3412 = vmatprep.subr.bf16.mxu0 0
  %3413 = vmatpush1.bf16.msra.mxu0 %v3259
  %3414 = vmatprep.subr.bf16.mxu0 0
  %3415 = vmatpush1.bf16.msra.mxu0 %v3256
  %3416 = vmatprep.subr.bf16.mxu0 0
  %3417 = vmatpush1.bf16.msra.mxu0 %v3253
  %3418 = vmatprep.subr.bf16.mxu0 0
  %3419 = vmatpush1.bf16.msra.mxu0 %v3250
  %3420 = vmatprep.subr.bf16.mxu0 0
  %3421 = vmatpush1.bf16.msra.mxu0 %v3247
  %3422 = vmatprep.subr.bf16.mxu0 0
  %3423 = vmatpush2.bf16.msra.mxu0 0
  %3424 = vmatprep.subr.bf16.mxu0 0
  %3425 = vmatpush2.bf16.msra.mxu0 0
  %3426 = vmatprep.subr.bf16.mxu0 0
  %3427 = vmatpush2.bf16.msra.mxu0 0
  %3428 = vmatprep.subr.bf16.mxu0 0
  %3429 = vmatpush2.bf16.msra.mxu0 0
  %3430 = vmatprep.subr.bf16.mxu0 0
  %3431 = vmatpush2.bf16.msra.mxu0 0
  %3432 = vmatprep.subr.bf16.mxu0 0
  %3433 = vmatpush2.bf16.msra.mxu0 0
  %3434 = vmatprep.subr.bf16.mxu0 0
  %3435 = vmatpush2.bf16.msra.mxu0 0
  %3436 = vmatprep.subr.bf16.mxu0 0
  %3437 = vmatpush2.bf16.msra.mxu0 0
  %3438 = vmatprep.mubr.bf16.mxu0 0
  %3439 = vmatmul.mubr.bf16.gmra.mxu0 %v3106
  %v3440 = vpop.f32.mrf.mxu0
  %v3441 = vadd.f32 %v3161, %v3440
  %v3442 = vpop.f32.mrf.mxu0
  %v3443 = vpop.f32.mrf.mxu0
  %v3444 = vadd.f32 %v3161, %v3443
  %v3445 = vpop.f32.mrf.mxu0
  %3446 = vmatprep.mubr.bf16.mxu0 0
  %3447 = vmatmul.mubr.bf16.gmra.mxu0 %v3107
  %v3448 = vpop.f32.mrf.mxu0
  %v3449 = vadd.f32 %v3161, %v3448
  %v3450 = vpop.f32.mrf.mxu0
  %v3451 = vpop.f32.mrf.mxu0
  %v3452 = vadd.f32 %v3161, %v3451
  %v3453 = vpop.f32.mrf.mxu0
  %3454 = vmatprep.mubr.bf16.mxu0 0
  %3455 = vmatmul.mubr.bf16.gmra.mxu0 %v3108
  %v3456 = vpop.f32.mrf.mxu0
  %v3457 = vadd.f32 %v3161, %v3456
  %v3458 = vpop.f32.mrf.mxu0
  %v3459 = vpop.f32.mrf.mxu0
  %v3460 = vadd.f32 %v3161, %v3459
  %v3461 = vpop.f32.mrf.mxu0
  %3462 = vmatprep.mubr.bf16.mxu0 0
  %3463 = vmatmul.mubr.bf16.gmra.mxu0 %v3109
  %v3464 = vpop.f32.mrf.mxu0
  %v3465 = vadd.f32 %v3161, %v3464
  %v3466 = vpop.f32.mrf.mxu0
  %v3467 = vpop.f32.mrf.mxu0
  %v3468 = vadd.f32 %v3161, %v3467
  %v3469 = vpop.f32.mrf.mxu0
  %3470 = vmatprep.mubr.bf16.mxu0 0
  %3471 = vmatmul.mubr.bf16.gmra.mxu0 %v3110
  %v3472 = vpop.f32.mrf.mxu0
  %v3473 = vadd.f32 %v3161, %v3472
  %v3474 = vpop.f32.mrf.mxu0
  %v3475 = vpop.f32.mrf.mxu0
  %v3476 = vadd.f32 %v3161, %v3475
  %v3477 = vpop.f32.mrf.mxu0
  %3478 = vmatprep.mubr.bf16.mxu0 0
  %3479 = vmatmul.mubr.bf16.gmra.mxu0 %v3111
  %v3480 = vpop.f32.mrf.mxu0
  %v3481 = vadd.f32 %v3161, %v3480
  %v3482 = vpop.f32.mrf.mxu0
  %v3483 = vpop.f32.mrf.mxu0
  %v3484 = vadd.f32 %v3161, %v3483
  %v3485 = vpop.f32.mrf.mxu0
  %3486 = vmatprep.mubr.bf16.mxu0 0
  %3487 = vmatmul.mubr.bf16.gmra.mxu0 %v3112
  %v3488 = vpop.f32.mrf.mxu0
  %v3489 = vadd.f32 %v3161, %v3488
  %v3490 = vpop.f32.mrf.mxu0
  %v3491 = vpop.f32.mrf.mxu0
  %v3492 = vadd.f32 %v3161, %v3491
  %v3493 = vpop.f32.mrf.mxu0
  %3494 = vmatprep.mubr.bf16.mxu0 0
  %3495 = vmatmul.mubr.bf16.gmra.mxu0 %v3113
  %v3496 = vpop.f32.mrf.mxu0
  %v3497 = vadd.f32 %v3161, %v3496
  %v3498 = vpop.f32.mrf.mxu0
  %v3499 = vpop.f32.mrf.mxu0
  %v3500 = vadd.f32 %v3161, %v3499
  %v3501 = vpop.f32.mrf.mxu0
  %3502 = vdwg.mxu0
  %v3503 = vpack.c.bf16 %v3332, %v3328
  %v3504 = vpack.c.bf16 %v3342, %v3338
  %v3505 = vpack.c.bf16 %v3352, %v3348
  %v3506 = vpack.c.bf16 %v3362, %v3358
  %v3507 = vpack.c.bf16 %v3372, %v3368
  %v3508 = vpack.c.bf16 %v3382, %v3378
  %v3509 = vpack.c.bf16 %v3392, %v3388
  %v3510 = vpack.c.bf16 %v3402, %v3398
  %v3511 = vpack.c.bf16 %v3334, %v3330
  %v3512 = vpack.c.bf16 %v3344, %v3340
  %v3513 = vpack.c.bf16 %v3354, %v3350
  %v3514 = vpack.c.bf16 %v3364, %v3360
  %v3515 = vpack.c.bf16 %v3374, %v3370
  %v3516 = vpack.c.bf16 %v3384, %v3380
  %v3517 = vpack.c.bf16 %v3394, %v3390
  %v3518 = vpack.c.bf16 %v3404, %v3400
  %v3519 = vpack.c.bf16 %v3444, %v3441
  %v3520 = vpack.c.bf16 %v3452, %v3449
  %v3521 = vpack.c.bf16 %v3460, %v3457
  %v3522 = vpack.c.bf16 %v3468, %v3465
  %v3523 = vpack.c.bf16 %v3476, %v3473
  %v3524 = vpack.c.bf16 %v3484, %v3481
  %v3525 = vpack.c.bf16 %v3492, %v3489
  %v3526 = vpack.c.bf16 %v3500, %v3497
  %v3528 = vsel %vm740, %v3503, 0
  %v3531 = vsel %vm740, %v3504, 0
  %v3534 = vsel %vm740, %v3505, 0
  %v3537 = vsel %vm740, %v3506, 0
  %v3540 = vsel %vm740, %v3507, 0
  %v3543 = vsel %vm740, %v3508, 0
  %v3546 = vsel %vm740, %v3509, 0
  %v3549 = vsel %vm740, %v3510, 0
  %v3552 = vsel %vm740, %v3511, 0
  %v3555 = vsel %vm740, %v3512, 0
  %v3558 = vsel %vm740, %v3513, 0
  %v3561 = vsel %vm740, %v3514, 0
  %v3564 = vsel %vm740, %v3515, 0
  %v3567 = vsel %vm740, %v3516, 0
  %v3570 = vsel %vm740, %v3517, 0
  %v3573 = vsel %vm740, %v3518, 0
  %3575 = vmatprep.subr.bf16.mxu0 0
  %3576 = vmatpush1.bf16.xpose.msra.mxu0 %v3573
  %3577 = vmatprep.subr.bf16.mxu0 0
  %3578 = vmatpush1.bf16.xpose.msra.mxu0 %v3570
  %3579 = vmatprep.subr.bf16.mxu0 0
  %3580 = vmatpush1.bf16.xpose.msra.mxu0 %v3567
  %3581 = vmatprep.subr.bf16.mxu0 0
  %3582 = vmatpush1.bf16.xpose.msra.mxu0 %v3564
  %3583 = vmatprep.subr.bf16.mxu0 0
  %3584 = vmatpush1.bf16.xpose.msra.mxu0 %v3561
  %3585 = vmatprep.subr.bf16.mxu0 0
  %3586 = vmatpush1.bf16.xpose.msra.mxu0 %v3558
  %3587 = vmatprep.subr.bf16.mxu0 0
  %3588 = vmatpush1.bf16.xpose.msra.mxu0 %v3555
  %3589 = vmatprep.subr.bf16.mxu0 0
  %3590 = vmatpush1.bf16.xpose.msra.mxu0 %v3552
  %3591 = vmatprep.subr.bf16.mxu0 0
  %3592 = vmatpush2.bf16.xpose.msra.mxu0 0
  %3593 = vmatprep.subr.bf16.mxu0 0
  %3594 = vmatpush2.bf16.xpose.msra.mxu0 0
  %3595 = vmatprep.subr.bf16.mxu0 0
  %3596 = vmatpush2.bf16.xpose.msra.mxu0 0
  %3597 = vmatprep.subr.bf16.mxu0 0
  %3598 = vmatpush2.bf16.xpose.msra.mxu0 0
  %3599 = vmatprep.subr.bf16.mxu0 0
  %3600 = vmatpush2.bf16.xpose.msra.mxu0 0
  %3601 = vmatprep.subr.bf16.mxu0 0
  %3602 = vmatpush2.bf16.xpose.msra.mxu0 0
  %3603 = vmatprep.subr.bf16.mxu0 0
  %3604 = vmatpush2.bf16.xpose.msra.mxu0 0
  %3605 = vmatprep.subr.bf16.mxu0 0
  %3606 = vmatpush2.bf16.xpose.msra.mxu0 0
  %3607 = vmatprep.mubr.bf16.mxu0 0
  %3608 = vmatmul.mubr.bf16.gmra.mxu0 %v3528
  %v3609 = vpop.f32.mrf.mxu0
  %v3610 = vadd.f32 %v305, %v3609
  %v3611 = vpop.f32.mrf.mxu0
  %v3612 = vpop.f32.mrf.mxu0
  %v3613 = vadd.f32 %v306, %v3612
  %v3614 = vpop.f32.mrf.mxu0
  %3615 = vmatprep.mubr.bf16.mxu0 0
  %3616 = vmatmul.mubr.bf16.gmra.mxu0 %v3531
  %v3617 = vpop.f32.mrf.mxu0
  %v3618 = vadd.f32 %v307, %v3617
  %v3619 = vpop.f32.mrf.mxu0
  %v3620 = vpop.f32.mrf.mxu0
  %v3621 = vadd.f32 %v308, %v3620
  %v3622 = vpop.f32.mrf.mxu0
  %3623 = vmatprep.mubr.bf16.mxu0 0
  %3624 = vmatmul.mubr.bf16.gmra.mxu0 %v3534
  %v3625 = vpop.f32.mrf.mxu0
  %v3626 = vadd.f32 %v309, %v3625
  %v3627 = vpop.f32.mrf.mxu0
  %v3628 = vpop.f32.mrf.mxu0
  %v3629 = vadd.f32 %v310, %v3628
  %v3630 = vpop.f32.mrf.mxu0
  %3631 = vmatprep.mubr.bf16.mxu0 0
  %3632 = vmatmul.mubr.bf16.gmra.mxu0 %v3537
  %v3633 = vpop.f32.mrf.mxu0
  %v3634 = vadd.f32 %v311, %v3633
  %v3635 = vpop.f32.mrf.mxu0
  %v3636 = vpop.f32.mrf.mxu0
  %v3637 = vadd.f32 %v312, %v3636
  %v3638 = vpop.f32.mrf.mxu0
  %3639 = vmatprep.mubr.bf16.mxu0 0
  %3640 = vmatmul.mubr.bf16.gmra.mxu0 %v3540
  %v3641 = vpop.f32.mrf.mxu0
  %v3642 = vadd.f32 %v313, %v3641
  %v3643 = vpop.f32.mrf.mxu0
  %v3644 = vpop.f32.mrf.mxu0
  %v3645 = vadd.f32 %v314, %v3644
  %v3646 = vpop.f32.mrf.mxu0
  %3647 = vmatprep.mubr.bf16.mxu0 0
  %3648 = vmatmul.mubr.bf16.gmra.mxu0 %v3543
  %v3649 = vpop.f32.mrf.mxu0
  %v3650 = vadd.f32 %v315, %v3649
  %v3651 = vpop.f32.mrf.mxu0
  %v3652 = vpop.f32.mrf.mxu0
  %v3653 = vadd.f32 %v316, %v3652
  %v3654 = vpop.f32.mrf.mxu0
  %3655 = vmatprep.mubr.bf16.mxu0 0
  %3656 = vmatmul.mubr.bf16.gmra.mxu0 %v3546
  %v3657 = vpop.f32.mrf.mxu0
  %v3658 = vadd.f32 %v317, %v3657
  %v3659 = vpop.f32.mrf.mxu0
  %v3660 = vpop.f32.mrf.mxu0
  %v3661 = vadd.f32 %v318, %v3660
  %v3662 = vpop.f32.mrf.mxu0
  %3663 = vmatprep.mubr.bf16.mxu0 0
  %3664 = vmatmul.mubr.bf16.gmra.mxu0 %v3549
  %v3665 = vpop.f32.mrf.mxu0
  %v3666 = vadd.f32 %v319, %v3665
  %v3667 = vpop.f32.mrf.mxu0
  %v3668 = vpop.f32.mrf.mxu0
  %v3669 = vadd.f32 %v320, %v3668
  %v3670 = vpop.f32.mrf.mxu0
  %3671 = vdwg.mxu0
  %3672 = vmax.xlane.f32.xlu0 %v3610
  %v3673 = vpop.xlane.xlu0 %3672
  %3674 = vmax.xlane.f32.xlu0 %v3613
  %v3675 = vpop.xlane.xlu0 %3674
  %3676 = vmax.xlane.f32.xlu0 %v3618
  %v3677 = vpop.xlane.xlu0 %3676
  %3678 = vmax.xlane.f32.xlu0 %v3621
  %v3679 = vpop.xlane.xlu0 %3678
  %3680 = vmax.xlane.f32.xlu0 %v3626
  %v3681 = vpop.xlane.xlu0 %3680
  %3682 = vmax.xlane.f32.xlu0 %v3629
  %v3683 = vpop.xlane.xlu0 %3682
  %3684 = vmax.xlane.f32.xlu0 %v3634
  %v3685 = vpop.xlane.xlu0 %3684
  %3686 = vmax.xlane.f32.xlu0 %v3637
  %v3687 = vpop.xlane.xlu0 %3686
  %3688 = vmax.xlane.f32.xlu0 %v3642
  %v3689 = vpop.xlane.xlu0 %3688
  %3690 = vmax.xlane.f32.xlu0 %v3645
  %v3691 = vpop.xlane.xlu0 %3690
  %3692 = vmax.xlane.f32.xlu0 %v3650
  %v3693 = vpop.xlane.xlu0 %3692
  %3694 = vmax.xlane.f32.xlu0 %v3653
  %v3695 = vpop.xlane.xlu0 %3694
  %3696 = vmax.xlane.f32.xlu0 %v3658
  %v3697 = vpop.xlane.xlu0 %3696
  %3698 = vmax.xlane.f32.xlu0 %v3661
  %v3699 = vpop.xlane.xlu0 %3698
  %3700 = vmax.xlane.f32.xlu0 %v3666
  %v3701 = vpop.xlane.xlu0 %3700
  %3702 = vmax.xlane.f32.xlu0 %v3669
  %v3703 = vpop.xlane.xlu0 %3702
  %v3704 = vsub.f32 %v3610, %v3673
  %v3705 = vsub.f32 %v3613, %v3675
  %v3706 = vsub.f32 %v3618, %v3677
  %v3707 = vsub.f32 %v3621, %v3679
  %v3708 = vsub.f32 %v3626, %v3681
  %v3709 = vsub.f32 %v3629, %v3683
  %v3710 = vsub.f32 %v3634, %v3685
  %v3711 = vsub.f32 %v3637, %v3687
  %v3712 = vsub.f32 %v3642, %v3689
  %v3713 = vsub.f32 %v3645, %v3691
  %v3714 = vsub.f32 %v3650, %v3693
  %v3715 = vsub.f32 %v3653, %v3695
  %v3716 = vsub.f32 %v3658, %v3697
  %v3717 = vsub.f32 %v3661, %v3699
  %v3718 = vsub.f32 %v3666, %v3701
  %v3719 = vsub.f32 %v3669, %v3703
  %v3720 = vmul.f32 %v3704, 1.442695
  %v3721 = vpow.pop %v3720
  %v3722 = vmul.f32 %v3705, 1.442695
  %v3723 = vpow.pop %v3722
  %v3724 = vmul.f32 %v3706, 1.442695
  %v3725 = vpow.pop %v3724
  %v3726 = vmul.f32 %v3707, 1.442695
  %v3727 = vpow.pop %v3726
  %v3728 = vmul.f32 %v3708, 1.442695
  %v3729 = vpow.pop %v3728
  %v3730 = vmul.f32 %v3709, 1.442695
  %v3731 = vpow.pop %v3730
  %v3732 = vmul.f32 %v3710, 1.442695
  %v3733 = vpow.pop %v3732
  %v3734 = vmul.f32 %v3711, 1.442695
  %v3735 = vpow.pop %v3734
  %v3736 = vmul.f32 %v3712, 1.442695
  %v3737 = vpow.pop %v3736
  %v3738 = vmul.f32 %v3713, 1.442695
  %v3739 = vpow.pop %v3738
  %v3740 = vmul.f32 %v3714, 1.442695
  %v3741 = vpow.pop %v3740
  %v3742 = vmul.f32 %v3715, 1.442695
  %v3743 = vpow.pop %v3742
  %v3744 = vmul.f32 %v3716, 1.442695
  %v3745 = vpow.pop %v3744
  %v3746 = vmul.f32 %v3717, 1.442695
  %v3747 = vpow.pop %v3746
  %v3748 = vmul.f32 %v3718, 1.442695
  %v3749 = vpow.pop %v3748
  %v3750 = vmul.f32 %v3719, 1.442695
  %v3751 = vpow.pop %v3750
  %3752 = vadd.xlane.f32.xlu0 %v3721
  %v3753 = vpop.xlane.xlu0 %3752
  %3754 = vadd.xlane.f32.xlu0 %v3723
  %v3755 = vpop.xlane.xlu0 %3754
  %3756 = vadd.xlane.f32.xlu0 %v3725
  %v3757 = vpop.xlane.xlu0 %3756
  %3758 = vadd.xlane.f32.xlu0 %v3727
  %v3759 = vpop.xlane.xlu0 %3758
  %3760 = vadd.xlane.f32.xlu0 %v3729
  %v3761 = vpop.xlane.xlu0 %3760
  %3762 = vadd.xlane.f32.xlu0 %v3731
  %v3763 = vpop.xlane.xlu0 %3762
  %3764 = vadd.xlane.f32.xlu0 %v3733
  %v3765 = vpop.xlane.xlu0 %3764
  %3766 = vadd.xlane.f32.xlu0 %v3735
  %v3767 = vpop.xlane.xlu0 %3766
  %3768 = vadd.xlane.f32.xlu0 %v3737
  %v3769 = vpop.xlane.xlu0 %3768
  %3770 = vadd.xlane.f32.xlu0 %v3739
  %v3771 = vpop.xlane.xlu0 %3770
  %3772 = vadd.xlane.f32.xlu0 %v3741
  %v3773 = vpop.xlane.xlu0 %3772
  %3774 = vadd.xlane.f32.xlu0 %v3743
  %v3775 = vpop.xlane.xlu0 %3774
  %3776 = vadd.xlane.f32.xlu0 %v3745
  %v3777 = vpop.xlane.xlu0 %3776
  %3778 = vadd.xlane.f32.xlu0 %v3747
  %v3779 = vpop.xlane.xlu0 %3778
  %3780 = vadd.xlane.f32.xlu0 %v3749
  %v3781 = vpop.xlane.xlu0 %3780
  %3782 = vadd.xlane.f32.xlu0 %v3751
  %v3783 = vpop.xlane.xlu0 %3782
  %v3784 = vrcp.pop %v3753
  %v3785 = vrcp.pop %v3755
  %v3786 = vrcp.pop %v3757
  %v3787 = vrcp.pop %v3759
  %v3788 = vrcp.pop %v3761
  %v3789 = vrcp.pop %v3763
  %v3790 = vrcp.pop %v3765
  %v3791 = vrcp.pop %v3767
  %v3792 = vrcp.pop %v3769
  %v3793 = vrcp.pop %v3771
  %v3794 = vrcp.pop %v3773
  %v3795 = vrcp.pop %v3775
  %v3796 = vrcp.pop %v3777
  %v3797 = vrcp.pop %v3779
  %v3798 = vrcp.pop %v3781
  %v3799 = vrcp.pop %v3783
  %v3800 = vmul.f32 %v3721, %v3784
  %v3801 = vmul.f32 %v3723, %v3785
  %v3802 = vmul.f32 %v3725, %v3786
  %v3803 = vmul.f32 %v3727, %v3787
  %v3804 = vmul.f32 %v3729, %v3788
  %v3805 = vmul.f32 %v3731, %v3789
  %v3806 = vmul.f32 %v3733, %v3790
  %v3807 = vmul.f32 %v3735, %v3791
  %v3808 = vmul.f32 %v3737, %v3792
  %v3809 = vmul.f32 %v3739, %v3793
  %v3810 = vmul.f32 %v3741, %v3794
  %v3811 = vmul.f32 %v3743, %v3795
  %v3812 = vmul.f32 %v3745, %v3796
  %v3813 = vmul.f32 %v3747, %v3797
  %v3814 = vmul.f32 %v3749, %v3798
  %v3815 = vmul.f32 %v3751, %v3799
  %v3816 = vpack.c.bf16 %v3801, %v3800
  %v3817 = vpack.c.bf16 %v3803, %v3802
  %v3818 = vpack.c.bf16 %v3805, %v3804
  %v3819 = vpack.c.bf16 %v3807, %v3806
  %v3820 = vpack.c.bf16 %v3809, %v3808
  %v3821 = vpack.c.bf16 %v3811, %v3810
  %v3822 = vpack.c.bf16 %v3813, %v3812
  %v3823 = vpack.c.bf16 %v3815, %v3814
  %3824 = vmatprep.subr.bf16.mxu0 0
  %3825 = vmatpush1.bf16.msra.mxu0 %v3526
  %3826 = vmatprep.subr.bf16.mxu0 0
  %3827 = vmatpush1.bf16.msra.mxu0 %v3525
  %3828 = vmatprep.subr.bf16.mxu0 0
  %3829 = vmatpush1.bf16.msra.mxu0 %v3524
  %3830 = vmatprep.subr.bf16.mxu0 0
  %3831 = vmatpush1.bf16.msra.mxu0 %v3523
  %3832 = vmatprep.subr.bf16.mxu0 0
  %3833 = vmatpush1.bf16.msra.mxu0 %v3522
  %3834 = vmatprep.subr.bf16.mxu0 0
  %3835 = vmatpush1.bf16.msra.mxu0 %v3521
  %3836 = vmatprep.subr.bf16.mxu0 0
  %3837 = vmatpush1.bf16.msra.mxu0 %v3520
  %3838 = vmatprep.subr.bf16.mxu0 0
  %3839 = vmatpush1.bf16.msra.mxu0 %v3519
  %3840 = vmatprep.subr.bf16.mxu0 0
  %3841 = vmatpush2.bf16.msra.mxu0 0
  %3842 = vmatprep.subr.bf16.mxu0 0
  %3843 = vmatpush2.bf16.msra.mxu0 0
  %3844 = vmatprep.subr.bf16.mxu0 0
  %3845 = vmatpush2.bf16.msra.mxu0 0
  %3846 = vmatprep.subr.bf16.mxu0 0
  %3847 = vmatpush2.bf16.msra.mxu0 0
  %3848 = vmatprep.subr.bf16.mxu0 0
  %3849 = vmatpush2.bf16.msra.mxu0 0
  %3850 = vmatprep.subr.bf16.mxu0 0
  %3851 = vmatpush2.bf16.msra.mxu0 0
  %3852 = vmatprep.subr.bf16.mxu0 0
  %3853 = vmatpush2.bf16.msra.mxu0 0
  %3854 = vmatprep.subr.bf16.mxu0 0
  %3855 = vmatpush2.bf16.msra.mxu0 0
  %3856 = vmatprep.mubr.bf16.mxu0 0
  %3857 = vmatmul.mubr.bf16.gmra.mxu0 %v3816
  %v3858 = vpop.f32.mrf.mxu0
  %v3859 = vadd.f32 0.0, %v3858
  %v3860 = vpop.f32.mrf.mxu0
  %v3861 = vpop.f32.mrf.mxu0
  %v3862 = vadd.f32 0.0, %v3861
  %v3863 = vpop.f32.mrf.mxu0
  %3864 = vmatprep.mubr.bf16.mxu0 0
  %3865 = vmatmul.mubr.bf16.gmra.mxu0 %v3817
  %v3866 = vpop.f32.mrf.mxu0
  %v3867 = vadd.f32 0.0, %v3866
  %v3868 = vpop.f32.mrf.mxu0
  %v3869 = vpop.f32.mrf.mxu0
  %v3870 = vadd.f32 0.0, %v3869
  %v3871 = vpop.f32.mrf.mxu0
  %3872 = vmatprep.mubr.bf16.mxu0 0
  %3873 = vmatmul.mubr.bf16.gmra.mxu0 %v3818
  %v3874 = vpop.f32.mrf.mxu0
  %v3875 = vadd.f32 0.0, %v3874
  %v3876 = vpop.f32.mrf.mxu0
  %v3877 = vpop.f32.mrf.mxu0
  %v3878 = vadd.f32 0.0, %v3877
  %v3879 = vpop.f32.mrf.mxu0
  %3880 = vmatprep.mubr.bf16.mxu0 0
  %3881 = vmatmul.mubr.bf16.gmra.mxu0 %v3819
  %v3882 = vpop.f32.mrf.mxu0
  %v3883 = vadd.f32 0.0, %v3882
  %v3884 = vpop.f32.mrf.mxu0
  %v3885 = vpop.f32.mrf.mxu0
  %v3886 = vadd.f32 0.0, %v3885
  %v3887 = vpop.f32.mrf.mxu0
  %3888 = vmatprep.mubr.bf16.mxu0 0
  %3889 = vmatmul.mubr.bf16.gmra.mxu0 %v3820
  %v3890 = vpop.f32.mrf.mxu0
  %v3891 = vadd.f32 0.0, %v3890
  %v3892 = vpop.f32.mrf.mxu0
  %v3893 = vpop.f32.mrf.mxu0
  %v3894 = vadd.f32 0.0, %v3893
  %v3895 = vpop.f32.mrf.mxu0
  %3896 = vmatprep.mubr.bf16.mxu0 0
  %3897 = vmatmul.mubr.bf16.gmra.mxu0 %v3821
  %v3898 = vpop.f32.mrf.mxu0
  %v3899 = vadd.f32 0.0, %v3898
  %v3900 = vpop.f32.mrf.mxu0
  %v3901 = vpop.f32.mrf.mxu0
  %v3902 = vadd.f32 0.0, %v3901
  %v3903 = vpop.f32.mrf.mxu0
  %3904 = vmatprep.mubr.bf16.mxu0 0
  %3905 = vmatmul.mubr.bf16.gmra.mxu0 %v3822
  %v3906 = vpop.f32.mrf.mxu0
  %v3907 = vadd.f32 0.0, %v3906
  %v3908 = vpop.f32.mrf.mxu0
  %v3909 = vpop.f32.mrf.mxu0
  %v3910 = vadd.f32 0.0, %v3909
  %v3911 = vpop.f32.mrf.mxu0
  %3912 = vmatprep.mubr.bf16.mxu0 0
  %3913 = vmatmul.mubr.bf16.gmra.mxu0 %v3823
  %v3914 = vpop.f32.mrf.mxu0
  %v3915 = vadd.f32 0.0, %v3914
  %v3916 = vpop.f32.mrf.mxu0
  %v3917 = vpop.f32.mrf.mxu0
  %v3918 = vadd.f32 0.0, %v3917
  %v3919 = vpop.f32.mrf.mxu0
  %3920 = vdwg.mxu0
  %3929 = vrot.lane.b32.xlu0 %v3503, 64
  %v3930 = vpop.permute.xlu0 %3929
  %3931 = vrot.lane.b32.xlu0 %v3504, 64
  %v3932 = vpop.permute.xlu0 %3931
  %3933 = vrot.lane.b32.xlu0 %v3505, 64
  %v3934 = vpop.permute.xlu0 %3933
  %3935 = vrot.lane.b32.xlu0 %v3506, 64
  %v3936 = vpop.permute.xlu0 %3935
  %3937 = vrot.lane.b32.xlu0 %v3507, 64
  %v3938 = vpop.permute.xlu0 %3937
  %3939 = vrot.lane.b32.xlu0 %v3508, 64
  %v3940 = vpop.permute.xlu0 %3939
  %3941 = vrot.lane.b32.xlu0 %v3509, 64
  %v3942 = vpop.permute.xlu0 %3941
  %3943 = vrot.lane.b32.xlu0 %v3510, 64
  %v3944 = vpop.permute.xlu0 %3943
  %3953 = vrot.lane.b32.xlu0 %v3511, 64
  %v3954 = vpop.permute.xlu0 %3953
  %3955 = vrot.lane.b32.xlu0 %v3512, 64
  %v3956 = vpop.permute.xlu0 %3955
  %3957 = vrot.lane.b32.xlu0 %v3513, 64
  %v3958 = vpop.permute.xlu0 %3957
  %3959 = vrot.lane.b32.xlu0 %v3514, 64
  %v3960 = vpop.permute.xlu0 %3959
  %3961 = vrot.lane.b32.xlu0 %v3515, 64
  %v3962 = vpop.permute.xlu0 %3961
  %3963 = vrot.lane.b32.xlu0 %v3516, 64
  %v3964 = vpop.permute.xlu0 %3963
  %3965 = vrot.lane.b32.xlu0 %v3517, 64
  %v3966 = vpop.permute.xlu0 %3965
  %3967 = vrot.lane.b32.xlu0 %v3518, 64
  %v3968 = vpop.permute.xlu0 %3967
  %v3970 = vsel %vm740, %v3930, 0
  %v3973 = vsel %vm740, %v3932, 0
  %v3976 = vsel %vm740, %v3934, 0
  %v3979 = vsel %vm740, %v3936, 0
  %v3982 = vsel %vm740, %v3938, 0
  %v3985 = vsel %vm740, %v3940, 0
  %v3988 = vsel %vm740, %v3942, 0
  %v3991 = vsel %vm740, %v3944, 0
  %v3994 = vsel %vm740, %v3954, 0
  %v3997 = vsel %vm740, %v3956, 0
  %v4000 = vsel %vm740, %v3958, 0
  %v4003 = vsel %vm740, %v3960, 0
  %v4006 = vsel %vm740, %v3962, 0
  %v4009 = vsel %vm740, %v3964, 0
  %v4012 = vsel %vm740, %v3966, 0
  %v4015 = vsel %vm740, %v3968, 0
  %4017 = vmatprep.subr.bf16.mxu0 0
  %4018 = vmatpush1.bf16.xpose.msra.mxu0 %v4015
  %4019 = vmatprep.subr.bf16.mxu0 0
  %4020 = vmatpush1.bf16.xpose.msra.mxu0 %v4012
  %4021 = vmatprep.subr.bf16.mxu0 0
  %4022 = vmatpush1.bf16.xpose.msra.mxu0 %v4009
  %4023 = vmatprep.subr.bf16.mxu0 0
  %4024 = vmatpush1.bf16.xpose.msra.mxu0 %v4006
  %4025 = vmatprep.subr.bf16.mxu0 0
  %4026 = vmatpush1.bf16.xpose.msra.mxu0 %v4003
  %4027 = vmatprep.subr.bf16.mxu0 0
  %4028 = vmatpush1.bf16.xpose.msra.mxu0 %v4000
  %4029 = vmatprep.subr.bf16.mxu0 0
  %4030 = vmatpush1.bf16.xpose.msra.mxu0 %v3997
  %4031 = vmatprep.subr.bf16.mxu0 0
  %4032 = vmatpush1.bf16.xpose.msra.mxu0 %v3994
  %4033 = vmatprep.subr.bf16.mxu0 0
  %4034 = vmatpush2.bf16.xpose.msra.mxu0 0
  %4035 = vmatprep.subr.bf16.mxu0 0
  %4036 = vmatpush2.bf16.xpose.msra.mxu0 0
  %4037 = vmatprep.subr.bf16.mxu0 0
  %4038 = vmatpush2.bf16.xpose.msra.mxu0 0
  %4039 = vmatprep.subr.bf16.mxu0 0
  %4040 = vmatpush2.bf16.xpose.msra.mxu0 0
  %4041 = vmatprep.subr.bf16.mxu0 0
  %4042 = vmatpush2.bf16.xpose.msra.mxu0 0
  %4043 = vmatprep.subr.bf16.mxu0 0
  %4044 = vmatpush2.bf16.xpose.msra.mxu0 0
  %4045 = vmatprep.subr.bf16.mxu0 0
  %4046 = vmatpush2.bf16.xpose.msra.mxu0 0
  %4047 = vmatprep.subr.bf16.mxu0 0
  %4048 = vmatpush2.bf16.xpose.msra.mxu0 0
  %4049 = vmatprep.mubr.bf16.mxu0 0
  %4050 = vmatmul.mubr.bf16.gmra.mxu0 %v3970
  %v4051 = vpop.f32.mrf.mxu0
  %v4052 = vadd.f32 %v305, %v4051
  %v4053 = vpop.f32.mrf.mxu0
  %v4054 = vpop.f32.mrf.mxu0
  %v4055 = vadd.f32 %v306, %v4054
  %v4056 = vpop.f32.mrf.mxu0
  %4057 = vmatprep.mubr.bf16.mxu0 0
  %4058 = vmatmul.mubr.bf16.gmra.mxu0 %v3973
  %v4059 = vpop.f32.mrf.mxu0
  %v4060 = vadd.f32 %v307, %v4059
  %v4061 = vpop.f32.mrf.mxu0
  %v4062 = vpop.f32.mrf.mxu0
  %v4063 = vadd.f32 %v308, %v4062
  %v4064 = vpop.f32.mrf.mxu0
  %4065 = vmatprep.mubr.bf16.mxu0 0
  %4066 = vmatmul.mubr.bf16.gmra.mxu0 %v3976
  %v4067 = vpop.f32.mrf.mxu0
  %v4068 = vadd.f32 %v309, %v4067
  %v4069 = vpop.f32.mrf.mxu0
  %v4070 = vpop.f32.mrf.mxu0
  %v4071 = vadd.f32 %v310, %v4070
  %v4072 = vpop.f32.mrf.mxu0
  %4073 = vmatprep.mubr.bf16.mxu0 0
  %4074 = vmatmul.mubr.bf16.gmra.mxu0 %v3979
  %v4075 = vpop.f32.mrf.mxu0
  %v4076 = vadd.f32 %v311, %v4075
  %v4077 = vpop.f32.mrf.mxu0
  %v4078 = vpop.f32.mrf.mxu0
  %v4079 = vadd.f32 %v312, %v4078
  %v4080 = vpop.f32.mrf.mxu0
  %4081 = vmatprep.mubr.bf16.mxu0 0
  %4082 = vmatmul.mubr.bf16.gmra.mxu0 %v3982
  %v4083 = vpop.f32.mrf.mxu0
  %v4084 = vadd.f32 %v313, %v4083
  %v4085 = vpop.f32.mrf.mxu0
  %v4086 = vpop.f32.mrf.mxu0
  %v4087 = vadd.f32 %v314, %v4086
  %v4088 = vpop.f32.mrf.mxu0
  %4089 = vmatprep.mubr.bf16.mxu0 0
  %4090 = vmatmul.mubr.bf16.gmra.mxu0 %v3985
  %v4091 = vpop.f32.mrf.mxu0
  %v4092 = vadd.f32 %v315, %v4091
  %v4093 = vpop.f32.mrf.mxu0
  %v4094 = vpop.f32.mrf.mxu0
  %v4095 = vadd.f32 %v316, %v4094
  %v4096 = vpop.f32.mrf.mxu0
  %4097 = vmatprep.mubr.bf16.mxu0 0
  %4098 = vmatmul.mubr.bf16.gmra.mxu0 %v3988
  %v4099 = vpop.f32.mrf.mxu0
  %v4100 = vadd.f32 %v317, %v4099
  %v4101 = vpop.f32.mrf.mxu0
  %v4102 = vpop.f32.mrf.mxu0
  %v4103 = vadd.f32 %v318, %v4102
  %v4104 = vpop.f32.mrf.mxu0
  %4105 = vmatprep.mubr.bf16.mxu0 0
  %4106 = vmatmul.mubr.bf16.gmra.mxu0 %v3991
  %v4107 = vpop.f32.mrf.mxu0
  %v4108 = vadd.f32 %v319, %v4107
  %v4109 = vpop.f32.mrf.mxu0
  %v4110 = vpop.f32.mrf.mxu0
  %v4111 = vadd.f32 %v320, %v4110
  %v4112 = vpop.f32.mrf.mxu0
  %4113 = vdwg.mxu0
  %4114 = vmax.xlane.f32.xlu0 %v4052
  %v4115 = vpop.xlane.xlu0 %4114
  %4116 = vmax.xlane.f32.xlu0 %v4055
  %v4117 = vpop.xlane.xlu0 %4116
  %4118 = vmax.xlane.f32.xlu0 %v4060
  %v4119 = vpop.xlane.xlu0 %4118
  %4120 = vmax.xlane.f32.xlu0 %v4063
  %v4121 = vpop.xlane.xlu0 %4120
  %4122 = vmax.xlane.f32.xlu0 %v4068
  %v4123 = vpop.xlane.xlu0 %4122
  %4124 = vmax.xlane.f32.xlu0 %v4071
  %v4125 = vpop.xlane.xlu0 %4124
  %4126 = vmax.xlane.f32.xlu0 %v4076
  %v4127 = vpop.xlane.xlu0 %4126
  %4128 = vmax.xlane.f32.xlu0 %v4079
  %v4129 = vpop.xlane.xlu0 %4128
  %4130 = vmax.xlane.f32.xlu0 %v4084
  %v4131 = vpop.xlane.xlu0 %4130
  %4132 = vmax.xlane.f32.xlu0 %v4087
  %v4133 = vpop.xlane.xlu0 %4132
  %4134 = vmax.xlane.f32.xlu0 %v4092
  %v4135 = vpop.xlane.xlu0 %4134
  %4136 = vmax.xlane.f32.xlu0 %v4095
  %v4137 = vpop.xlane.xlu0 %4136
  %4138 = vmax.xlane.f32.xlu0 %v4100
  %v4139 = vpop.xlane.xlu0 %4138
  %4140 = vmax.xlane.f32.xlu0 %v4103
  %v4141 = vpop.xlane.xlu0 %4140
  %4142 = vmax.xlane.f32.xlu0 %v4108
  %v4143 = vpop.xlane.xlu0 %4142
  %4144 = vmax.xlane.f32.xlu0 %v4111
  %v4145 = vpop.xlane.xlu0 %4144
  %v4146 = vsub.f32 %v4052, %v4115
  %v4147 = vsub.f32 %v4055, %v4117
  %v4148 = vsub.f32 %v4060, %v4119
  %v4149 = vsub.f32 %v4063, %v4121
  %v4150 = vsub.f32 %v4068, %v4123
  %v4151 = vsub.f32 %v4071, %v4125
  %v4152 = vsub.f32 %v4076, %v4127
  %v4153 = vsub.f32 %v4079, %v4129
  %v4154 = vsub.f32 %v4084, %v4131
  %v4155 = vsub.f32 %v4087, %v4133
  %v4156 = vsub.f32 %v4092, %v4135
  %v4157 = vsub.f32 %v4095, %v4137
  %v4158 = vsub.f32 %v4100, %v4139
  %v4159 = vsub.f32 %v4103, %v4141
  %v4160 = vsub.f32 %v4108, %v4143
  %v4161 = vsub.f32 %v4111, %v4145
  %v4162 = vmul.f32 %v4146, 1.442695
  %v4163 = vpow.pop %v4162
  %v4164 = vmul.f32 %v4147, 1.442695
  %v4165 = vpow.pop %v4164
  %v4166 = vmul.f32 %v4148, 1.442695
  %v4167 = vpow.pop %v4166
  %v4168 = vmul.f32 %v4149, 1.442695
  %v4169 = vpow.pop %v4168
  %v4170 = vmul.f32 %v4150, 1.442695
  %v4171 = vpow.pop %v4170
  %v4172 = vmul.f32 %v4151, 1.442695
  %v4173 = vpow.pop %v4172
  %v4174 = vmul.f32 %v4152, 1.442695
  %v4175 = vpow.pop %v4174
  %v4176 = vmul.f32 %v4153, 1.442695
  %v4177 = vpow.pop %v4176
  %v4178 = vmul.f32 %v4154, 1.442695
  %v4179 = vpow.pop %v4178
  %v4180 = vmul.f32 %v4155, 1.442695
  %v4181 = vpow.pop %v4180
  %v4182 = vmul.f32 %v4156, 1.442695
  %v4183 = vpow.pop %v4182
  %v4184 = vmul.f32 %v4157, 1.442695
  %v4185 = vpow.pop %v4184
  %v4186 = vmul.f32 %v4158, 1.442695
  %v4187 = vpow.pop %v4186
  %v4188 = vmul.f32 %v4159, 1.442695
  %v4189 = vpow.pop %v4188
  %v4190 = vmul.f32 %v4160, 1.442695
  %v4191 = vpow.pop %v4190
  %v4192 = vmul.f32 %v4161, 1.442695
  %v4193 = vpow.pop %v4192
  %4194 = vadd.xlane.f32.xlu0 %v4163
  %v4195 = vpop.xlane.xlu0 %4194
  %4196 = vadd.xlane.f32.xlu0 %v4165
  %v4197 = vpop.xlane.xlu0 %4196
  %4198 = vadd.xlane.f32.xlu0 %v4167
  %v4199 = vpop.xlane.xlu0 %4198
  %4200 = vadd.xlane.f32.xlu0 %v4169
  %v4201 = vpop.xlane.xlu0 %4200
  %4202 = vadd.xlane.f32.xlu0 %v4171
  %v4203 = vpop.xlane.xlu0 %4202
  %4204 = vadd.xlane.f32.xlu0 %v4173
  %v4205 = vpop.xlane.xlu0 %4204
  %4206 = vadd.xlane.f32.xlu0 %v4175
  %v4207 = vpop.xlane.xlu0 %4206
  %4208 = vadd.xlane.f32.xlu0 %v4177
  %v4209 = vpop.xlane.xlu0 %4208
  %4210 = vadd.xlane.f32.xlu0 %v4179
  %v4211 = vpop.xlane.xlu0 %4210
  %4212 = vadd.xlane.f32.xlu0 %v4181
  %v4213 = vpop.xlane.xlu0 %4212
  %4214 = vadd.xlane.f32.xlu0 %v4183
  %v4215 = vpop.xlane.xlu0 %4214
  %4216 = vadd.xlane.f32.xlu0 %v4185
  %v4217 = vpop.xlane.xlu0 %4216
  %4218 = vadd.xlane.f32.xlu0 %v4187
  %v4219 = vpop.xlane.xlu0 %4218
  %4220 = vadd.xlane.f32.xlu0 %v4189
  %v4221 = vpop.xlane.xlu0 %4220
  %4222 = vadd.xlane.f32.xlu0 %v4191
  %v4223 = vpop.xlane.xlu0 %4222
  %4224 = vadd.xlane.f32.xlu0 %v4193
  %v4225 = vpop.xlane.xlu0 %4224
  %v4226 = vrcp.pop %v4195
  %v4227 = vrcp.pop %v4197
  %v4228 = vrcp.pop %v4199
  %v4229 = vrcp.pop %v4201
  %v4230 = vrcp.pop %v4203
  %v4231 = vrcp.pop %v4205
  %v4232 = vrcp.pop %v4207
  %v4233 = vrcp.pop %v4209
  %v4234 = vrcp.pop %v4211
  %v4235 = vrcp.pop %v4213
  %v4236 = vrcp.pop %v4215
  %v4237 = vrcp.pop %v4217
  %v4238 = vrcp.pop %v4219
  %v4239 = vrcp.pop %v4221
  %v4240 = vrcp.pop %v4223
  %v4241 = vrcp.pop %v4225
  %v4242 = vmul.f32 %v4163, %v4226
  %v4243 = vmul.f32 %v4165, %v4227
  %v4244 = vmul.f32 %v4167, %v4228
  %v4245 = vmul.f32 %v4169, %v4229
  %v4246 = vmul.f32 %v4171, %v4230
  %v4247 = vmul.f32 %v4173, %v4231
  %v4248 = vmul.f32 %v4175, %v4232
  %v4249 = vmul.f32 %v4177, %v4233
  %v4250 = vmul.f32 %v4179, %v4234
  %v4251 = vmul.f32 %v4181, %v4235
  %v4252 = vmul.f32 %v4183, %v4236
  %v4253 = vmul.f32 %v4185, %v4237
  %v4254 = vmul.f32 %v4187, %v4238
  %v4255 = vmul.f32 %v4189, %v4239
  %v4256 = vmul.f32 %v4191, %v4240
  %v4257 = vmul.f32 %v4193, %v4241
  %v4258 = vpack.c.bf16 %v4243, %v4242
  %v4259 = vpack.c.bf16 %v4245, %v4244
  %v4260 = vpack.c.bf16 %v4247, %v4246
  %v4261 = vpack.c.bf16 %v4249, %v4248
  %v4262 = vpack.c.bf16 %v4251, %v4250
  %v4263 = vpack.c.bf16 %v4253, %v4252
  %v4264 = vpack.c.bf16 %v4255, %v4254
  %v4265 = vpack.c.bf16 %v4257, %v4256
  %4274 = vrot.lane.b32.xlu0 %v3519, 64
  %v4275 = vpop.permute.xlu0 %4274
  %4276 = vrot.lane.b32.xlu0 %v3520, 64
  %v4277 = vpop.permute.xlu0 %4276
  %4278 = vrot.lane.b32.xlu0 %v3521, 64
  %v4279 = vpop.permute.xlu0 %4278
  %4280 = vrot.lane.b32.xlu0 %v3522, 64
  %v4281 = vpop.permute.xlu0 %4280
  %4282 = vrot.lane.b32.xlu0 %v3523, 64
  %v4283 = vpop.permute.xlu0 %4282
  %4284 = vrot.lane.b32.xlu0 %v3524, 64
  %v4285 = vpop.permute.xlu0 %4284
  %4286 = vrot.lane.b32.xlu0 %v3525, 64
  %v4287 = vpop.permute.xlu0 %4286
  %4288 = vrot.lane.b32.xlu0 %v3526, 64
  %v4289 = vpop.permute.xlu0 %4288
  %4298 = vmatprep.subr.bf16.mxu0 0
  %4299 = vmatpush1.bf16.msra.mxu0 %v4289
  %4300 = vmatprep.subr.bf16.mxu0 0
  %4301 = vmatpush1.bf16.msra.mxu0 %v4287
  %4302 = vmatprep.subr.bf16.mxu0 0
  %4303 = vmatpush1.bf16.msra.mxu0 %v4285
  %4304 = vmatprep.subr.bf16.mxu0 0
  %4305 = vmatpush1.bf16.msra.mxu0 %v4283
  %4306 = vmatprep.subr.bf16.mxu0 0
  %4307 = vmatpush1.bf16.msra.mxu0 %v4281
  %4308 = vmatprep.subr.bf16.mxu0 0
  %4309 = vmatpush1.bf16.msra.mxu0 %v4279
  %4310 = vmatprep.subr.bf16.mxu0 0
  %4311 = vmatpush1.bf16.msra.mxu0 %v4277
  %4312 = vmatprep.subr.bf16.mxu0 0
  %4313 = vmatpush1.bf16.msra.mxu0 %v4275
  %4314 = vmatprep.subr.bf16.mxu0 0
  %4315 = vmatpush2.bf16.msra.mxu0 0
  %4316 = vmatprep.subr.bf16.mxu0 0
  %4317 = vmatpush2.bf16.msra.mxu0 0
  %4318 = vmatprep.subr.bf16.mxu0 0
  %4319 = vmatpush2.bf16.msra.mxu0 0
  %4320 = vmatprep.subr.bf16.mxu0 0
  %4321 = vmatpush2.bf16.msra.mxu0 0
  %4322 = vmatprep.subr.bf16.mxu0 0
  %4323 = vmatpush2.bf16.msra.mxu0 0
  %4324 = vmatprep.subr.bf16.mxu0 0
  %4325 = vmatpush2.bf16.msra.mxu0 0
  %4326 = vmatprep.subr.bf16.mxu0 0
  %4327 = vmatpush2.bf16.msra.mxu0 0
  %4328 = vmatprep.subr.bf16.mxu0 0
  %4329 = vmatpush2.bf16.msra.mxu0 0
  %4330 = vmatprep.mubr.bf16.mxu0 0
  %4331 = vmatmul.mubr.bf16.gmra.mxu0 %v4258
  %v4332 = vpop.f32.mrf.mxu0
  %v4333 = vadd.f32 0.0, %v4332
  %v4334 = vpop.f32.mrf.mxu0
  %v4335 = vpop.f32.mrf.mxu0
  %v4336 = vadd.f32 0.0, %v4335
  %v4337 = vpop.f32.mrf.mxu0
  %4338 = vmatprep.mubr.bf16.mxu0 0
  %4339 = vmatmul.mubr.bf16.gmra.mxu0 %v4259
  %v4340 = vpop.f32.mrf.mxu0
  %v4341 = vadd.f32 0.0, %v4340
  %v4342 = vpop.f32.mrf.mxu0
  %v4343 = vpop.f32.mrf.mxu0
  %v4344 = vadd.f32 0.0, %v4343
  %v4345 = vpop.f32.mrf.mxu0
  %4346 = vmatprep.mubr.bf16.mxu0 0
  %4347 = vmatmul.mubr.bf16.gmra.mxu0 %v4260
  %v4348 = vpop.f32.mrf.mxu0
  %v4349 = vadd.f32 0.0, %v4348
  %v4350 = vpop.f32.mrf.mxu0
  %v4351 = vpop.f32.mrf.mxu0
  %v4352 = vadd.f32 0.0, %v4351
  %v4353 = vpop.f32.mrf.mxu0
  %4354 = vmatprep.mubr.bf16.mxu0 0
  %4355 = vmatmul.mubr.bf16.gmra.mxu0 %v4261
  %v4356 = vpop.f32.mrf.mxu0
  %v4357 = vadd.f32 0.0, %v4356
  %v4358 = vpop.f32.mrf.mxu0
  %v4359 = vpop.f32.mrf.mxu0
  %v4360 = vadd.f32 0.0, %v4359
  %v4361 = vpop.f32.mrf.mxu0
  %4362 = vmatprep.mubr.bf16.mxu0 0
  %4363 = vmatmul.mubr.bf16.gmra.mxu0 %v4262
  %v4364 = vpop.f32.mrf.mxu0
  %v4365 = vadd.f32 0.0, %v4364
  %v4366 = vpop.f32.mrf.mxu0
  %v4367 = vpop.f32.mrf.mxu0
  %v4368 = vadd.f32 0.0, %v4367
  %v4369 = vpop.f32.mrf.mxu0
  %4370 = vmatprep.mubr.bf16.mxu0 0
  %4371 = vmatmul.mubr.bf16.gmra.mxu0 %v4263
  %v4372 = vpop.f32.mrf.mxu0
  %v4373 = vadd.f32 0.0, %v4372
  %v4374 = vpop.f32.mrf.mxu0
  %v4375 = vpop.f32.mrf.mxu0
  %v4376 = vadd.f32 0.0, %v4375
  %v4377 = vpop.f32.mrf.mxu0
  %4378 = vmatprep.mubr.bf16.mxu0 0
  %4379 = vmatmul.mubr.bf16.gmra.mxu0 %v4264
  %v4380 = vpop.f32.mrf.mxu0
  %v4381 = vadd.f32 0.0, %v4380
  %v4382 = vpop.f32.mrf.mxu0
  %v4383 = vpop.f32.mrf.mxu0
  %v4384 = vadd.f32 0.0, %v4383
  %v4385 = vpop.f32.mrf.mxu0
  %4386 = vmatprep.mubr.bf16.mxu0 0
  %4387 = vmatmul.mubr.bf16.gmra.mxu0 %v4265
  %v4388 = vpop.f32.mrf.mxu0
  %v4389 = vadd.f32 0.0, %v4388
  %v4390 = vpop.f32.mrf.mxu0
  %v4391 = vpop.f32.mrf.mxu0
  %v4392 = vadd.f32 0.0, %v4391
  %v4393 = vpop.f32.mrf.mxu0
  %4394 = vdwg.mxu0
  %4411 = vrot.lane.b32.xlu0 %v4333, 64
  %v4412 = vpop.permute.xlu0 %4411
  %4413 = vrot.lane.b32.xlu0 %v4336, 64
  %v4414 = vpop.permute.xlu0 %4413
  %4415 = vrot.lane.b32.xlu0 %v4341, 64
  %v4416 = vpop.permute.xlu0 %4415
  %4417 = vrot.lane.b32.xlu0 %v4344, 64
  %v4418 = vpop.permute.xlu0 %4417
  %4419 = vrot.lane.b32.xlu0 %v4349, 64
  %v4420 = vpop.permute.xlu0 %4419
  %4421 = vrot.lane.b32.xlu0 %v4352, 64
  %v4422 = vpop.permute.xlu0 %4421
  %4423 = vrot.lane.b32.xlu0 %v4357, 64
  %v4424 = vpop.permute.xlu0 %4423
  %4425 = vrot.lane.b32.xlu0 %v4360, 64
  %v4426 = vpop.permute.xlu0 %4425
  %4427 = vrot.lane.b32.xlu0 %v4365, 64
  %v4428 = vpop.permute.xlu0 %4427
  %4429 = vrot.lane.b32.xlu0 %v4368, 64
  %v4430 = vpop.permute.xlu0 %4429
  %4431 = vrot.lane.b32.xlu0 %v4373, 64
  %v4432 = vpop.permute.xlu0 %4431
  %4433 = vrot.lane.b32.xlu0 %v4376, 64
  %v4434 = vpop.permute.xlu0 %4433
  %4435 = vrot.lane.b32.xlu0 %v4381, 64
  %v4436 = vpop.permute.xlu0 %4435
  %4437 = vrot.lane.b32.xlu0 %v4384, 64
  %v4438 = vpop.permute.xlu0 %4437
  %4439 = vrot.lane.b32.xlu0 %v4389, 64
  %v4440 = vpop.permute.xlu0 %4439
  %4441 = vrot.lane.b32.xlu0 %v4392, 64
  %v4442 = vpop.permute.xlu0 %4441
  %v4459 = vsel %vm740, %v3859, %v4412
  %v4460 = vsel %vm740, %v3862, %v4414
  %v4461 = vsel %vm740, %v3867, %v4416
  %v4462 = vsel %vm740, %v3870, %v4418
  %v4463 = vsel %vm740, %v3875, %v4420
  %v4464 = vsel %vm740, %v3878, %v4422
  %v4465 = vsel %vm740, %v3883, %v4424
  %v4466 = vsel %vm740, %v3886, %v4426
  %v4467 = vsel %vm740, %v3891, %v4428
  %v4468 = vsel %vm740, %v3894, %v4430
  %v4469 = vsel %vm740, %v3899, %v4432
  %v4470 = vsel %vm740, %v3902, %v4434
  %v4471 = vsel %vm740, %v3907, %v4436
  %v4472 = vsel %vm740, %v3910, %v4438
  %v4473 = vsel %vm740, %v3915, %v4440
  %v4474 = vsel %vm740, %v3918, %v4442
  %v4475 = vpack.c.bf16 %v4460, %v4459
  %v4476 = vpack.c.bf16 %v4462, %v4461
  %v4477 = vpack.c.bf16 %v4464, %v4463
  %v4478 = vpack.c.bf16 %v4466, %v4465
  %v4479 = vpack.c.bf16 %v4468, %v4467
  %v4480 = vpack.c.bf16 %v4470, %v4469
  %v4481 = vpack.c.bf16 %v4472, %v4471
  %v4482 = vpack.c.bf16 %v4474, %v4473
  %s4483 = scalar_lea.vmem %s6, 64
  %v4484 = vld [vmem:[%s4483] sm:$0xf]
  %v4485 = vld [vmem:[%s4483 + $0x4] sm:$0xf]
  %v4486 = vld [vmem:[%s4483 + $0x8] sm:$0xf]
  %v4487 = vld [vmem:[%s4483 + $0xc] sm:$0xf]
  %v4488 = vld [vmem:[%s4483 + $0x10] sm:$0xf]
  %v4489 = vld [vmem:[%s4483 + $0x14] sm:$0xf]
  %v4490 = vld [vmem:[%s4483 + $0x18] sm:$0xf]
  %v4491 = vld [vmem:[%s4483 + $0x1c] sm:$0xf]
  %v4492 = vld [vmem:[%s4483 + $0x20] sm:$0xf]
  %v4493 = vld [vmem:[%s4483 + $0x24] sm:$0xf]
  %v4494 = vld [vmem:[%s4483 + $0x28] sm:$0xf]
  %v4495 = vld [vmem:[%s4483 + $0x2c] sm:$0xf]
  %v4496 = vld [vmem:[%s4483 + $0x30] sm:$0xf]
  %v4497 = vld [vmem:[%s4483 + $0x34] sm:$0xf]
  %v4498 = vld [vmem:[%s4483 + $0x38] sm:$0xf]
  %v4499 = vld [vmem:[%s4483 + $0x3c] sm:$0xf]
  %s4500 = scalar_lea.vmem %s7, 1
  %v4501 = vld [vmem:[%s4500] sm:$0x1]
  %v4503 = vlaneseq
  %v4504 = vshrl.u32 %v4503, 7
  %v4505 = vsub.s32 0, %v4504
  %v4506 = vrot.slane %v4501, %v4505
  %v4524 = vunpack.c.l.b16 %v4484
  %v4525 = vunpack.c.l.b16 %v4485
  %v4526 = vunpack.c.l.b16 %v4486
  %v4527 = vunpack.c.l.b16 %v4487
  %v4528 = vunpack.c.l.b16 %v4488
  %v4529 = vunpack.c.l.b16 %v4489
  %v4530 = vunpack.c.l.b16 %v4490
  %v4531 = vunpack.c.l.b16 %v4491
  %v4532 = vunpack.c.l.b16 %v4492
  %v4533 = vunpack.c.l.b16 %v4493
  %v4534 = vunpack.c.l.b16 %v4494
  %v4535 = vunpack.c.l.b16 %v4495
  %v4536 = vunpack.c.l.b16 %v4496
  %v4537 = vunpack.c.l.b16 %v4497
  %v4538 = vunpack.c.l.b16 %v4498
  %v4539 = vunpack.c.l.b16 %v4499
  %v4540 = vpack.c.b16 %v4525, %v4524
  %v4541 = vpack.c.b16 %v4527, %v4526
  %v4542 = vpack.c.b16 %v4529, %v4528
  %v4543 = vpack.c.b16 %v4531, %v4530
  %v4544 = vpack.c.b16 %v4533, %v4532
  %v4545 = vpack.c.b16 %v4535, %v4534
  %v4546 = vpack.c.b16 %v4537, %v4536
  %v4547 = vpack.c.b16 %v4539, %v4538
  %4556 = vmatprep.subr.bf16.mxu0 0
  %4557 = vmatpush1.bf16.msra.mxu0 %v4547
  %4558 = vmatprep.subr.bf16.mxu0 0
  %4559 = vmatpush1.bf16.msra.mxu0 %v4546
  %4560 = vmatprep.subr.bf16.mxu0 0
  %4561 = vmatpush1.bf16.msra.mxu0 %v4545
  %4562 = vmatprep.subr.bf16.mxu0 0
  %4563 = vmatpush1.bf16.msra.mxu0 %v4544
  %4564 = vmatprep.subr.bf16.mxu0 0
  %4565 = vmatpush1.bf16.msra.mxu0 %v4543
  %4566 = vmatprep.subr.bf16.mxu0 0
  %4567 = vmatpush1.bf16.msra.mxu0 %v4542
  %4568 = vmatprep.subr.bf16.mxu0 0
  %4569 = vmatpush1.bf16.msra.mxu0 %v4541
  %4570 = vmatprep.subr.bf16.mxu0 0
  %4571 = vmatpush1.bf16.msra.mxu0 %v4540
  %4572 = vmatprep.subr.bf16.mxu0 0
  %4573 = vmatpush2.bf16.msra.mxu0 0
  %4574 = vmatprep.subr.bf16.mxu0 0
  %4575 = vmatpush2.bf16.msra.mxu0 0
  %4576 = vmatprep.subr.bf16.mxu0 0
  %4577 = vmatpush2.bf16.msra.mxu0 0
  %4578 = vmatprep.subr.bf16.mxu0 0
  %4579 = vmatpush2.bf16.msra.mxu0 0
  %4580 = vmatprep.subr.bf16.mxu0 0
  %4581 = vmatpush2.bf16.msra.mxu0 0
  %4582 = vmatprep.subr.bf16.mxu0 0
  %4583 = vmatpush2.bf16.msra.mxu0 0
  %4584 = vmatprep.subr.bf16.mxu0 0
  %4585 = vmatpush2.bf16.msra.mxu0 0
  %4586 = vmatprep.subr.bf16.mxu0 0
  %4587 = vmatpush2.bf16.msra.mxu0 0
  %4588 = vmatprep.mubr.bf16.mxu0 0
  %4589 = vmatmul.mubr.bf16.gmra.mxu0 %v4475
  %v4590 = vpop.f32.mrf.mxu0
  %v4591 = vadd.f32 %v4506, %v4590
  %v4592 = vpop.f32.mrf.mxu0
  %v4593 = vpop.f32.mrf.mxu0
  %v4594 = vadd.f32 %v4506, %v4593
  %v4595 = vpop.f32.mrf.mxu0
  %4596 = vmatprep.mubr.bf16.mxu0 0
  %4597 = vmatmul.mubr.bf16.gmra.mxu0 %v4476
  %v4598 = vpop.f32.mrf.mxu0
  %v4599 = vadd.f32 %v4506, %v4598
  %v4600 = vpop.f32.mrf.mxu0
  %v4601 = vpop.f32.mrf.mxu0
  %v4602 = vadd.f32 %v4506, %v4601
  %v4603 = vpop.f32.mrf.mxu0
  %4604 = vmatprep.mubr.bf16.mxu0 0
  %4605 = vmatmul.mubr.bf16.gmra.mxu0 %v4477
  %v4606 = vpop.f32.mrf.mxu0
  %v4607 = vadd.f32 %v4506, %v4606
  %v4608 = vpop.f32.mrf.mxu0
  %v4609 = vpop.f32.mrf.mxu0
  %v4610 = vadd.f32 %v4506, %v4609
  %v4611 = vpop.f32.mrf.mxu0
  %4612 = vmatprep.mubr.bf16.mxu0 0
  %4613 = vmatmul.mubr.bf16.gmra.mxu0 %v4478
  %v4614 = vpop.f32.mrf.mxu0
  %v4615 = vadd.f32 %v4506, %v4614
  %v4616 = vpop.f32.mrf.mxu0
  %v4617 = vpop.f32.mrf.mxu0
  %v4618 = vadd.f32 %v4506, %v4617
  %v4619 = vpop.f32.mrf.mxu0
  %4620 = vmatprep.mubr.bf16.mxu0 0
  %4621 = vmatmul.mubr.bf16.gmra.mxu0 %v4479
  %v4622 = vpop.f32.mrf.mxu0
  %v4623 = vadd.f32 %v4506, %v4622
  %v4624 = vpop.f32.mrf.mxu0
  %v4625 = vpop.f32.mrf.mxu0
  %v4626 = vadd.f32 %v4506, %v4625
  %v4627 = vpop.f32.mrf.mxu0
  %4628 = vmatprep.mubr.bf16.mxu0 0
  %4629 = vmatmul.mubr.bf16.gmra.mxu0 %v4480
  %v4630 = vpop.f32.mrf.mxu0
  %v4631 = vadd.f32 %v4506, %v4630
  %v4632 = vpop.f32.mrf.mxu0
  %v4633 = vpop.f32.mrf.mxu0
  %v4634 = vadd.f32 %v4506, %v4633
  %v4635 = vpop.f32.mrf.mxu0
  %4636 = vmatprep.mubr.bf16.mxu0 0
  %4637 = vmatmul.mubr.bf16.gmra.mxu0 %v4481
  %v4638 = vpop.f32.mrf.mxu0
  %v4639 = vadd.f32 %v4506, %v4638
  %v4640 = vpop.f32.mrf.mxu0
  %v4641 = vpop.f32.mrf.mxu0
  %v4642 = vadd.f32 %v4506, %v4641
  %v4643 = vpop.f32.mrf.mxu0
  %4644 = vmatprep.mubr.bf16.mxu0 0
  %4645 = vmatmul.mubr.bf16.gmra.mxu0 %v4482
  %v4646 = vpop.f32.mrf.mxu0
  %v4647 = vadd.f32 %v4506, %v4646
  %v4648 = vpop.f32.mrf.mxu0
  %v4649 = vpop.f32.mrf.mxu0
  %v4650 = vadd.f32 %v4506, %v4649
  %v4651 = vpop.f32.mrf.mxu0
  %4652 = vdwg.mxu0
  %v4653 = vadd.f32 %v3090, %v4591
  %v4654 = vadd.f32 %v3091, %v4594
  %v4655 = vadd.f32 %v3092, %v4599
  %v4656 = vadd.f32 %v3093, %v4602
  %v4657 = vadd.f32 %v3094, %v4607
  %v4658 = vadd.f32 %v3095, %v4610
  %v4659 = vadd.f32 %v3096, %v4615
  %v4660 = vadd.f32 %v3097, %v4618
  %v4661 = vadd.f32 %v3098, %v4623
  %v4662 = vadd.f32 %v3099, %v4626
  %v4663 = vadd.f32 %v3100, %v4631
  %v4664 = vadd.f32 %v3101, %v4634
  %v4665 = vadd.f32 %v3102, %v4639
  %v4666 = vadd.f32 %v3103, %v4642
  %v4667 = vadd.f32 %v3104, %v4647
  %v4668 = vadd.f32 %v3105, %v4650
  %s4669 = scalar_lea.vmem %s8, 1
  %v4670 = vld [vmem:[%s4669] sm:$0x1]
  %s4671 = scalar_lea.vmem %s9, 1
  %v4672 = vld [vmem:[%s4671] sm:$0x1]
  %4673 = vadd.xlane.f32.xlu0 %v4653
  %v4674 = vpop.xlane.xlu0 %4673
  %4675 = vadd.xlane.f32.xlu0 %v4654
  %v4676 = vpop.xlane.xlu0 %4675
  %4677 = vadd.xlane.f32.xlu0 %v4655
  %v4678 = vpop.xlane.xlu0 %4677
  %4679 = vadd.xlane.f32.xlu0 %v4656
  %v4680 = vpop.xlane.xlu0 %4679
  %4681 = vadd.xlane.f32.xlu0 %v4657
  %v4682 = vpop.xlane.xlu0 %4681
  %4683 = vadd.xlane.f32.xlu0 %v4658
  %v4684 = vpop.xlane.xlu0 %4683
  %4685 = vadd.xlane.f32.xlu0 %v4659
  %v4686 = vpop.xlane.xlu0 %4685
  %4687 = vadd.xlane.f32.xlu0 %v4660
  %v4688 = vpop.xlane.xlu0 %4687
  %4689 = vadd.xlane.f32.xlu0 %v4661
  %v4690 = vpop.xlane.xlu0 %4689
  %4691 = vadd.xlane.f32.xlu0 %v4662
  %v4692 = vpop.xlane.xlu0 %4691
  %4693 = vadd.xlane.f32.xlu0 %v4663
  %v4694 = vpop.xlane.xlu0 %4693
  %4695 = vadd.xlane.f32.xlu0 %v4664
  %v4696 = vpop.xlane.xlu0 %4695
  %4697 = vadd.xlane.f32.xlu0 %v4665
  %v4698 = vpop.xlane.xlu0 %4697
  %4699 = vadd.xlane.f32.xlu0 %v4666
  %v4700 = vpop.xlane.xlu0 %4699
  %4701 = vadd.xlane.f32.xlu0 %v4667
  %v4702 = vpop.xlane.xlu0 %4701
  %4703 = vadd.xlane.f32.xlu0 %v4668
  %v4704 = vpop.xlane.xlu0 %4703
  %v4705 = vmul.f32 %v4674, %v116
  %v4706 = vmul.f32 %v4676, %v116
  %v4707 = vmul.f32 %v4678, %v116
  %v4708 = vmul.f32 %v4680, %v116
  %v4709 = vmul.f32 %v4682, %v116
  %v4710 = vmul.f32 %v4684, %v116
  %v4711 = vmul.f32 %v4686, %v116
  %v4712 = vmul.f32 %v4688, %v116
  %v4713 = vmul.f32 %v4690, %v116
  %v4714 = vmul.f32 %v4692, %v116
  %v4715 = vmul.f32 %v4694, %v116
  %v4716 = vmul.f32 %v4696, %v116
  %v4717 = vmul.f32 %v4698, %v116
  %v4718 = vmul.f32 %v4700, %v116
  %v4719 = vmul.f32 %v4702, %v116
  %v4720 = vmul.f32 %v4704, %v116
  %v4721 = vsub.f32 %v4653, %v4705
  %v4722 = vsub.f32 %v4654, %v4706
  %v4723 = vsub.f32 %v4655, %v4707
  %v4724 = vsub.f32 %v4656, %v4708
  %v4725 = vsub.f32 %v4657, %v4709
  %v4726 = vsub.f32 %v4658, %v4710
  %v4727 = vsub.f32 %v4659, %v4711
  %v4728 = vsub.f32 %v4660, %v4712
  %v4729 = vsub.f32 %v4661, %v4713
  %v4730 = vsub.f32 %v4662, %v4714
  %v4731 = vsub.f32 %v4663, %v4715
  %v4732 = vsub.f32 %v4664, %v4716
  %v4733 = vsub.f32 %v4665, %v4717
  %v4734 = vsub.f32 %v4666, %v4718
  %v4735 = vsub.f32 %v4667, %v4719
  %v4736 = vsub.f32 %v4668, %v4720
  %v4737 = vmul.f32 %v4721, %v4721
  %v4738 = vmul.f32 %v4722, %v4722
  %v4739 = vmul.f32 %v4723, %v4723
  %v4740 = vmul.f32 %v4724, %v4724
  %v4741 = vmul.f32 %v4725, %v4725
  %v4742 = vmul.f32 %v4726, %v4726
  %v4743 = vmul.f32 %v4727, %v4727
  %v4744 = vmul.f32 %v4728, %v4728
  %v4745 = vmul.f32 %v4729, %v4729
  %v4746 = vmul.f32 %v4730, %v4730
  %v4747 = vmul.f32 %v4731, %v4731
  %v4748 = vmul.f32 %v4732, %v4732
  %v4749 = vmul.f32 %v4733, %v4733
  %v4750 = vmul.f32 %v4734, %v4734
  %v4751 = vmul.f32 %v4735, %v4735
  %v4752 = vmul.f32 %v4736, %v4736
  %4753 = vadd.xlane.f32.xlu0 %v4737
  %v4754 = vpop.xlane.xlu0 %4753
  %4755 = vadd.xlane.f32.xlu0 %v4738
  %v4756 = vpop.xlane.xlu0 %4755
  %4757 = vadd.xlane.f32.xlu0 %v4739
  %v4758 = vpop.xlane.xlu0 %4757
  %4759 = vadd.xlane.f32.xlu0 %v4740
  %v4760 = vpop.xlane.xlu0 %4759
  %4761 = vadd.xlane.f32.xlu0 %v4741
  %v4762 = vpop.xlane.xlu0 %4761
  %4763 = vadd.xlane.f32.xlu0 %v4742
  %v4764 = vpop.xlane.xlu0 %4763
  %4765 = vadd.xlane.f32.xlu0 %v4743
  %v4766 = vpop.xlane.xlu0 %4765
  %4767 = vadd.xlane.f32.xlu0 %v4744
  %v4768 = vpop.xlane.xlu0 %4767
  %4769 = vadd.xlane.f32.xlu0 %v4745
  %v4770 = vpop.xlane.xlu0 %4769
  %4771 = vadd.xlane.f32.xlu0 %v4746
  %v4772 = vpop.xlane.xlu0 %4771
  %4773 = vadd.xlane.f32.xlu0 %v4747
  %v4774 = vpop.xlane.xlu0 %4773
  %4775 = vadd.xlane.f32.xlu0 %v4748
  %v4776 = vpop.xlane.xlu0 %4775
  %4777 = vadd.xlane.f32.xlu0 %v4749
  %v4778 = vpop.xlane.xlu0 %4777
  %4779 = vadd.xlane.f32.xlu0 %v4750
  %v4780 = vpop.xlane.xlu0 %4779
  %4781 = vadd.xlane.f32.xlu0 %v4751
  %v4782 = vpop.xlane.xlu0 %4781
  %4783 = vadd.xlane.f32.xlu0 %v4752
  %v4784 = vpop.xlane.xlu0 %4783
  %v4785 = vmul.f32 %v4754, %v116
  %v4786 = vmul.f32 %v4756, %v116
  %v4787 = vmul.f32 %v4758, %v116
  %v4788 = vmul.f32 %v4760, %v116
  %v4789 = vmul.f32 %v4762, %v116
  %v4790 = vmul.f32 %v4764, %v116
  %v4791 = vmul.f32 %v4766, %v116
  %v4792 = vmul.f32 %v4768, %v116
  %v4793 = vmul.f32 %v4770, %v116
  %v4794 = vmul.f32 %v4772, %v116
  %v4795 = vmul.f32 %v4774, %v116
  %v4796 = vmul.f32 %v4776, %v116
  %v4797 = vmul.f32 %v4778, %v116
  %v4798 = vmul.f32 %v4780, %v116
  %v4799 = vmul.f32 %v4782, %v116
  %v4800 = vmul.f32 %v4784, %v116
  %v4801 = vadd.f32 %v4785, 1e-12
  %v4802 = vadd.f32 %v4786, 1e-12
  %v4803 = vadd.f32 %v4787, 1e-12
  %v4804 = vadd.f32 %v4788, 1e-12
  %v4805 = vadd.f32 %v4789, 1e-12
  %v4806 = vadd.f32 %v4790, 1e-12
  %v4807 = vadd.f32 %v4791, 1e-12
  %v4808 = vadd.f32 %v4792, 1e-12
  %v4809 = vadd.f32 %v4793, 1e-12
  %v4810 = vadd.f32 %v4794, 1e-12
  %v4811 = vadd.f32 %v4795, 1e-12
  %v4812 = vadd.f32 %v4796, 1e-12
  %v4813 = vadd.f32 %v4797, 1e-12
  %v4814 = vadd.f32 %v4798, 1e-12
  %v4815 = vadd.f32 %v4799, 1e-12
  %v4816 = vadd.f32 %v4800, 1e-12
  %v4817 = vrsqrt.pop %v4801
  %v4818 = vrsqrt.pop %v4802
  %v4819 = vrsqrt.pop %v4803
  %v4820 = vrsqrt.pop %v4804
  %v4821 = vrsqrt.pop %v4805
  %v4822 = vrsqrt.pop %v4806
  %v4823 = vrsqrt.pop %v4807
  %v4824 = vrsqrt.pop %v4808
  %v4825 = vrsqrt.pop %v4809
  %v4826 = vrsqrt.pop %v4810
  %v4827 = vrsqrt.pop %v4811
  %v4828 = vrsqrt.pop %v4812
  %v4829 = vrsqrt.pop %v4813
  %v4830 = vrsqrt.pop %v4814
  %v4831 = vrsqrt.pop %v4815
  %v4832 = vrsqrt.pop %v4816
  %v4833 = vmul.f32 %v4721, %v4817
  %v4834 = vmul.f32 %v4722, %v4818
  %v4835 = vmul.f32 %v4723, %v4819
  %v4836 = vmul.f32 %v4724, %v4820
  %v4837 = vmul.f32 %v4725, %v4821
  %v4838 = vmul.f32 %v4726, %v4822
  %v4839 = vmul.f32 %v4727, %v4823
  %v4840 = vmul.f32 %v4728, %v4824
  %v4841 = vmul.f32 %v4729, %v4825
  %v4842 = vmul.f32 %v4730, %v4826
  %v4843 = vmul.f32 %v4731, %v4827
  %v4844 = vmul.f32 %v4732, %v4828
  %v4845 = vmul.f32 %v4733, %v4829
  %v4846 = vmul.f32 %v4734, %v4830
  %v4847 = vmul.f32 %v4735, %v4831
  %v4848 = vmul.f32 %v4736, %v4832
  %v4850 = vlaneseq
  %v4851 = vshrl.u32 %v4850, 7
  %v4852 = vsub.s32 0, %v4851
  %v4853 = vrot.slane %v4670, %v4852
  %v4855 = vmul.f32 %v4833, %v4853
  %v4856 = vmul.f32 %v4834, %v4853
  %v4857 = vmul.f32 %v4835, %v4853
  %v4858 = vmul.f32 %v4836, %v4853
  %v4859 = vmul.f32 %v4837, %v4853
  %v4860 = vmul.f32 %v4838, %v4853
  %v4861 = vmul.f32 %v4839, %v4853
  %v4862 = vmul.f32 %v4840, %v4853
  %v4863 = vmul.f32 %v4841, %v4853
  %v4864 = vmul.f32 %v4842, %v4853
  %v4865 = vmul.f32 %v4843, %v4853
  %v4866 = vmul.f32 %v4844, %v4853
  %v4867 = vmul.f32 %v4845, %v4853
  %v4868 = vmul.f32 %v4846, %v4853
  %v4869 = vmul.f32 %v4847, %v4853
  %v4870 = vmul.f32 %v4848, %v4853
  %v4872 = vlaneseq
  %v4873 = vshrl.u32 %v4872, 7
  %v4874 = vsub.s32 0, %v4873
  %v4875 = vrot.slane %v4672, %v4874
  %v4877 = vadd.f32 %v4855, %v4875
  %v4878 = vadd.f32 %v4856, %v4875
  %v4879 = vadd.f32 %v4857, %v4875
  %v4880 = vadd.f32 %v4858, %v4875
  %v4881 = vadd.f32 %v4859, %v4875
  %v4882 = vadd.f32 %v4860, %v4875
  %v4883 = vadd.f32 %v4861, %v4875
  %v4884 = vadd.f32 %v4862, %v4875
  %v4885 = vadd.f32 %v4863, %v4875
  %v4886 = vadd.f32 %v4864, %v4875
  %v4887 = vadd.f32 %v4865, %v4875
  %v4888 = vadd.f32 %v4866, %v4875
  %v4889 = vadd.f32 %v4867, %v4875
  %v4890 = vadd.f32 %v4868, %v4875
  %v4891 = vadd.f32 %v4869, %v4875
  %v4892 = vadd.f32 %v4870, %v4875
  %v4893 = vpack.c.bf16 %v4878, %v4877
  %v4894 = vpack.c.bf16 %v4880, %v4879
  %v4895 = vpack.c.bf16 %v4882, %v4881
  %v4896 = vpack.c.bf16 %v4884, %v4883
  %v4897 = vpack.c.bf16 %v4886, %v4885
  %v4898 = vpack.c.bf16 %v4888, %v4887
  %v4899 = vpack.c.bf16 %v4890, %v4889
  %v4900 = vpack.c.bf16 %v4892, %v4891
  %s4901 = scalar_lea.vmem %s10, 128
  %v4902 = vld [vmem:[%s4901] sm:$0xff]
  %v4903 = vld [vmem:[%s4901 + $0x8] sm:$0xff]
  %v4904 = vld [vmem:[%s4901 + $0x10] sm:$0xff]
  %v4905 = vld [vmem:[%s4901 + $0x18] sm:$0xff]
  %v4906 = vld [vmem:[%s4901 + $0x20] sm:$0xff]
  %v4907 = vld [vmem:[%s4901 + $0x28] sm:$0xff]
  %v4908 = vld [vmem:[%s4901 + $0x30] sm:$0xff]
  %v4909 = vld [vmem:[%s4901 + $0x38] sm:$0xff]
  %v4910 = vld [vmem:[%s4901 + $0x40] sm:$0xff]
  %v4911 = vld [vmem:[%s4901 + $0x48] sm:$0xff]
  %v4912 = vld [vmem:[%s4901 + $0x50] sm:$0xff]
  %v4913 = vld [vmem:[%s4901 + $0x58] sm:$0xff]
  %v4914 = vld [vmem:[%s4901 + $0x60] sm:$0xff]
  %v4915 = vld [vmem:[%s4901 + $0x68] sm:$0xff]
  %v4916 = vld [vmem:[%s4901 + $0x70] sm:$0xff]
  %v4917 = vld [vmem:[%s4901 + $0x78] sm:$0xff]
  %s4918 = scalar_lea.vmem %s11, 2
  %v4919 = vld [vmem:[%s4918] sm:$0x3]
  %v4921 = vlaneseq
  %v4922 = vshrl.u32 %v4921, 7
  %v4923 = vsub.s32 0, %v4922
  %v4924 = vrot.slane %v4919, %v4923
  %v4925 = vlaneseq
  %v4926 = vshrl.u32 %v4925, 7
  %v4927 = vsub.s32 1, %v4926
  %v4928 = vrot.slane %v4919, %v4927
  %v4947 = vunpack.c.l.b16 %v4902
  %v4948 = vunpack.c.h.b16 %v4902
  %v4949 = vunpack.c.l.b16 %v4903
  %v4950 = vunpack.c.h.b16 %v4903
  %v4951 = vunpack.c.l.b16 %v4904
  %v4952 = vunpack.c.h.b16 %v4904
  %v4953 = vunpack.c.l.b16 %v4905
  %v4954 = vunpack.c.h.b16 %v4905
  %v4955 = vunpack.c.l.b16 %v4906
  %v4956 = vunpack.c.h.b16 %v4906
  %v4957 = vunpack.c.l.b16 %v4907
  %v4958 = vunpack.c.h.b16 %v4907
  %v4959 = vunpack.c.l.b16 %v4908
  %v4960 = vunpack.c.h.b16 %v4908
  %v4961 = vunpack.c.l.b16 %v4909
  %v4962 = vunpack.c.h.b16 %v4909
  %v4963 = vunpack.c.l.b16 %v4910
  %v4964 = vunpack.c.h.b16 %v4910
  %v4965 = vunpack.c.l.b16 %v4911
  %v4966 = vunpack.c.h.b16 %v4911
  %v4967 = vunpack.c.l.b16 %v4912
  %v4968 = vunpack.c.h.b16 %v4912
  %v4969 = vunpack.c.l.b16 %v4913
  %v4970 = vunpack.c.h.b16 %v4913
  %v4971 = vunpack.c.l.b16 %v4914
  %v4972 = vunpack.c.h.b16 %v4914
  %v4973 = vunpack.c.l.b16 %v4915
  %v4974 = vunpack.c.h.b16 %v4915
  %v4975 = vunpack.c.l.b16 %v4916
  %v4976 = vunpack.c.h.b16 %v4916
  %v4977 = vunpack.c.l.b16 %v4917
  %v4978 = vunpack.c.h.b16 %v4917
  %v4979 = vpack.c.b16 %v4949, %v4947
  %v4980 = vpack.c.b16 %v4950, %v4948
  %v4981 = vpack.c.b16 %v4953, %v4951
  %v4982 = vpack.c.b16 %v4954, %v4952
  %v4983 = vpack.c.b16 %v4957, %v4955
  %v4984 = vpack.c.b16 %v4958, %v4956
  %v4985 = vpack.c.b16 %v4961, %v4959
  %v4986 = vpack.c.b16 %v4962, %v4960
  %v4987 = vpack.c.b16 %v4965, %v4963
  %v4988 = vpack.c.b16 %v4966, %v4964
  %v4989 = vpack.c.b16 %v4969, %v4967
  %v4990 = vpack.c.b16 %v4970, %v4968
  %v4991 = vpack.c.b16 %v4973, %v4971
  %v4992 = vpack.c.b16 %v4974, %v4972
  %v4993 = vpack.c.b16 %v4977, %v4975
  %v4994 = vpack.c.b16 %v4978, %v4976
  %5011 = vmatprep.subr.bf16.mxu0 %v4994
  %5012 = vmatpush1.bf16.msra.mxu0 %v4993
  %5013 = vmatprep.subr.bf16.mxu0 %v4992
  %5014 = vmatpush1.bf16.msra.mxu0 %v4991
  %5015 = vmatprep.subr.bf16.mxu0 %v4990
  %5016 = vmatpush1.bf16.msra.mxu0 %v4989
  %5017 = vmatprep.subr.bf16.mxu0 %v4988
  %5018 = vmatpush1.bf16.msra.mxu0 %v4987
  %5019 = vmatprep.subr.bf16.mxu0 %v4986
  %5020 = vmatpush1.bf16.msra.mxu0 %v4985
  %5021 = vmatprep.subr.bf16.mxu0 %v4984
  %5022 = vmatpush1.bf16.msra.mxu0 %v4983
  %5023 = vmatprep.subr.bf16.mxu0 %v4982
  %5024 = vmatpush1.bf16.msra.mxu0 %v4981
  %5025 = vmatprep.subr.bf16.mxu0 %v4980
  %5026 = vmatpush1.bf16.msra.mxu0 %v4979
  %5027 = vmatprep.subr.bf16.mxu0 0
  %5028 = vmatpush2.bf16.msra.mxu0 0
  %5029 = vmatprep.subr.bf16.mxu0 0
  %5030 = vmatpush2.bf16.msra.mxu0 0
  %5031 = vmatprep.subr.bf16.mxu0 0
  %5032 = vmatpush2.bf16.msra.mxu0 0
  %5033 = vmatprep.subr.bf16.mxu0 0
  %5034 = vmatpush2.bf16.msra.mxu0 0
  %5035 = vmatprep.subr.bf16.mxu0 0
  %5036 = vmatpush2.bf16.msra.mxu0 0
  %5037 = vmatprep.subr.bf16.mxu0 0
  %5038 = vmatpush2.bf16.msra.mxu0 0
  %5039 = vmatprep.subr.bf16.mxu0 0
  %5040 = vmatpush2.bf16.msra.mxu0 0
  %5041 = vmatprep.subr.bf16.mxu0 0
  %5042 = vmatpush2.bf16.msra.mxu0 0
  %5043 = vmatprep.mubr.bf16.mxu0 0
  %5044 = vmatmul.mubr.bf16.gmra.mxu0 %v4893
  %v5045 = vpop.f32.mrf.mxu0
  %v5046 = vadd.f32 %v4924, %v5045
  %v5047 = vpop.f32.mrf.mxu0
  %v5048 = vadd.f32 %v4928, %v5047
  %v5049 = vpop.f32.mrf.mxu0
  %v5050 = vadd.f32 %v4924, %v5049
  %v5051 = vpop.f32.mrf.mxu0
  %v5052 = vadd.f32 %v4928, %v5051
  %5053 = vmatprep.mubr.bf16.mxu0 0
  %5054 = vmatmul.mubr.bf16.gmra.mxu0 %v4894
  %v5055 = vpop.f32.mrf.mxu0
  %v5056 = vadd.f32 %v4924, %v5055
  %v5057 = vpop.f32.mrf.mxu0
  %v5058 = vadd.f32 %v4928, %v5057
  %v5059 = vpop.f32.mrf.mxu0
  %v5060 = vadd.f32 %v4924, %v5059
  %v5061 = vpop.f32.mrf.mxu0
  %v5062 = vadd.f32 %v4928, %v5061
  %5063 = vmatprep.mubr.bf16.mxu0 0
  %5064 = vmatmul.mubr.bf16.gmra.mxu0 %v4895
  %v5065 = vpop.f32.mrf.mxu0
  %v5066 = vadd.f32 %v4924, %v5065
  %v5067 = vpop.f32.mrf.mxu0
  %v5068 = vadd.f32 %v4928, %v5067
  %v5069 = vpop.f32.mrf.mxu0
  %v5070 = vadd.f32 %v4924, %v5069
  %v5071 = vpop.f32.mrf.mxu0
  %v5072 = vadd.f32 %v4928, %v5071
  %5073 = vmatprep.mubr.bf16.mxu0 0
  %5074 = vmatmul.mubr.bf16.gmra.mxu0 %v4896
  %v5075 = vpop.f32.mrf.mxu0
  %v5076 = vadd.f32 %v4924, %v5075
  %v5077 = vpop.f32.mrf.mxu0
  %v5078 = vadd.f32 %v4928, %v5077
  %v5079 = vpop.f32.mrf.mxu0
  %v5080 = vadd.f32 %v4924, %v5079
  %v5081 = vpop.f32.mrf.mxu0
  %v5082 = vadd.f32 %v4928, %v5081
  %5083 = vmatprep.mubr.bf16.mxu0 0
  %5084 = vmatmul.mubr.bf16.gmra.mxu0 %v4897
  %v5085 = vpop.f32.mrf.mxu0
  %v5086 = vadd.f32 %v4924, %v5085
  %v5087 = vpop.f32.mrf.mxu0
  %v5088 = vadd.f32 %v4928, %v5087
  %v5089 = vpop.f32.mrf.mxu0
  %v5090 = vadd.f32 %v4924, %v5089
  %v5091 = vpop.f32.mrf.mxu0
  %v5092 = vadd.f32 %v4928, %v5091
  %5093 = vmatprep.mubr.bf16.mxu0 0
  %5094 = vmatmul.mubr.bf16.gmra.mxu0 %v4898
  %v5095 = vpop.f32.mrf.mxu0
  %v5096 = vadd.f32 %v4924, %v5095
  %v5097 = vpop.f32.mrf.mxu0
  %v5098 = vadd.f32 %v4928, %v5097
  %v5099 = vpop.f32.mrf.mxu0
  %v5100 = vadd.f32 %v4924, %v5099
  %v5101 = vpop.f32.mrf.mxu0
  %v5102 = vadd.f32 %v4928, %v5101
  %5103 = vmatprep.mubr.bf16.mxu0 0
  %5104 = vmatmul.mubr.bf16.gmra.mxu0 %v4899
  %v5105 = vpop.f32.mrf.mxu0
  %v5106 = vadd.f32 %v4924, %v5105
  %v5107 = vpop.f32.mrf.mxu0
  %v5108 = vadd.f32 %v4928, %v5107
  %v5109 = vpop.f32.mrf.mxu0
  %v5110 = vadd.f32 %v4924, %v5109
  %v5111 = vpop.f32.mrf.mxu0
  %v5112 = vadd.f32 %v4928, %v5111
  %5113 = vmatprep.mubr.bf16.mxu0 0
  %5114 = vmatmul.mubr.bf16.gmra.mxu0 %v4900
  %v5115 = vpop.f32.mrf.mxu0
  %v5116 = vadd.f32 %v4924, %v5115
  %v5117 = vpop.f32.mrf.mxu0
  %v5118 = vadd.f32 %v4928, %v5117
  %v5119 = vpop.f32.mrf.mxu0
  %v5120 = vadd.f32 %v4924, %v5119
  %v5121 = vpop.f32.mrf.mxu0
  %v5122 = vadd.f32 %v4928, %v5121
  %5123 = vdwg.mxu0
  %v5124 = vmul.f32 %v5046, 0.5
  %v5125 = vmul.f32 %v5048, 0.5
  %v5126 = vmul.f32 %v5050, 0.5
  %v5127 = vmul.f32 %v5052, 0.5
  %v5128 = vmul.f32 %v5056, 0.5
  %v5129 = vmul.f32 %v5058, 0.5
  %v5130 = vmul.f32 %v5060, 0.5
  %v5131 = vmul.f32 %v5062, 0.5
  %v5132 = vmul.f32 %v5066, 0.5
  %v5133 = vmul.f32 %v5068, 0.5
  %v5134 = vmul.f32 %v5070, 0.5
  %v5135 = vmul.f32 %v5072, 0.5
  %v5136 = vmul.f32 %v5076, 0.5
  %v5137 = vmul.f32 %v5078, 0.5
  %v5138 = vmul.f32 %v5080, 0.5
  %v5139 = vmul.f32 %v5082, 0.5
  %v5140 = vmul.f32 %v5086, 0.5
  %v5141 = vmul.f32 %v5088, 0.5
  %v5142 = vmul.f32 %v5090, 0.5
  %v5143 = vmul.f32 %v5092, 0.5
  %v5144 = vmul.f32 %v5096, 0.5
  %v5145 = vmul.f32 %v5098, 0.5
  %v5146 = vmul.f32 %v5100, 0.5
  %v5147 = vmul.f32 %v5102, 0.5
  %v5148 = vmul.f32 %v5106, 0.5
  %v5149 = vmul.f32 %v5108, 0.5
  %v5150 = vmul.f32 %v5110, 0.5
  %v5151 = vmul.f32 %v5112, 0.5
  %v5152 = vmul.f32 %v5116, 0.5
  %v5153 = vmul.f32 %v5118, 0.5
  %v5154 = vmul.f32 %v5120, 0.5
  %v5155 = vmul.f32 %v5122, 0.5
  %v5156 = vmul.f32 %v5046, 0.044715
  %v5157 = vmul.f32 %v5048, 0.044715
  %v5158 = vmul.f32 %v5050, 0.044715
  %v5159 = vmul.f32 %v5052, 0.044715
  %v5160 = vmul.f32 %v5056, 0.044715
  %v5161 = vmul.f32 %v5058, 0.044715
  %v5162 = vmul.f32 %v5060, 0.044715
  %v5163 = vmul.f32 %v5062, 0.044715
  %v5164 = vmul.f32 %v5066, 0.044715
  %v5165 = vmul.f32 %v5068, 0.044715
  %v5166 = vmul.f32 %v5070, 0.044715
  %v5167 = vmul.f32 %v5072, 0.044715
  %v5168 = vmul.f32 %v5076, 0.044715
  %v5169 = vmul.f32 %v5078, 0.044715
  %v5170 = vmul.f32 %v5080, 0.044715
  %v5171 = vmul.f32 %v5082, 0.044715
  %v5172 = vmul.f32 %v5086, 0.044715
  %v5173 = vmul.f32 %v5088, 0.044715
  %v5174 = vmul.f32 %v5090, 0.044715
  %v5175 = vmul.f32 %v5092, 0.044715
  %v5176 = vmul.f32 %v5096, 0.044715
  %v5177 = vmul.f32 %v5098, 0.044715
  %v5178 = vmul.f32 %v5100, 0.044715
  %v5179 = vmul.f32 %v5102, 0.044715
  %v5180 = vmul.f32 %v5106, 0.044715
  %v5181 = vmul.f32 %v5108, 0.044715
  %v5182 = vmul.f32 %v5110, 0.044715
  %v5183 = vmul.f32 %v5112, 0.044715
  %v5184 = vmul.f32 %v5116, 0.044715
  %v5185 = vmul.f32 %v5118, 0.044715
  %v5186 = vmul.f32 %v5120, 0.044715
  %v5187 = vmul.f32 %v5122, 0.044715
  %v5188 = vmul.f32 %v5156, %v5046
  %v5189 = vmul.f32 %v5157, %v5048
  %v5190 = vmul.f32 %v5158, %v5050
  %v5191 = vmul.f32 %v5159, %v5052
  %v5192 = vmul.f32 %v5160, %v5056
  %v5193 = vmul.f32 %v5161, %v5058
  %v5194 = vmul.f32 %v5162, %v5060
  %v5195 = vmul.f32 %v5163, %v5062
  %v5196 = vmul.f32 %v5164, %v5066
  %v5197 = vmul.f32 %v5165, %v5068
  %v5198 = vmul.f32 %v5166, %v5070
  %v5199 = vmul.f32 %v5167, %v5072
  %v5200 = vmul.f32 %v5168, %v5076
  %v5201 = vmul.f32 %v5169, %v5078
  %v5202 = vmul.f32 %v5170, %v5080
  %v5203 = vmul.f32 %v5171, %v5082
  %v5204 = vmul.f32 %v5172, %v5086
  %v5205 = vmul.f32 %v5173, %v5088
  %v5206 = vmul.f32 %v5174, %v5090
  %v5207 = vmul.f32 %v5175, %v5092
  %v5208 = vmul.f32 %v5176, %v5096
  %v5209 = vmul.f32 %v5177, %v5098
  %v5210 = vmul.f32 %v5178, %v5100
  %v5211 = vmul.f32 %v5179, %v5102
  %v5212 = vmul.f32 %v5180, %v5106
  %v5213 = vmul.f32 %v5181, %v5108
  %v5214 = vmul.f32 %v5182, %v5110
  %v5215 = vmul.f32 %v5183, %v5112
  %v5216 = vmul.f32 %v5184, %v5116
  %v5217 = vmul.f32 %v5185, %v5118
  %v5218 = vmul.f32 %v5186, %v5120
  %v5219 = vmul.f32 %v5187, %v5122
  %v5220 = vmul.f32 %v5188, %v5046
  %v5221 = vmul.f32 %v5189, %v5048
  %v5222 = vmul.f32 %v5190, %v5050
  %v5223 = vmul.f32 %v5191, %v5052
  %v5224 = vmul.f32 %v5192, %v5056
  %v5225 = vmul.f32 %v5193, %v5058
  %v5226 = vmul.f32 %v5194, %v5060
  %v5227 = vmul.f32 %v5195, %v5062
  %v5228 = vmul.f32 %v5196, %v5066
  %v5229 = vmul.f32 %v5197, %v5068
  %v5230 = vmul.f32 %v5198, %v5070
  %v5231 = vmul.f32 %v5199, %v5072
  %v5232 = vmul.f32 %v5200, %v5076
  %v5233 = vmul.f32 %v5201, %v5078
  %v5234 = vmul.f32 %v5202, %v5080
  %v5235 = vmul.f32 %v5203, %v5082
  %v5236 = vmul.f32 %v5204, %v5086
  %v5237 = vmul.f32 %v5205, %v5088
  %v5238 = vmul.f32 %v5206, %v5090
  %v5239 = vmul.f32 %v5207, %v5092
  %v5240 = vmul.f32 %v5208, %v5096
  %v5241 = vmul.f32 %v5209, %v5098
  %v5242 = vmul.f32 %v5210, %v5100
  %v5243 = vmul.f32 %v5211, %v5102
  %v5244 = vmul.f32 %v5212, %v5106
  %v5245 = vmul.f32 %v5213, %v5108
  %v5246 = vmul.f32 %v5214, %v5110
  %v5247 = vmul.f32 %v5215, %v5112
  %v5248 = vmul.f32 %v5216, %v5116
  %v5249 = vmul.f32 %v5217, %v5118
  %v5250 = vmul.f32 %v5218, %v5120
  %v5251 = vmul.f32 %v5219, %v5122
  %v5252 = vadd.f32 %v5046, %v5220
  %v5253 = vadd.f32 %v5048, %v5221
  %v5254 = vadd.f32 %v5050, %v5222
  %v5255 = vadd.f32 %v5052, %v5223
  %v5256 = vadd.f32 %v5056, %v5224
  %v5257 = vadd.f32 %v5058, %v5225
  %v5258 = vadd.f32 %v5060, %v5226
  %v5259 = vadd.f32 %v5062, %v5227
  %v5260 = vadd.f32 %v5066, %v5228
  %v5261 = vadd.f32 %v5068, %v5229
  %v5262 = vadd.f32 %v5070, %v5230
  %v5263 = vadd.f32 %v5072, %v5231
  %v5264 = vadd.f32 %v5076, %v5232
  %v5265 = vadd.f32 %v5078, %v5233
  %v5266 = vadd.f32 %v5080, %v5234
  %v5267 = vadd.f32 %v5082, %v5235
  %v5268 = vadd.f32 %v5086, %v5236
  %v5269 = vadd.f32 %v5088, %v5237
  %v5270 = vadd.f32 %v5090, %v5238
  %v5271 = vadd.f32 %v5092, %v5239
  %v5272 = vadd.f32 %v5096, %v5240
  %v5273 = vadd.f32 %v5098, %v5241
  %v5274 = vadd.f32 %v5100, %v5242
  %v5275 = vadd.f32 %v5102, %v5243
  %v5276 = vadd.f32 %v5106, %v5244
  %v5277 = vadd.f32 %v5108, %v5245
  %v5278 = vadd.f32 %v5110, %v5246
  %v5279 = vadd.f32 %v5112, %v5247
  %v5280 = vadd.f32 %v5116, %v5248
  %v5281 = vadd.f32 %v5118, %v5249
  %v5282 = vadd.f32 %v5120, %v5250
  %v5283 = vadd.f32 %v5122, %v5251
  %v5284 = vmul.f32 %v5252, 0.7978846
  %v5285 = vmul.f32 %v5253, 0.7978846
  %v5286 = vmul.f32 %v5254, 0.7978846
  %v5287 = vmul.f32 %v5255, 0.7978846
  %v5288 = vmul.f32 %v5256, 0.7978846
  %v5289 = vmul.f32 %v5257, 0.7978846
  %v5290 = vmul.f32 %v5258, 0.7978846
  %v5291 = vmul.f32 %v5259, 0.7978846
  %v5292 = vmul.f32 %v5260, 0.7978846
  %v5293 = vmul.f32 %v5261, 0.7978846
  %v5294 = vmul.f32 %v5262, 0.7978846
  %v5295 = vmul.f32 %v5263, 0.7978846
  %v5296 = vmul.f32 %v5264, 0.7978846
  %v5297 = vmul.f32 %v5265, 0.7978846
  %v5298 = vmul.f32 %v5266, 0.7978846
  %v5299 = vmul.f32 %v5267, 0.7978846
  %v5300 = vmul.f32 %v5268, 0.7978846
  %v5301 = vmul.f32 %v5269, 0.7978846
  %v5302 = vmul.f32 %v5270, 0.7978846
  %v5303 = vmul.f32 %v5271, 0.7978846
  %v5304 = vmul.f32 %v5272, 0.7978846
  %v5305 = vmul.f32 %v5273, 0.7978846
  %v5306 = vmul.f32 %v5274, 0.7978846
  %v5307 = vmul.f32 %v5275, 0.7978846
  %v5308 = vmul.f32 %v5276, 0.7978846
  %v5309 = vmul.f32 %v5277, 0.7978846
  %v5310 = vmul.f32 %v5278, 0.7978846
  %v5311 = vmul.f32 %v5279, 0.7978846
  %v5312 = vmul.f32 %v5280, 0.7978846
  %v5313 = vmul.f32 %v5281, 0.7978846
  %v5314 = vmul.f32 %v5282, 0.7978846
  %v5315 = vmul.f32 %v5283, 0.7978846
  %v5316 = vtanh.pop %v5284
  %v5317 = vtanh.pop %v5285
  %v5318 = vtanh.pop %v5286
  %v5319 = vtanh.pop %v5287
  %v5320 = vtanh.pop %v5288
  %v5321 = vtanh.pop %v5289
  %v5322 = vtanh.pop %v5290
  %v5323 = vtanh.pop %v5291
  %v5324 = vtanh.pop %v5292
  %v5325 = vtanh.pop %v5293
  %v5326 = vtanh.pop %v5294
  %v5327 = vtanh.pop %v5295
  %v5328 = vtanh.pop %v5296
  %v5329 = vtanh.pop %v5297
  %v5330 = vtanh.pop %v5298
  %v5331 = vtanh.pop %v5299
  %v5332 = vtanh.pop %v5300
  %v5333 = vtanh.pop %v5301
  %v5334 = vtanh.pop %v5302
  %v5335 = vtanh.pop %v5303
  %v5336 = vtanh.pop %v5304
  %v5337 = vtanh.pop %v5305
  %v5338 = vtanh.pop %v5306
  %v5339 = vtanh.pop %v5307
  %v5340 = vtanh.pop %v5308
  %v5341 = vtanh.pop %v5309
  %v5342 = vtanh.pop %v5310
  %v5343 = vtanh.pop %v5311
  %v5344 = vtanh.pop %v5312
  %v5345 = vtanh.pop %v5313
  %v5346 = vtanh.pop %v5314
  %v5347 = vtanh.pop %v5315
  %v5348 = vadd.f32 %v5316, 1.0
  %v5349 = vadd.f32 %v5317, 1.0
  %v5350 = vadd.f32 %v5318, 1.0
  %v5351 = vadd.f32 %v5319, 1.0
  %v5352 = vadd.f32 %v5320, 1.0
  %v5353 = vadd.f32 %v5321, 1.0
  %v5354 = vadd.f32 %v5322, 1.0
  %v5355 = vadd.f32 %v5323, 1.0
  %v5356 = vadd.f32 %v5324, 1.0
  %v5357 = vadd.f32 %v5325, 1.0
  %v5358 = vadd.f32 %v5326, 1.0
  %v5359 = vadd.f32 %v5327, 1.0
  %v5360 = vadd.f32 %v5328, 1.0
  %v5361 = vadd.f32 %v5329, 1.0
  %v5362 = vadd.f32 %v5330, 1.0
  %v5363 = vadd.f32 %v5331, 1.0
  %v5364 = vadd.f32 %v5332, 1.0
  %v5365 = vadd.f32 %v5333, 1.0
  %v5366 = vadd.f32 %v5334, 1.0
  %v5367 = vadd.f32 %v5335, 1.0
  %v5368 = vadd.f32 %v5336, 1.0
  %v5369 = vadd.f32 %v5337, 1.0
  %v5370 = vadd.f32 %v5338, 1.0
  %v5371 = vadd.f32 %v5339, 1.0
  %v5372 = vadd.f32 %v5340, 1.0
  %v5373 = vadd.f32 %v5341, 1.0
  %v5374 = vadd.f32 %v5342, 1.0
  %v5375 = vadd.f32 %v5343, 1.0
  %v5376 = vadd.f32 %v5344, 1.0
  %v5377 = vadd.f32 %v5345, 1.0
  %v5378 = vadd.f32 %v5346, 1.0
  %v5379 = vadd.f32 %v5347, 1.0
  %v5380 = vmul.f32 %v5124, %v5348
  %v5381 = vmul.f32 %v5125, %v5349
  %v5382 = vmul.f32 %v5126, %v5350
  %v5383 = vmul.f32 %v5127, %v5351
  %v5384 = vmul.f32 %v5128, %v5352
  %v5385 = vmul.f32 %v5129, %v5353
  %v5386 = vmul.f32 %v5130, %v5354
  %v5387 = vmul.f32 %v5131, %v5355
  %v5388 = vmul.f32 %v5132, %v5356
  %v5389 = vmul.f32 %v5133, %v5357
  %v5390 = vmul.f32 %v5134, %v5358
  %v5391 = vmul.f32 %v5135, %v5359
  %v5392 = vmul.f32 %v5136, %v5360
  %v5393 = vmul.f32 %v5137, %v5361
  %v5394 = vmul.f32 %v5138, %v5362
  %v5395 = vmul.f32 %v5139, %v5363
  %v5396 = vmul.f32 %v5140, %v5364
  %v5397 = vmul.f32 %v5141, %v5365
  %v5398 = vmul.f32 %v5142, %v5366
  %v5399 = vmul.f32 %v5143, %v5367
  %v5400 = vmul.f32 %v5144, %v5368
  %v5401 = vmul.f32 %v5145, %v5369
  %v5402 = vmul.f32 %v5146, %v5370
  %v5403 = vmul.f32 %v5147, %v5371
  %v5404 = vmul.f32 %v5148, %v5372
  %v5405 = vmul.f32 %v5149, %v5373
  %v5406 = vmul.f32 %v5150, %v5374
  %v5407 = vmul.f32 %v5151, %v5375
  %v5408 = vmul.f32 %v5152, %v5376
  %v5409 = vmul.f32 %v5153, %v5377
  %v5410 = vmul.f32 %v5154, %v5378
  %v5411 = vmul.f32 %v5155, %v5379
  %v5412 = vpack.c.bf16 %v5382, %v5380
  %v5413 = vpack.c.bf16 %v5383, %v5381
  %v5414 = vpack.c.bf16 %v5386, %v5384
  %v5415 = vpack.c.bf16 %v5387, %v5385
  %v5416 = vpack.c.bf16 %v5390, %v5388
  %v5417 = vpack.c.bf16 %v5391, %v5389
  %v5418 = vpack.c.bf16 %v5394, %v5392
  %v5419 = vpack.c.bf16 %v5395, %v5393
  %v5420 = vpack.c.bf16 %v5398, %v5396
  %v5421 = vpack.c.bf16 %v5399, %v5397
  %v5422 = vpack.c.bf16 %v5402, %v5400
  %v5423 = vpack.c.bf16 %v5403, %v5401
  %v5424 = vpack.c.bf16 %v5406, %v5404
  %v5425 = vpack.c.bf16 %v5407, %v5405
  %v5426 = vpack.c.bf16 %v5410, %v5408
  %v5427 = vpack.c.bf16 %v5411, %v5409
  %s5428 = scalar_lea.vmem %s12, 128
  %v5429 = vld [vmem:[%s5428] sm:$0xf]
  %v5430 = vld [vmem:[%s5428 + $0x4] sm:$0xf]
  %v5431 = vld [vmem:[%s5428 + $0x8] sm:$0xf]
  %v5432 = vld [vmem:[%s5428 + $0xc] sm:$0xf]
  %v5433 = vld [vmem:[%s5428 + $0x10] sm:$0xf]
  %v5434 = vld [vmem:[%s5428 + $0x14] sm:$0xf]
  %v5435 = vld [vmem:[%s5428 + $0x18] sm:$0xf]
  %v5436 = vld [vmem:[%s5428 + $0x1c] sm:$0xf]
  %v5437 = vld [vmem:[%s5428 + $0x20] sm:$0xf]
  %v5438 = vld [vmem:[%s5428 + $0x24] sm:$0xf]
  %v5439 = vld [vmem:[%s5428 + $0x28] sm:$0xf]
  %v5440 = vld [vmem:[%s5428 + $0x2c] sm:$0xf]
  %v5441 = vld [vmem:[%s5428 + $0x30] sm:$0xf]
  %v5442 = vld [vmem:[%s5428 + $0x34] sm:$0xf]
  %v5443 = vld [vmem:[%s5428 + $0x38] sm:$0xf]
  %v5444 = vld [vmem:[%s5428 + $0x3c] sm:$0xf]
  %v5445 = vld [vmem:[%s5428 + $0x40] sm:$0xf]
  %v5446 = vld [vmem:[%s5428 + $0x44] sm:$0xf]
  %v5447 = vld [vmem:[%s5428 + $0x48] sm:$0xf]
  %v5448 = vld [vmem:[%s5428 + $0x4c] sm:$0xf]
  %v5449 = vld [vmem:[%s5428 + $0x50] sm:$0xf]
  %v5450 = vld [vmem:[%s5428 + $0x54] sm:$0xf]
  %v5451 = vld [vmem:[%s5428 + $0x58] sm:$0xf]
  %v5452 = vld [vmem:[%s5428 + $0x5c] sm:$0xf]
  %v5453 = vld [vmem:[%s5428 + $0x60] sm:$0xf]
  %v5454 = vld [vmem:[%s5428 + $0x64] sm:$0xf]
  %v5455 = vld [vmem:[%s5428 + $0x68] sm:$0xf]
  %v5456 = vld [vmem:[%s5428 + $0x6c] sm:$0xf]
  %v5457 = vld [vmem:[%s5428 + $0x70] sm:$0xf]
  %v5458 = vld [vmem:[%s5428 + $0x74] sm:$0xf]
  %v5459 = vld [vmem:[%s5428 + $0x78] sm:$0xf]
  %v5460 = vld [vmem:[%s5428 + $0x7c] sm:$0xf]
  %s5461 = scalar_lea.vmem %s13, 1
  %v5462 = vld [vmem:[%s5461] sm:$0x1]
  %v5464 = vlaneseq
  %v5465 = vshrl.u32 %v5464, 7
  %v5466 = vsub.s32 0, %v5465
  %v5467 = vrot.slane %v5462, %v5466
  %v5501 = vunpack.c.l.b16 %v5429
  %v5502 = vunpack.c.l.b16 %v5430
  %v5503 = vunpack.c.l.b16 %v5431
  %v5504 = vunpack.c.l.b16 %v5432
  %v5505 = vunpack.c.l.b16 %v5433
  %v5506 = vunpack.c.l.b16 %v5434
  %v5507 = vunpack.c.l.b16 %v5435
  %v5508 = vunpack.c.l.b16 %v5436
  %v5509 = vunpack.c.l.b16 %v5437
  %v5510 = vunpack.c.l.b16 %v5438
  %v5511 = vunpack.c.l.b16 %v5439
  %v5512 = vunpack.c.l.b16 %v5440
  %v5513 = vunpack.c.l.b16 %v5441
  %v5514 = vunpack.c.l.b16 %v5442
  %v5515 = vunpack.c.l.b16 %v5443
  %v5516 = vunpack.c.l.b16 %v5444
  %v5517 = vunpack.c.l.b16 %v5445
  %v5518 = vunpack.c.l.b16 %v5446
  %v5519 = vunpack.c.l.b16 %v5447
  %v5520 = vunpack.c.l.b16 %v5448
  %v5521 = vunpack.c.l.b16 %v5449
  %v5522 = vunpack.c.l.b16 %v5450
  %v5523 = vunpack.c.l.b16 %v5451
  %v5524 = vunpack.c.l.b16 %v5452
  %v5525 = vunpack.c.l.b16 %v5453
  %v5526 = vunpack.c.l.b16 %v5454
  %v5527 = vunpack.c.l.b16 %v5455
  %v5528 = vunpack.c.l.b16 %v5456
  %v5529 = vunpack.c.l.b16 %v5457
  %v5530 = vunpack.c.l.b16 %v5458
  %v5531 = vunpack.c.l.b16 %v5459
  %v5532 = vunpack.c.l.b16 %v5460
  %v5533 = vpack.c.b16 %v5502, %v5501
  %v5534 = vpack.c.b16 %v5504, %v5503
  %v5535 = vpack.c.b16 %v5506, %v5505
  %v5536 = vpack.c.b16 %v5508, %v5507
  %v5537 = vpack.c.b16 %v5510, %v5509
  %v5538 = vpack.c.b16 %v5512, %v5511
  %v5539 = vpack.c.b16 %v5514, %v5513
  %v5540 = vpack.c.b16 %v5516, %v5515
  %v5541 = vpack.c.b16 %v5518, %v5517
  %v5542 = vpack.c.b16 %v5520, %v5519
  %v5543 = vpack.c.b16 %v5522, %v5521
  %v5544 = vpack.c.b16 %v5524, %v5523
  %v5545 = vpack.c.b16 %v5526, %v5525
  %v5546 = vpack.c.b16 %v5528, %v5527
  %v5547 = vpack.c.b16 %v5530, %v5529
  %v5548 = vpack.c.b16 %v5532, %v5531
  %5565 = vmatprep.subr.bf16.mxu0 0
  %5566 = vmatpush1.bf16.msra.mxu0 %v5540
  %5567 = vmatprep.subr.bf16.mxu0 0
  %5568 = vmatpush1.bf16.msra.mxu0 %v5539
  %5569 = vmatprep.subr.bf16.mxu0 0
  %5570 = vmatpush1.bf16.msra.mxu0 %v5538
  %5571 = vmatprep.subr.bf16.mxu0 0
  %5572 = vmatpush1.bf16.msra.mxu0 %v5537
  %5573 = vmatprep.subr.bf16.mxu0 0
  %5574 = vmatpush1.bf16.msra.mxu0 %v5536
  %5575 = vmatprep.subr.bf16.mxu0 0
  %5576 = vmatpush1.bf16.msra.mxu0 %v5535
  %5577 = vmatprep.subr.bf16.mxu0 0
  %5578 = vmatpush1.bf16.msra.mxu0 %v5534
  %5579 = vmatprep.subr.bf16.mxu0 0
  %5580 = vmatpush1.bf16.msra.mxu0 %v5533
  %5581 = vmatprep.subr.bf16.mxu0 0
  %5582 = vmatpush2.bf16.msra.mxu0 %v5548
  %5583 = vmatprep.subr.bf16.mxu0 0
  %5584 = vmatpush2.bf16.msra.mxu0 %v5547
  %5585 = vmatprep.subr.bf16.mxu0 0
  %5586 = vmatpush2.bf16.msra.mxu0 %v5546
  %5587 = vmatprep.subr.bf16.mxu0 0
  %5588 = vmatpush2.bf16.msra.mxu0 %v5545
  %5589 = vmatprep.subr.bf16.mxu0 0
  %5590 = vmatpush2.bf16.msra.mxu0 %v5544
  %5591 = vmatprep.subr.bf16.mxu0 0
  %5592 = vmatpush2.bf16.msra.mxu0 %v5543
  %5593 = vmatprep.subr.bf16.mxu0 0
  %5594 = vmatpush2.bf16.msra.mxu0 %v5542
  %5595 = vmatprep.subr.bf16.mxu0 0
  %5596 = vmatpush2.bf16.msra.mxu0 %v5541
  %5597 = vmatprep.mubr.bf16.mxu0 %v5413
  %5598 = vmatmul.mubr.bf16.gmra.mxu0 %v5412
  %v5599 = vpop.f32.mrf.mxu0
  %v5600 = vadd.f32 %v5467, %v5599
  %v5601 = vpop.f32.mrf.mxu0
  %v5602 = vpop.f32.mrf.mxu0
  %v5603 = vadd.f32 %v5467, %v5602
  %v5604 = vpop.f32.mrf.mxu0
  %5605 = vmatprep.mubr.bf16.mxu0 %v5415
  %5606 = vmatmul.mubr.bf16.gmra.mxu0 %v5414
  %v5607 = vpop.f32.mrf.mxu0
  %v5608 = vadd.f32 %v5467, %v5607
  %v5609 = vpop.f32.mrf.mxu0
  %v5610 = vpop.f32.mrf.mxu0
  %v5611 = vadd.f32 %v5467, %v5610
  %v5612 = vpop.f32.mrf.mxu0
  %5613 = vmatprep.mubr.bf16.mxu0 %v5417
  %5614 = vmatmul.mubr.bf16.gmra.mxu0 %v5416
  %v5615 = vpop.f32.mrf.mxu0
  %v5616 = vadd.f32 %v5467, %v5615
  %v5617 = vpop.f32.mrf.mxu0
  %v5618 = vpop.f32.mrf.mxu0
  %v5619 = vadd.f32 %v5467, %v5618
  %v5620 = vpop.f32.mrf.mxu0
  %5621 = vmatprep.mubr.bf16.mxu0 %v5419
  %5622 = vmatmul.mubr.bf16.gmra.mxu0 %v5418
  %v5623 = vpop.f32.mrf.mxu0
  %v5624 = vadd.f32 %v5467, %v5623
  %v5625 = vpop.f32.mrf.mxu0
  %v5626 = vpop.f32.mrf.mxu0
  %v5627 = vadd.f32 %v5467, %v5626
  %v5628 = vpop.f32.mrf.mxu0
  %5629 = vmatprep.mubr.bf16.mxu0 %v5421
  %5630 = vmatmul.mubr.bf16.gmra.mxu0 %v5420
  %v5631 = vpop.f32.mrf.mxu0
  %v5632 = vadd.f32 %v5467, %v5631
  %v5633 = vpop.f32.mrf.mxu0
  %v5634 = vpop.f32.mrf.mxu0
  %v5635 = vadd.f32 %v5467, %v5634
  %v5636 = vpop.f32.mrf.mxu0
  %5637 = vmatprep.mubr.bf16.mxu0 %v5423
  %5638 = vmatmul.mubr.bf16.gmra.mxu0 %v5422
  %v5639 = vpop.f32.mrf.mxu0
  %v5640 = vadd.f32 %v5467, %v5639
  %v5641 = vpop.f32.mrf.mxu0
  %v5642 = vpop.f32.mrf.mxu0
  %v5643 = vadd.f32 %v5467, %v5642
  %v5644 = vpop.f32.mrf.mxu0
  %5645 = vmatprep.mubr.bf16.mxu0 %v5425
  %5646 = vmatmul.mubr.bf16.gmra.mxu0 %v5424
  %v5647 = vpop.f32.mrf.mxu0
  %v5648 = vadd.f32 %v5467, %v5647
  %v5649 = vpop.f32.mrf.mxu0
  %v5650 = vpop.f32.mrf.mxu0
  %v5651 = vadd.f32 %v5467, %v5650
  %v5652 = vpop.f32.mrf.mxu0
  %5653 = vmatprep.mubr.bf16.mxu0 %v5427
  %5654 = vmatmul.mubr.bf16.gmra.mxu0 %v5426
  %v5655 = vpop.f32.mrf.mxu0
  %v5656 = vadd.f32 %v5467, %v5655
  %v5657 = vpop.f32.mrf.mxu0
  %v5658 = vpop.f32.mrf.mxu0
  %v5659 = vadd.f32 %v5467, %v5658
  %v5660 = vpop.f32.mrf.mxu0
  %5661 = vdwg.mxu0
  %v5662 = vadd.f32 %v4877, %v5600
  %v5663 = vadd.f32 %v4878, %v5603
  %v5664 = vadd.f32 %v4879, %v5608
  %v5665 = vadd.f32 %v4880, %v5611
  %v5666 = vadd.f32 %v4881, %v5616
  %v5667 = vadd.f32 %v4882, %v5619
  %v5668 = vadd.f32 %v4883, %v5624
  %v5669 = vadd.f32 %v4884, %v5627
  %v5670 = vadd.f32 %v4885, %v5632
  %v5671 = vadd.f32 %v4886, %v5635
  %v5672 = vadd.f32 %v4887, %v5640
  %v5673 = vadd.f32 %v4888, %v5643
  %v5674 = vadd.f32 %v4889, %v5648
  %v5675 = vadd.f32 %v4890, %v5651
  %v5676 = vadd.f32 %v4891, %v5656
  %v5677 = vadd.f32 %v4892, %v5659
  %s5678 = scalar_lea.vmem %s14, 1
  %v5679 = vld [vmem:[%s5678] sm:$0x1]
  %s5680 = scalar_lea.vmem %s15, 1
  %v5681 = vld [vmem:[%s5680] sm:$0x1]
  %5682 = vadd.xlane.f32.xlu0 %v5662
  %v5683 = vpop.xlane.xlu0 %5682
  %5684 = vadd.xlane.f32.xlu0 %v5663
  %v5685 = vpop.xlane.xlu0 %5684
  %5686 = vadd.xlane.f32.xlu0 %v5664
  %v5687 = vpop.xlane.xlu0 %5686
  %5688 = vadd.xlane.f32.xlu0 %v5665
  %v5689 = vpop.xlane.xlu0 %5688
  %5690 = vadd.xlane.f32.xlu0 %v5666
  %v5691 = vpop.xlane.xlu0 %5690
  %5692 = vadd.xlane.f32.xlu0 %v5667
  %v5693 = vpop.xlane.xlu0 %5692
  %5694 = vadd.xlane.f32.xlu0 %v5668
  %v5695 = vpop.xlane.xlu0 %5694
  %5696 = vadd.xlane.f32.xlu0 %v5669
  %v5697 = vpop.xlane.xlu0 %5696
  %5698 = vadd.xlane.f32.xlu0 %v5670
  %v5699 = vpop.xlane.xlu0 %5698
  %5700 = vadd.xlane.f32.xlu0 %v5671
  %v5701 = vpop.xlane.xlu0 %5700
  %5702 = vadd.xlane.f32.xlu0 %v5672
  %v5703 = vpop.xlane.xlu0 %5702
  %5704 = vadd.xlane.f32.xlu0 %v5673
  %v5705 = vpop.xlane.xlu0 %5704
  %5706 = vadd.xlane.f32.xlu0 %v5674
  %v5707 = vpop.xlane.xlu0 %5706
  %5708 = vadd.xlane.f32.xlu0 %v5675
  %v5709 = vpop.xlane.xlu0 %5708
  %5710 = vadd.xlane.f32.xlu0 %v5676
  %v5711 = vpop.xlane.xlu0 %5710
  %5712 = vadd.xlane.f32.xlu0 %v5677
  %v5713 = vpop.xlane.xlu0 %5712
  %v5714 = vmul.f32 %v5683, %v116
  %v5715 = vmul.f32 %v5685, %v116
  %v5716 = vmul.f32 %v5687, %v116
  %v5717 = vmul.f32 %v5689, %v116
  %v5718 = vmul.f32 %v5691, %v116
  %v5719 = vmul.f32 %v5693, %v116
  %v5720 = vmul.f32 %v5695, %v116
  %v5721 = vmul.f32 %v5697, %v116
  %v5722 = vmul.f32 %v5699, %v116
  %v5723 = vmul.f32 %v5701, %v116
  %v5724 = vmul.f32 %v5703, %v116
  %v5725 = vmul.f32 %v5705, %v116
  %v5726 = vmul.f32 %v5707, %v116
  %v5727 = vmul.f32 %v5709, %v116
  %v5728 = vmul.f32 %v5711, %v116
  %v5729 = vmul.f32 %v5713, %v116
  %v5730 = vsub.f32 %v5662, %v5714
  %v5731 = vsub.f32 %v5663, %v5715
  %v5732 = vsub.f32 %v5664, %v5716
  %v5733 = vsub.f32 %v5665, %v5717
  %v5734 = vsub.f32 %v5666, %v5718
  %v5735 = vsub.f32 %v5667, %v5719
  %v5736 = vsub.f32 %v5668, %v5720
  %v5737 = vsub.f32 %v5669, %v5721
  %v5738 = vsub.f32 %v5670, %v5722
  %v5739 = vsub.f32 %v5671, %v5723
  %v5740 = vsub.f32 %v5672, %v5724
  %v5741 = vsub.f32 %v5673, %v5725
  %v5742 = vsub.f32 %v5674, %v5726
  %v5743 = vsub.f32 %v5675, %v5727
  %v5744 = vsub.f32 %v5676, %v5728
  %v5745 = vsub.f32 %v5677, %v5729
  %v5746 = vmul.f32 %v5730, %v5730
  %v5747 = vmul.f32 %v5731, %v5731
  %v5748 = vmul.f32 %v5732, %v5732
  %v5749 = vmul.f32 %v5733, %v5733
  %v5750 = vmul.f32 %v5734, %v5734
  %v5751 = vmul.f32 %v5735, %v5735
  %v5752 = vmul.f32 %v5736, %v5736
  %v5753 = vmul.f32 %v5737, %v5737
  %v5754 = vmul.f32 %v5738, %v5738
  %v5755 = vmul.f32 %v5739, %v5739
  %v5756 = vmul.f32 %v5740, %v5740
  %v5757 = vmul.f32 %v5741, %v5741
  %v5758 = vmul.f32 %v5742, %v5742
  %v5759 = vmul.f32 %v5743, %v5743
  %v5760 = vmul.f32 %v5744, %v5744
  %v5761 = vmul.f32 %v5745, %v5745
  %5762 = vadd.xlane.f32.xlu0 %v5746
  %v5763 = vpop.xlane.xlu0 %5762
  %5764 = vadd.xlane.f32.xlu0 %v5747
  %v5765 = vpop.xlane.xlu0 %5764
  %5766 = vadd.xlane.f32.xlu0 %v5748
  %v5767 = vpop.xlane.xlu0 %5766
  %5768 = vadd.xlane.f32.xlu0 %v5749
  %v5769 = vpop.xlane.xlu0 %5768
  %5770 = vadd.xlane.f32.xlu0 %v5750
  %v5771 = vpop.xlane.xlu0 %5770
  %5772 = vadd.xlane.f32.xlu0 %v5751
  %v5773 = vpop.xlane.xlu0 %5772
  %5774 = vadd.xlane.f32.xlu0 %v5752
  %v5775 = vpop.xlane.xlu0 %5774
  %5776 = vadd.xlane.f32.xlu0 %v5753
  %v5777 = vpop.xlane.xlu0 %5776
  %5778 = vadd.xlane.f32.xlu0 %v5754
  %v5779 = vpop.xlane.xlu0 %5778
  %5780 = vadd.xlane.f32.xlu0 %v5755
  %v5781 = vpop.xlane.xlu0 %5780
  %5782 = vadd.xlane.f32.xlu0 %v5756
  %v5783 = vpop.xlane.xlu0 %5782
  %5784 = vadd.xlane.f32.xlu0 %v5757
  %v5785 = vpop.xlane.xlu0 %5784
  %5786 = vadd.xlane.f32.xlu0 %v5758
  %v5787 = vpop.xlane.xlu0 %5786
  %5788 = vadd.xlane.f32.xlu0 %v5759
  %v5789 = vpop.xlane.xlu0 %5788
  %5790 = vadd.xlane.f32.xlu0 %v5760
  %v5791 = vpop.xlane.xlu0 %5790
  %5792 = vadd.xlane.f32.xlu0 %v5761
  %v5793 = vpop.xlane.xlu0 %5792
  %v5794 = vmul.f32 %v5763, %v116
  %v5795 = vmul.f32 %v5765, %v116
  %v5796 = vmul.f32 %v5767, %v116
  %v5797 = vmul.f32 %v5769, %v116
  %v5798 = vmul.f32 %v5771, %v116
  %v5799 = vmul.f32 %v5773, %v116
  %v5800 = vmul.f32 %v5775, %v116
  %v5801 = vmul.f32 %v5777, %v116
  %v5802 = vmul.f32 %v5779, %v116
  %v5803 = vmul.f32 %v5781, %v116
  %v5804 = vmul.f32 %v5783, %v116
  %v5805 = vmul.f32 %v5785, %v116
  %v5806 = vmul.f32 %v5787, %v116
  %v5807 = vmul.f32 %v5789, %v116
  %v5808 = vmul.f32 %v5791, %v116
  %v5809 = vmul.f32 %v5793, %v116
  %v5810 = vadd.f32 %v5794, 1e-12
  %v5811 = vadd.f32 %v5795, 1e-12
  %v5812 = vadd.f32 %v5796, 1e-12
  %v5813 = vadd.f32 %v5797, 1e-12
  %v5814 = vadd.f32 %v5798, 1e-12
  %v5815 = vadd.f32 %v5799, 1e-12
  %v5816 = vadd.f32 %v5800, 1e-12
  %v5817 = vadd.f32 %v5801, 1e-12
  %v5818 = vadd.f32 %v5802, 1e-12
  %v5819 = vadd.f32 %v5803, 1e-12
  %v5820 = vadd.f32 %v5804, 1e-12
  %v5821 = vadd.f32 %v5805, 1e-12
  %v5822 = vadd.f32 %v5806, 1e-12
  %v5823 = vadd.f32 %v5807, 1e-12
  %v5824 = vadd.f32 %v5808, 1e-12
  %v5825 = vadd.f32 %v5809, 1e-12
  %v5826 = vrsqrt.pop %v5810
  %v5827 = vrsqrt.pop %v5811
  %v5828 = vrsqrt.pop %v5812
  %v5829 = vrsqrt.pop %v5813
  %v5830 = vrsqrt.pop %v5814
  %v5831 = vrsqrt.pop %v5815
  %v5832 = vrsqrt.pop %v5816
  %v5833 = vrsqrt.pop %v5817
  %v5834 = vrsqrt.pop %v5818
  %v5835 = vrsqrt.pop %v5819
  %v5836 = vrsqrt.pop %v5820
  %v5837 = vrsqrt.pop %v5821
  %v5838 = vrsqrt.pop %v5822
  %v5839 = vrsqrt.pop %v5823
  %v5840 = vrsqrt.pop %v5824
  %v5841 = vrsqrt.pop %v5825
  %v5842 = vmul.f32 %v5730, %v5826
  %v5843 = vmul.f32 %v5731, %v5827
  %v5844 = vmul.f32 %v5732, %v5828
  %v5845 = vmul.f32 %v5733, %v5829
  %v5846 = vmul.f32 %v5734, %v5830
  %v5847 = vmul.f32 %v5735, %v5831
  %v5848 = vmul.f32 %v5736, %v5832
  %v5849 = vmul.f32 %v5737, %v5833
  %v5850 = vmul.f32 %v5738, %v5834
  %v5851 = vmul.f32 %v5739, %v5835
  %v5852 = vmul.f32 %v5740, %v5836
  %v5853 = vmul.f32 %v5741, %v5837
  %v5854 = vmul.f32 %v5742, %v5838
  %v5855 = vmul.f32 %v5743, %v5839
  %v5856 = vmul.f32 %v5744, %v5840
  %v5857 = vmul.f32 %v5745, %v5841
  %v5859 = vlaneseq
  %v5860 = vshrl.u32 %v5859, 7
  %v5861 = vsub.s32 0, %v5860
  %v5862 = vrot.slane %v5679, %v5861
  %v5864 = vmul.f32 %v5842, %v5862
  %v5865 = vmul.f32 %v5843, %v5862
  %v5866 = vmul.f32 %v5844, %v5862
  %v5867 = vmul.f32 %v5845, %v5862
  %v5868 = vmul.f32 %v5846, %v5862
  %v5869 = vmul.f32 %v5847, %v5862
  %v5870 = vmul.f32 %v5848, %v5862
  %v5871 = vmul.f32 %v5849, %v5862
  %v5872 = vmul.f32 %v5850, %v5862
  %v5873 = vmul.f32 %v5851, %v5862
  %v5874 = vmul.f32 %v5852, %v5862
  %v5875 = vmul.f32 %v5853, %v5862
  %v5876 = vmul.f32 %v5854, %v5862
  %v5877 = vmul.f32 %v5855, %v5862
  %v5878 = vmul.f32 %v5856, %v5862
  %v5879 = vmul.f32 %v5857, %v5862
  %v5881 = vlaneseq
  %v5882 = vshrl.u32 %v5881, 7
  %v5883 = vsub.s32 0, %v5882
  %v5884 = vrot.slane %v5681, %v5883
  %v5886 = vadd.f32 %v5864, %v5884
  %v5887 = vadd.f32 %v5865, %v5884
  %v5888 = vadd.f32 %v5866, %v5884
  %v5889 = vadd.f32 %v5867, %v5884
  %v5890 = vadd.f32 %v5868, %v5884
  %v5891 = vadd.f32 %v5869, %v5884
  %v5892 = vadd.f32 %v5870, %v5884
  %v5893 = vadd.f32 %v5871, %v5884
  %v5894 = vadd.f32 %v5872, %v5884
  %v5895 = vadd.f32 %v5873, %v5884
  %v5896 = vadd.f32 %v5874, %v5884
  %v5897 = vadd.f32 %v5875, %v5884
  %v5898 = vadd.f32 %v5876, %v5884
  %v5899 = vadd.f32 %v5877, %v5884
  %v5900 = vadd.f32 %v5878, %v5884
  %v5901 = vadd.f32 %v5879, %v5884
  %v5902 = vpack.c.bf16 %v5887, %v5886
  %v5903 = vpack.c.bf16 %v5889, %v5888
  %v5904 = vpack.c.bf16 %v5891, %v5890
  %v5905 = vpack.c.bf16 %v5893, %v5892
  %v5906 = vpack.c.bf16 %v5895, %v5894
  %v5907 = vpack.c.bf16 %v5897, %v5896
  %v5908 = vpack.c.bf16 %v5899, %v5898
  %v5909 = vpack.c.bf16 %v5901, %v5900
  %v5910 = vld [vmem:[%s16] sm:$0xf]
  %v5911 = vld [vmem:[%s16 + $0x4] sm:$0xf]
  %v5912 = vld [vmem:[%s16 + $0x8] sm:$0xf]
  %v5913 = vld [vmem:[%s16 + $0xc] sm:$0xf]
  %v5914 = vld [vmem:[%s16 + $0x10] sm:$0xf]
  %v5915 = vld [vmem:[%s16 + $0x14] sm:$0xf]
  %v5916 = vld [vmem:[%s16 + $0x18] sm:$0xf]
  %v5917 = vld [vmem:[%s16 + $0x1c] sm:$0xf]
  %v5918 = vld [vmem:[%s16 + $0x20] sm:$0xf]
  %v5919 = vld [vmem:[%s16 + $0x24] sm:$0xf]
  %v5920 = vld [vmem:[%s16 + $0x28] sm:$0xf]
  %v5921 = vld [vmem:[%s16 + $0x2c] sm:$0xf]
  %v5922 = vld [vmem:[%s16 + $0x30] sm:$0xf]
  %v5923 = vld [vmem:[%s16 + $0x34] sm:$0xf]
  %v5924 = vld [vmem:[%s16 + $0x38] sm:$0xf]
  %v5925 = vld [vmem:[%s16 + $0x3c] sm:$0xf]
  %v5926 = vld [vmem:[%s17] sm:$0x1]
  %v5928 = vlaneseq
  %v5929 = vshrl.u32 %v5928, 7
  %v5930 = vsub.s32 0, %v5929
  %v5931 = vrot.slane %v5926, %v5930
  %v5949 = vunpack.c.l.b16 %v5910
  %v5950 = vunpack.c.l.b16 %v5911
  %v5951 = vunpack.c.l.b16 %v5912
  %v5952 = vunpack.c.l.b16 %v5913
  %v5953 = vunpack.c.l.b16 %v5914
  %v5954 = vunpack.c.l.b16 %v5915
  %v5955 = vunpack.c.l.b16 %v5916
  %v5956 = vunpack.c.l.b16 %v5917
  %v5957 = vunpack.c.l.b16 %v5918
  %v5958 = vunpack.c.l.b16 %v5919
  %v5959 = vunpack.c.l.b16 %v5920
  %v5960 = vunpack.c.l.b16 %v5921
  %v5961 = vunpack.c.l.b16 %v5922
  %v5962 = vunpack.c.l.b16 %v5923
  %v5963 = vunpack.c.l.b16 %v5924
  %v5964 = vunpack.c.l.b16 %v5925
  %v5965 = vpack.c.b16 %v5950, %v5949
  %v5966 = vpack.c.b16 %v5952, %v5951
  %v5967 = vpack.c.b16 %v5954, %v5953
  %v5968 = vpack.c.b16 %v5956, %v5955
  %v5969 = vpack.c.b16 %v5958, %v5957
  %v5970 = vpack.c.b16 %v5960, %v5959
  %v5971 = vpack.c.b16 %v5962, %v5961
  %v5972 = vpack.c.b16 %v5964, %v5963
  %5981 = vmatprep.subr.bf16.mxu0 0
  %5982 = vmatpush1.bf16.msra.mxu0 %v5972
  %5983 = vmatprep.subr.bf16.mxu0 0
  %5984 = vmatpush1.bf16.msra.mxu0 %v5971
  %5985 = vmatprep.subr.bf16.mxu0 0
  %5986 = vmatpush1.bf16.msra.mxu0 %v5970
  %5987 = vmatprep.subr.bf16.mxu0 0
  %5988 = vmatpush1.bf16.msra.mxu0 %v5969
  %5989 = vmatprep.subr.bf16.mxu0 0
  %5990 = vmatpush1.bf16.msra.mxu0 %v5968
  %5991 = vmatprep.subr.bf16.mxu0 0
  %5992 = vmatpush1.bf16.msra.mxu0 %v5967
  %5993 = vmatprep.subr.bf16.mxu0 0
  %5994 = vmatpush1.bf16.msra.mxu0 %v5966
  %5995 = vmatprep.subr.bf16.mxu0 0
  %5996 = vmatpush1.bf16.msra.mxu0 %v5965
  %5997 = vmatprep.subr.bf16.mxu0 0
  %5998 = vmatpush2.bf16.msra.mxu0 0
  %5999 = vmatprep.subr.bf16.mxu0 0
  %6000 = vmatpush2.bf16.msra.mxu0 0
  %6001 = vmatprep.subr.bf16.mxu0 0
  %6002 = vmatpush2.bf16.msra.mxu0 0
  %6003 = vmatprep.subr.bf16.mxu0 0
  %6004 = vmatpush2.bf16.msra.mxu0 0
  %6005 = vmatprep.subr.bf16.mxu0 0
  %6006 = vmatpush2.bf16.msra.mxu0 0
  %6007 = vmatprep.subr.bf16.mxu0 0
  %6008 = vmatpush2.bf16.msra.mxu0 0
  %6009 = vmatprep.subr.bf16.mxu0 0
  %6010 = vmatpush2.bf16.msra.mxu0 0
  %6011 = vmatprep.subr.bf16.mxu0 0
  %6012 = vmatpush2.bf16.msra.mxu0 0
  %6013 = vmatprep.mubr.bf16.mxu0 0
  %6014 = vmatmul.mubr.bf16.gmra.mxu0 %v5902
  %v6015 = vpop.f32.mrf.mxu0
  %v6016 = vadd.f32 %v5931, %v6015
  %v6017 = vpop.f32.mrf.mxu0
  %v6018 = vpop.f32.mrf.mxu0
  %v6019 = vadd.f32 %v5931, %v6018
  %v6020 = vpop.f32.mrf.mxu0
  %6021 = vmatprep.mubr.bf16.mxu0 0
  %6022 = vmatmul.mubr.bf16.gmra.mxu0 %v5903
  %v6023 = vpop.f32.mrf.mxu0
  %v6024 = vadd.f32 %v5931, %v6023
  %v6025 = vpop.f32.mrf.mxu0
  %v6026 = vpop.f32.mrf.mxu0
  %v6027 = vadd.f32 %v5931, %v6026
  %v6028 = vpop.f32.mrf.mxu0
  %6029 = vmatprep.mubr.bf16.mxu0 0
  %6030 = vmatmul.mubr.bf16.gmra.mxu0 %v5904
  %v6031 = vpop.f32.mrf.mxu0
  %v6032 = vadd.f32 %v5931, %v6031
  %v6033 = vpop.f32.mrf.mxu0
  %v6034 = vpop.f32.mrf.mxu0
  %v6035 = vadd.f32 %v5931, %v6034
  %v6036 = vpop.f32.mrf.mxu0
  %6037 = vmatprep.mubr.bf16.mxu0 0
  %6038 = vmatmul.mubr.bf16.gmra.mxu0 %v5905
  %v6039 = vpop.f32.mrf.mxu0
  %v6040 = vadd.f32 %v5931, %v6039
  %v6041 = vpop.f32.mrf.mxu0
  %v6042 = vpop.f32.mrf.mxu0
  %v6043 = vadd.f32 %v5931, %v6042
  %v6044 = vpop.f32.mrf.mxu0
  %6045 = vmatprep.mubr.bf16.mxu0 0
  %6046 = vmatmul.mubr.bf16.gmra.mxu0 %v5906
  %v6047 = vpop.f32.mrf.mxu0
  %v6048 = vadd.f32 %v5931, %v6047
  %v6049 = vpop.f32.mrf.mxu0
  %v6050 = vpop.f32.mrf.mxu0
  %v6051 = vadd.f32 %v5931, %v6050
  %v6052 = vpop.f32.mrf.mxu0
  %6053 = vmatprep.mubr.bf16.mxu0 0
  %6054 = vmatmul.mubr.bf16.gmra.mxu0 %v5907
  %v6055 = vpop.f32.mrf.mxu0
  %v6056 = vadd.f32 %v5931, %v6055
  %v6057 = vpop.f32.mrf.mxu0
  %v6058 = vpop.f32.mrf.mxu0
  %v6059 = vadd.f32 %v5931, %v6058
  %v6060 = vpop.f32.mrf.mxu0
  %6061 = vmatprep.mubr.bf16.mxu0 0
  %6062 = vmatmul.mubr.bf16.gmra.mxu0 %v5908
  %v6063 = vpop.f32.mrf.mxu0
  %v6064 = vadd.f32 %v5931, %v6063
  %v6065 = vpop.f32.mrf.mxu0
  %v6066 = vpop.f32.mrf.mxu0
  %v6067 = vadd.f32 %v5931, %v6066
  %v6068 = vpop.f32.mrf.mxu0
  %6069 = vmatprep.mubr.bf16.mxu0 0
  %6070 = vmatmul.mubr.bf16.gmra.mxu0 %v5909
  %v6071 = vpop.f32.mrf.mxu0
  %v6072 = vadd.f32 %v5931, %v6071
  %v6073 = vpop.f32.mrf.mxu0
  %v6074 = vpop.f32.mrf.mxu0
  %v6075 = vadd.f32 %v5931, %v6074
  %v6076 = vpop.f32.mrf.mxu0
  %6077 = vdwg.mxu0
  %v6078 = vmax.f32 %v6016, 0.0
  %v6079 = vmax.f32 %v6019, 0.0
  %v6080 = vmax.f32 %v6024, 0.0
  %v6081 = vmax.f32 %v6027, 0.0
  %v6082 = vmax.f32 %v6032, 0.0
  %v6083 = vmax.f32 %v6035, 0.0
  %v6084 = vmax.f32 %v6040, 0.0
  %v6085 = vmax.f32 %v6043, 0.0
  %v6086 = vmax.f32 %v6048, 0.0
  %v6087 = vmax.f32 %v6051, 0.0
  %v6088 = vmax.f32 %v6056, 0.0
  %v6089 = vmax.f32 %v6059, 0.0
  %v6090 = vmax.f32 %v6064, 0.0
  %v6091 = vmax.f32 %v6067, 0.0
  %v6092 = vmax.f32 %v6072, 0.0
  %v6093 = vmax.f32 %v6075, 0.0
  %v6094 = vpack.c.bf16 %v6079, %v6078
  %v6095 = vpack.c.bf16 %v6081, %v6080
  %v6096 = vpack.c.bf16 %v6083, %v6082
  %v6097 = vpack.c.bf16 %v6085, %v6084
  %v6098 = vpack.c.bf16 %v6087, %v6086
  %v6099 = vpack.c.bf16 %v6089, %v6088
  %v6100 = vpack.c.bf16 %v6091, %v6090
  %v6101 = vpack.c.bf16 %v6093, %v6092
  %v6102 = vld [vmem:[%s18] sm:$0xf]
  %v6103 = vld [vmem:[%s18 + $0x4] sm:$0xf]
  %v6104 = vld [vmem:[%s18 + $0x8] sm:$0xf]
  %v6105 = vld [vmem:[%s18 + $0xc] sm:$0xf]
  %v6106 = vld [vmem:[%s18 + $0x10] sm:$0xf]
  %v6107 = vld [vmem:[%s18 + $0x14] sm:$0xf]
  %v6108 = vld [vmem:[%s18 + $0x18] sm:$0xf]
  %v6109 = vld [vmem:[%s18 + $0x1c] sm:$0xf]
  %v6110 = vld [vmem:[%s18 + $0x20] sm:$0xf]
  %v6111 = vld [vmem:[%s18 + $0x24] sm:$0xf]
  %v6112 = vld [vmem:[%s18 + $0x28] sm:$0xf]
  %v6113 = vld [vmem:[%s18 + $0x2c] sm:$0xf]
  %v6114 = vld [vmem:[%s18 + $0x30] sm:$0xf]
  %v6115 = vld [vmem:[%s18 + $0x34] sm:$0xf]
  %v6116 = vld [vmem:[%s18 + $0x38] sm:$0xf]
  %v6117 = vld [vmem:[%s18 + $0x3c] sm:$0xf]
  %v6118 = vld [vmem:[%s19] sm:$0x1]
  %v6120 = vlaneseq
  %v6121 = vshrl.u32 %v6120, 7
  %v6122 = vsub.s32 0, %v6121
  %v6123 = vrot.slane %v6118, %v6122
  %v6141 = vunpack.c.l.b16 %v6102
  %v6142 = vunpack.c.l.b16 %v6103
  %v6143 = vunpack.c.l.b16 %v6104
  %v6144 = vunpack.c.l.b16 %v6105
  %v6145 = vunpack.c.l.b16 %v6106
  %v6146 = vunpack.c.l.b16 %v6107
  %v6147 = vunpack.c.l.b16 %v6108
  %v6148 = vunpack.c.l.b16 %v6109
  %v6149 = vunpack.c.l.b16 %v6110
  %v6150 = vunpack.c.l.b16 %v6111
  %v6151 = vunpack.c.l.b16 %v6112
  %v6152 = vunpack.c.l.b16 %v6113
  %v6153 = vunpack.c.l.b16 %v6114
  %v6154 = vunpack.c.l.b16 %v6115
  %v6155 = vunpack.c.l.b16 %v6116
  %v6156 = vunpack.c.l.b16 %v6117
  %v6157 = vpack.c.b16 %v6142, %v6141
  %v6158 = vpack.c.b16 %v6144, %v6143
  %v6159 = vpack.c.b16 %v6146, %v6145
  %v6160 = vpack.c.b16 %v6148, %v6147
  %v6161 = vpack.c.b16 %v6150, %v6149
  %v6162 = vpack.c.b16 %v6152, %v6151
  %v6163 = vpack.c.b16 %v6154, %v6153
  %v6164 = vpack.c.b16 %v6156, %v6155
  %6173 = vmatprep.subr.bf16.mxu0 0
  %6174 = vmatpush1.bf16.msra.mxu0 %v6164
  %6175 = vmatprep.subr.bf16.mxu0 0
  %6176 = vmatpush1.bf16.msra.mxu0 %v6163
  %6177 = vmatprep.subr.bf16.mxu0 0
  %6178 = vmatpush1.bf16.msra.mxu0 %v6162
  %6179 = vmatprep.subr.bf16.mxu0 0
  %6180 = vmatpush1.bf16.msra.mxu0 %v6161
  %6181 = vmatprep.subr.bf16.mxu0 0
  %6182 = vmatpush1.bf16.msra.mxu0 %v6160
  %6183 = vmatprep.subr.bf16.mxu0 0
  %6184 = vmatpush1.bf16.msra.mxu0 %v6159
  %6185 = vmatprep.subr.bf16.mxu0 0
  %6186 = vmatpush1.bf16.msra.mxu0 %v6158
  %6187 = vmatprep.subr.bf16.mxu0 0
  %6188 = vmatpush1.bf16.msra.mxu0 %v6157
  %6189 = vmatprep.subr.bf16.mxu0 0
  %6190 = vmatpush2.bf16.msra.mxu0 0
  %6191 = vmatprep.subr.bf16.mxu0 0
  %6192 = vmatpush2.bf16.msra.mxu0 0
  %6193 = vmatprep.subr.bf16.mxu0 0
  %6194 = vmatpush2.bf16.msra.mxu0 0
  %6195 = vmatprep.subr.bf16.mxu0 0
  %6196 = vmatpush2.bf16.msra.mxu0 0
  %6197 = vmatprep.subr.bf16.mxu0 0
  %6198 = vmatpush2.bf16.msra.mxu0 0
  %6199 = vmatprep.subr.bf16.mxu0 0
  %6200 = vmatpush2.bf16.msra.mxu0 0
  %6201 = vmatprep.subr.bf16.mxu0 0
  %6202 = vmatpush2.bf16.msra.mxu0 0
  %6203 = vmatprep.subr.bf16.mxu0 0
  %6204 = vmatpush2.bf16.msra.mxu0 0
  %6205 = vmatprep.mubr.bf16.mxu0 0
  %6206 = vmatmul.mubr.bf16.gmra.mxu0 %v6094
  %v6207 = vpop.f32.mrf.mxu0
  %v6208 = vadd.f32 %v6123, %v6207
  %v6209 = vpop.f32.mrf.mxu0
  %v6210 = vpop.f32.mrf.mxu0
  %v6211 = vadd.f32 %v6123, %v6210
  %v6212 = vpop.f32.mrf.mxu0
  %6213 = vmatprep.mubr.bf16.mxu0 0
  %6214 = vmatmul.mubr.bf16.gmra.mxu0 %v6095
  %v6215 = vpop.f32.mrf.mxu0
  %v6216 = vadd.f32 %v6123, %v6215
  %v6217 = vpop.f32.mrf.mxu0
  %v6218 = vpop.f32.mrf.mxu0
  %v6219 = vadd.f32 %v6123, %v6218
  %v6220 = vpop.f32.mrf.mxu0
  %6221 = vmatprep.mubr.bf16.mxu0 0
  %6222 = vmatmul.mubr.bf16.gmra.mxu0 %v6096
  %v6223 = vpop.f32.mrf.mxu0
  %v6224 = vadd.f32 %v6123, %v6223
  %v6225 = vpop.f32.mrf.mxu0
  %v6226 = vpop.f32.mrf.mxu0
  %v6227 = vadd.f32 %v6123, %v6226
  %v6228 = vpop.f32.mrf.mxu0
  %6229 = vmatprep.mubr.bf16.mxu0 0
  %6230 = vmatmul.mubr.bf16.gmra.mxu0 %v6097
  %v6231 = vpop.f32.mrf.mxu0
  %v6232 = vadd.f32 %v6123, %v6231
  %v6233 = vpop.f32.mrf.mxu0
  %v6234 = vpop.f32.mrf.mxu0
  %v6235 = vadd.f32 %v6123, %v6234
  %v6236 = vpop.f32.mrf.mxu0
  %6237 = vmatprep.mubr.bf16.mxu0 0
  %6238 = vmatmul.mubr.bf16.gmra.mxu0 %v6098
  %v6239 = vpop.f32.mrf.mxu0
  %v6240 = vadd.f32 %v6123, %v6239
  %v6241 = vpop.f32.mrf.mxu0
  %v6242 = vpop.f32.mrf.mxu0
  %v6243 = vadd.f32 %v6123, %v6242
  %v6244 = vpop.f32.mrf.mxu0
  %6245 = vmatprep.mubr.bf16.mxu0 0
  %6246 = vmatmul.mubr.bf16.gmra.mxu0 %v6099
  %v6247 = vpop.f32.mrf.mxu0
  %v6248 = vadd.f32 %v6123, %v6247
  %v6249 = vpop.f32.mrf.mxu0
  %v6250 = vpop.f32.mrf.mxu0
  %v6251 = vadd.f32 %v6123, %v6250
  %v6252 = vpop.f32.mrf.mxu0
  %6253 = vmatprep.mubr.bf16.mxu0 0
  %6254 = vmatmul.mubr.bf16.gmra.mxu0 %v6100
  %v6255 = vpop.f32.mrf.mxu0
  %v6256 = vadd.f32 %v6123, %v6255
  %v6257 = vpop.f32.mrf.mxu0
  %v6258 = vpop.f32.mrf.mxu0
  %v6259 = vadd.f32 %v6123, %v6258
  %v6260 = vpop.f32.mrf.mxu0
  %6261 = vmatprep.mubr.bf16.mxu0 0
  %6262 = vmatmul.mubr.bf16.gmra.mxu0 %v6101
  %v6263 = vpop.f32.mrf.mxu0
  %v6264 = vadd.f32 %v6123, %v6263
  %v6265 = vpop.f32.mrf.mxu0
  %v6266 = vpop.f32.mrf.mxu0
  %v6267 = vadd.f32 %v6123, %v6266
  %v6268 = vpop.f32.mrf.mxu0
  %6269 = vdwg.mxu0
  %6270 = vst [vmem:[%s20] sm:$0xff] %v6208
  %6271 = vst [vmem:[%s20 + $0x8] sm:$0xff] %v6211
  %6272 = vst [vmem:[%s20 + $0x10] sm:$0xff] %v6216
  %6273 = vst [vmem:[%s20 + $0x18] sm:$0xff] %v6219
  %6274 = vst [vmem:[%s20 + $0x20] sm:$0xff] %v6224
  %6275 = vst [vmem:[%s20 + $0x28] sm:$0xff] %v6227
  %6276 = vst [vmem:[%s20 + $0x30] sm:$0xff] %v6232
  %6277 = vst [vmem:[%s20 + $0x38] sm:$0xff] %v6235
  %6278 = vst [vmem:[%s20 + $0x40] sm:$0xff] %v6240
  %6279 = vst [vmem:[%s20 + $0x48] sm:$0xff] %v6243
  %6280 = vst [vmem:[%s20 + $0x50] sm:$0xff] %v6248
  %6281 = vst [vmem:[%s20 + $0x58] sm:$0xff] %v6251
  %6282 = vst [vmem:[%s20 + $0x60] sm:$0xff] %v6256
  %6283 = vst [vmem:[%s20 + $0x68] sm:$0xff] %v6259
  %6284 = vst [vmem:[%s20 + $0x70] sm:$0xff] %v6264
  %6285 = vst [vmem:[%s20 + $0x78] sm:$0xff] %v6267
  // Predicated region
  $region82: #{_lambda_.1} parent=0 // pred_check
    _
  $region83: #{_lambda_.1} parent=0 // pred_check_branch
    %6287 = sbr.rel (0) target = $region85
  $region84: #{_lambda_.1} parent=0 // pred_region
    _
  $region85: #{_lambda_.1} parent=0 // pred_fallthru
    _
  // Predicated region
  $region86: #{_lambda_.1} parent=0 // pred_check
    _
  $region87: #{_lambda_.1} parent=0 // pred_check_branch
    %6289 = sbr.rel (0) target = $region89
  $region88: #{_lambda_.1} parent=0 // pred_region
    _
  $region89: #{_lambda_.1} parent=0 // pred_fallthru
    _

</llo_original>
